<compile_context>
chip_gen: v7x
topology: tpu7x:2x2x1
jax: 0.10.0
libtpu: 0.0.40
codegen_flags: <defaults>
</compile_context>

<pallas_src>
import functools

import jax
import jax.numpy as jnp
import numpy as np
from jax.experimental import pallas as pl
from jax.experimental.pallas import tpu as pltpu

_MIB = 1024 * 1024


# ----------------------------- kernel -----------------------------
def _encoder_stack_kernel(src_ref, w_qkv_ref, b_qkv_ref, w_o_ref, b_o_ref,
                          g1_ref, be1_ref, g2_ref, be2_ref,
                          w1_ref, b1_ref, w2_ref, b2_ref,
                          out_ref, x_scr, attn_scr, *, nhead, eps):
    """Grid = (batch_tile, layer).  Residual stream carried in x_scr (f32)."""
    l = pl.program_id(1)
    num_l = pl.num_programs(1)

    BB, S, D = src_ref.shape
    M = BB * S
    hd = D // nhead
    bf = jnp.bfloat16

    @pl.when(l == 0)
    def _():
        x_scr[...] = src_ref[...].reshape(M, D).astype(jnp.float32)

    x = x_scr[...]                                 # (M, D) f32 residual stream

    # Biases / LN params: small, loaded once per grid step (stay f32).
    b_qkv = b_qkv_ref[0]
    b_o = b_o_ref[0]
    b1 = b1_ref[0]
    b2 = b2_ref[0]
    g1, be1 = g1_ref[0], be1_ref[0]
    g2, be2 = g2_ref[0], be2_ref[0]

    # ------------------- multi-head self attention -------------------
    # One wide bf16 matmul for Q,K,V over all BB*S tokens (f32 accumulate).
    # 1/sqrt(hd) is already folded into the Q columns of w_qkv/b_qkv.
    qkv = jnp.dot(x.astype(bf), w_qkv_ref[0],
                  preferred_element_type=jnp.float32) + b_qkv          # (M, 3D)

    # Per-head, batch-batched attention.  Each head's q/k/v is a contiguous
    # (row, lane) rectangle of qkv -> only lane slicing + free leading-dim
    # reshapes; no XLU transposes.  Context is written straight into attn_scr.
    # Unroll length = nhead (fixed), independent of the batch tile size BB.
    for h in range(nhead):
        q_h = qkv[:, h * hd:(h + 1) * hd].reshape(BB, S, hd).astype(bf)
        k_h = qkv[:, D + h * hd:D + (h + 1) * hd].reshape(BB, S, hd).astype(bf)
        v_h = qkv[:, 2 * D + h * hd:2 * D + (h + 1) * hd].reshape(BB, S, hd).astype(bf)
        s = jnp.einsum('bqd,bkd->bqk', q_h, k_h,
                       preferred_element_type=jnp.float32)             # (BB,S,S)
        s = s - jnp.max(s, axis=-1, keepdims=True)
        p = jnp.exp(s)
        p = p * pl.reciprocal(jnp.sum(p, axis=-1, keepdims=True), approx=True)
        c = jnp.einsum('bqk,bkd->bqd', p.astype(bf), v_h,
                       preferred_element_type=jnp.float32)             # (BB,S,hd)
        attn_scr[:, h * hd:(h + 1) * hd] = c.reshape(M, hd).astype(bf)
    # TODO(synk): for long sequences add a KV-tiled online-softmax (flash) path
    # instead of materializing the full (BB,S,S) scores (matters on v7x 64 MiB).

    attn = jnp.dot(attn_scr[...], w_o_ref[0],
                   preferred_element_type=jnp.float32) + b_o           # (M, D)

    def layernorm(y, g, b):
        # two-pass variance (numerically safe); rsqrt goes to the EUP slot.
        mu = jnp.mean(y, axis=-1, keepdims=True)
        d = y - mu
        var = jnp.mean(d * d, axis=-1, keepdims=True)
        return d * jax.lax.rsqrt(var + eps) * g + b

    # post-norm (norm_first=False): x = norm1(x + attn)
    x = layernorm(x + attn, g1, be1)

    # ------------------- feed-forward (ReLU) -------------------
    h1 = jnp.dot(x.astype(bf), w1_ref[0],
                 preferred_element_type=jnp.float32) + b1
    h1 = jnp.maximum(h1, 0.0)
    ff = jnp.dot(h1.astype(bf), w2_ref[0],
                 preferred_element_type=jnp.float32) + b2

    x = layernorm(x + ff, g2, be2)
    x_scr[...] = x

    @pl.when(l == num_l - 1)
    def _():
        out_ref[...] = x.reshape(BB, S, D).astype(out_ref.dtype)


# ------------------------ sizing helpers ------------------------
def _physical_vmem_bytes():
    try:
        return int(pltpu.get_tpu_info().vmem_capacity_bytes)
    except Exception:
        return 64 * _MIB          # conservative (v7x per-TensorCore VMEM)


def _footprint_bytes(BB, S, D, F, src_itemsize, weight_buffers):
    """Rough per-grid-step VMEM footprint estimate (bytes)."""
    M = BB * S
    weights = weight_buffers * 2 * (3 * D * D + D * D + 2 * D * F)   # bf16 slabs
    small = weight_buffers * 4 * (3 * D + D + 4 * D + F + D)         # biases / LN (f32)
    act_io = 2 * (2 * M * D * src_itemsize)                          # src + out, 2-buffered
    scratch = M * D * 4 + M * D * 2                                  # x_scr f32 + attn_scr bf16
    temps = 4 * (M * 3 * D) + 4 * (M * F) + 8 * (BB * S * S) + 3 * 4 * (M * D)
    return weights + small + act_io + scratch + temps


def _pick_batch_block(B, S, D, F, src_itemsize, *, vmem_budget,
                      weight_buffers=2, target_rows=512, min_batch_tiles=1):
    """Divisor BB of B: smallest with BB*S >= target_rows that fits the VMEM
    budget, else the largest fitting BB (amortize weight re-streaming).
    grid[0] = B // BB is kept >= min_batch_tiles (set 2 on v7x: 2 TensorCores)."""
    max_bb = max(1, B // max(1, min_batch_tiles))
    divs = [bb for bb in range(1, max_bb + 1) if B % bb == 0]
    fits = [bb for bb in divs
            if _footprint_bytes(bb, S, D, F, src_itemsize, weight_buffers) <= vmem_budget]
    if not fits:
        fits = divs[:1]          # smallest tile; compiler reports if even this OOMs
    for bb in fits:
        if bb * S >= target_rows:
            return bb
    return fits[-1]


# --------------------- one-time weight preparation ---------------------
def prepare_params(params, *, nhead):
    """Call ONCE at load time (not per forward):
      * cast MXU weights (already pre-transposed to (in, out)) to bf16,
      * fold the attention scale 1/sqrt(head_dim) into the Q columns of the
        in-projection weight and bias (deletes an (M, D) multiply per layer).
    """
    D = params["w_qkv"].shape[1]
    hd = D // nhead
    scale = 1.0 / float(hd) ** 0.5
    col_scale = jnp.concatenate(
        [jnp.full((D,), scale, jnp.float32), jnp.ones((2 * D,), jnp.float32)])
    bf = jnp.bfloat16
    out = dict(params)
    out["w_qkv"] = (params["w_qkv"].astype(jnp.float32) * col_scale).astype(bf)
    out["b_qkv"] = params["b_qkv"].astype(jnp.float32) * col_scale
    out["w_o"] = params["w_o"].astype(bf)
    out["w1"] = params["w1"].astype(bf)
    out["w2"] = params["w2"].astype(bf)
    # TODO(synk): on v7x, w1/w2 could be stored in fp8 (bf16 activations, f32
    # accumulation) to halve the dominant weight DMA / VMEM footprint.
    return out


# ----------------------------- wrapper -----------------------------
def transformer_encoder_pallas(src, params, *, nhead, eps=1e-5,
                               batch_block=None, weight_buffering=None,
                               min_batch_tiles=1, target_rows=512,
                               return_hidden_outputs=False):
    """src: (B, S, D) batch_first.  params: output of prepare_params().

    Default CustomTransformerEncoder path: mask=None, src_key_padding_mask=None
    (full bidirectional attention), eval mode, norm=None.
    Tuning: v6e -> weight_buffering=3, grow BB; v7x -> weight_buffering=1 for
    the FFN slabs and min_batch_tiles=2; v5e -> maximize BB, target_rows mult of 128.
    """
    B, S, D = src.shape
    L = params["w_qkv"].shape[0]
    F = params["w1"].shape[-1]
    assert D % nhead == 0
    assert params["w_qkv"].dtype == jnp.bfloat16, "call prepare_params() once at load time"

    n_buf = 2 if weight_buffering is None else weight_buffering
    phys_vmem = _physical_vmem_bytes()

    if batch_block is None:
        BB = _pick_batch_block(B, S, D, F, src.dtype.itemsize,
                               vmem_budget=phys_vmem // 2,
                               weight_buffers=n_buf,
                               target_rows=target_rows,
                               min_batch_tiles=min_batch_tiles)
    else:
        BB = batch_block
    assert B % BB == 0

    footprint = _footprint_bytes(BB, S, D, F, src.dtype.itemsize, n_buf)
    vmem_limit = int(min(max(footprint * 1.5, 32 * _MIB), phys_vmem * 0.95))

    kernel = functools.partial(_encoder_stack_kernel, nhead=nhead, eps=eps)

    def wmap(b, l):   # per-layer weights
        return (l, 0, 0)

    def xmap(b, l):   # per-batch-tile activations
        return (b, 0, 0)

    def wspec(shape):
        if weight_buffering is None:
            return pl.BlockSpec(shape, wmap)
        return pl.BlockSpec(shape, wmap, pipeline_mode=pl.Buffered(weight_buffering))

    grid_spec = pltpu.PrefetchScalarGridSpec(
        num_scalar_prefetch=0,
        grid=(B // BB, L),
        in_specs=[
            pl.BlockSpec((BB, S, D), xmap),     # src
            wspec((1, D, 3 * D)),               # w_qkv (bf16, Q cols pre-scaled)
            pl.BlockSpec((1, 1, 3 * D), wmap),  # b_qkv
            wspec((1, D, D)),                   # w_o   (bf16)
            pl.BlockSpec((1, 1, D), wmap),      # b_o
            pl.BlockSpec((1, 1, D), wmap),      # ln1 gamma
            pl.BlockSpec((1, 1, D), wmap),      # ln1 beta
            pl.BlockSpec((1, 1, D), wmap),      # ln2 gamma
            pl.BlockSpec((1, 1, D), wmap),      # ln2 beta
            wspec((1, D, F)),                   # w1    (bf16)
            pl.BlockSpec((1, 1, F), wmap),      # b1
            wspec((1, F, D)),                   # w2    (bf16)
            pl.BlockSpec((1, 1, D), wmap),      # b2
        ],
        out_specs=pl.BlockSpec((BB, S, D), xmap),
        scratch_shapes=[pltpu.VMEM((BB * S, D), jnp.float32),    # residual stream
                        pltpu.VMEM((BB * S, D), jnp.bfloat16)],  # attention context
    )

    out = pl.pallas_call(
        kernel,
        out_shape=jax.ShapeDtypeStruct((B, S, D), src.dtype),
        grid_spec=grid_spec,
        compiler_params=pltpu.CompilerParams(
            dimension_semantics=("parallel", "arbitrary"),
            vmem_limit_bytes=vmem_limit),
    )(src, params["w_qkv"], params["b_qkv"], params["w_o"], params["b_o"],
      params["g1"], params["be1"], params["g2"], params["be2"],
      params["w1"], params["b1"], params["w2"], params["b2"])

    # TODO(synk): return_hidden_outputs=True would need L per-layer outputs; the
    # module's default (False) path returns an empty list, which we mirror.
    hidden_outputs = []
    return out, hidden_outputs


# ------------------------- pure-JAX reference -------------------------
# Uses the RAW f32 params; bf16 MXU operands with f32 accumulation, f32
# softmax / LayerNorm / residual stream (mirrors kernel numerics).
def _reference(src, params, *, nhead, eps=1e-5):
    bf = jnp.bfloat16
    x = src.astype(jnp.float32)
    B, S, D = x.shape
    hd = D // nhead
    scale = 1.0 / float(hd) ** 0.5
    L = params["w_qkv"].shape[0]

    def mm(a, w):
        return jnp.einsum('...ij,jk->...ik', a.astype(bf), w.astype(bf),
                          preferred_element_type=jnp.float32)

    def ln(y, g, b):
        mu = jnp.mean(y, -1, keepdims=True)
        var = jnp.mean((y - mu) ** 2, -1, keepdims=True)
        return (y - mu) / jnp.sqrt(var + eps) * g + b

    for l in range(L):
        qkv = mm(x, params["w_qkv"][l]) + params["b_qkv"][l]
        q = (qkv[..., :D] * scale).reshape(B, S, nhead, hd).transpose(0, 2, 1, 3)
        k = qkv[..., D:2 * D].reshape(B, S, nhead, hd).transpose(0, 2, 1, 3)
        v = qkv[..., 2 * D:].reshape(B, S, nhead, hd).transpose(0, 2, 1, 3)
        s = jnp.einsum('bhqd,bhkd->bhqk', q.astype(bf), k.astype(bf),
                       preferred_element_type=jnp.float32)
        p = jax.nn.softmax(s, axis=-1)
        o = jnp.einsum('bhqk,bhkd->bhqd', p.astype(bf), v.astype(bf),
                       preferred_element_type=jnp.float32)
        o = o.transpose(0, 2, 1, 3).reshape(B, S, D)
        o = mm(o, params["w_o"][l]) + params["b_o"][l]
        x = ln(x + o, params["g1"][l], params["be1"][l])
        h1 = jnp.maximum(mm(x, params["w1"][l]) + params["b1"][l], 0.0)
        ff = mm(h1, params["w2"][l]) + params["b2"][l]
        x = ln(x + ff, params["g2"][l], params["be2"][l])
    return x


# ------------------------------ driver ------------------------------
if __name__ == "__main__":
    # Small but lane-dense shapes (D, F multiples of 128; head_dim = 32).
    B, S, D, F, H, L = 4, 16, 128, 256, 4, 2
    key = jax.random.PRNGKey(0)
    ks = jax.random.split(key, 9)

    params = {
        # in_proj: PyTorch stores (3D, D); pre-transposed here to (D, 3D).
        "w_qkv": 0.02 * jax.random.normal(ks[0], (L, D, 3 * D), jnp.float32),
        "b_qkv": 0.02 * jax.random.normal(ks[1], (L, 1, 3 * D), jnp.float32),
        "w_o":   0.02 * jax.random.normal(ks[2], (L, D, D), jnp.float32),
        "b_o":   0.02 * jax.random.normal(ks[3], (L, 1, D), jnp.float32),
        "g1":  jnp.ones((L, 1, D), jnp.float32),
        "be1": jnp.zeros((L, 1, D), jnp.float32),
        "g2":  jnp.ones((L, 1, D), jnp.float32),
        "be2": jnp.zeros((L, 1, D), jnp.float32),
        "w1":  0.02 * jax.random.normal(ks[4], (L, D, F), jnp.float32),
        "b1":  0.02 * jax.random.normal(ks[5], (L, 1, F), jnp.float32),
        "w2":  0.02 * jax.random.normal(ks[6], (L, F, D), jnp.float32),
        "b2":  0.02 * jax.random.normal(ks[7], (L, 1, D), jnp.float32),
    }
    src = jax.random.normal(ks[8], (B, S, D), jnp.float32)

    prepared = prepare_params(params, nhead=H)        # one-time weight prep
    out, hidden = transformer_encoder_pallas(src, prepared, nhead=H)
    out = jax.block_until_ready(out)

    ref = _reference(src, params, nhead=H)
    np.testing.assert_allclose(np.asarray(out), np.asarray(ref),
                               atol=2e-2, rtol=2e-2)
    print("KERNEL_OK")
</pallas_src>

<mosaic_0001>
module attributes {stable_mosaic.version = 11 : i64} {
  func.func @_encoder_stack_kernel(%arg0: i32, %arg1: i32, %arg2: memref<4x16x128xf32, #tpu.memory_space<vmem>>, %arg3: memref<1x128x384xbf16, #tpu.memory_space<vmem>>, %arg4: memref<1x1x384xf32, #tpu.memory_space<vmem>>, %arg5: memref<1x128x128xbf16, #tpu.memory_space<vmem>>, %arg6: memref<1x1x128xf32, #tpu.memory_space<vmem>>, %arg7: memref<1x1x128xf32, #tpu.memory_space<vmem>>, %arg8: memref<1x1x128xf32, #tpu.memory_space<vmem>>, %arg9: memref<1x1x128xf32, #tpu.memory_space<vmem>>, %arg10: memref<1x1x128xf32, #tpu.memory_space<vmem>>, %arg11: memref<1x128x256xbf16, #tpu.memory_space<vmem>>, %arg12: memref<1x1x256xf32, #tpu.memory_space<vmem>>, %arg13: memref<1x256x128xbf16, #tpu.memory_space<vmem>>, %arg14: memref<1x1x128xf32, #tpu.memory_space<vmem>>, %arg15: memref<4x16x128xf32, #tpu.memory_space<vmem>>, %arg16: memref<64x128xf32, #tpu.memory_space<vmem>>, %arg17: memref<64x128xbf16, #tpu.memory_space<vmem>>) attributes {dimension_semantics = [#tpu.dimension_semantics<parallel>, #tpu.dimension_semantics<arbitrary>], iteration_bounds = array<i64: 1, 2>, scalar_prefetch = 0 : i64, scratch_operands = 2 : i64, tpu.core_type = #tpu.core_type<tc>, window_params = [{transform_indices = @transform_0, window_bounds = array<i64: 4, 16, 128>}, {transform_indices = @transform_1, window_bounds = array<i64: 1, 128, 384>}, {transform_indices = @transform_2, window_bounds = array<i64: 1, 1, 384>}, {transform_indices = @transform_3, window_bounds = array<i64: 1, 128, 128>}, {transform_indices = @transform_4, window_bounds = array<i64: 1, 1, 128>}, {transform_indices = @transform_5, window_bounds = array<i64: 1, 1, 128>}, {transform_indices = @transform_6, window_bounds = array<i64: 1, 1, 128>}, {transform_indices = @transform_7, window_bounds = array<i64: 1, 1, 128>}, {transform_indices = @transform_8, window_bounds = array<i64: 1, 1, 128>}, {transform_indices = @transform_9, window_bounds = array<i64: 1, 128, 256>}, {transform_indices = @transform_10, window_bounds = array<i64: 1, 1, 256>}, {transform_indices = @transform_11, window_bounds = array<i64: 1, 256, 128>}, {transform_indices = @transform_12, window_bounds = array<i64: 1, 1, 128>}, {transform_indices = @transform_13, window_bounds = array<i64: 4, 16, 128>}]} {
    %c0_i32 = arith.constant 0 : i32
    %0 = arith.cmpi eq, %arg1, %c0_i32 : i32
    %1 = arith.extui %0 : i1 to i32
    %c0_i32_0 = arith.constant 0 : i32
    %2 = arith.cmpi ne, %1, %c0_i32_0 : i32
    scf.if %2 {
      %c0_78 = arith.constant 0 : index
      %c0_79 = arith.constant 0 : index
      %c0_80 = arith.constant 0 : index
      %192 = vector.load %arg2[%c0_78, %c0_79, %c0_80] : memref<4x16x128xf32, #tpu.memory_space<vmem>>, vector<4x16x128xf32>
      %193 = vector.shape_cast %192 : vector<4x16x128xf32> to vector<64x128xf32>
      %c0_81 = arith.constant 0 : index
      %c0_82 = arith.constant 0 : index
      %194 = vector.load %arg16[%c0_81, %c0_82] : memref<64x128xf32, #tpu.memory_space<vmem>>, vector<64x128xf32>
      tpu.vector_store %arg16[%c0_81, %c0_82], %193 {strides = array<i32>} : memref<64x128xf32, #tpu.memory_space<vmem>>, vector<64x128xf32>,
    } else {
    }
    %c0 = arith.constant 0 : index
    %c0_1 = arith.constant 0 : index
    %3 = vector.load %arg16[%c0, %c0_1] : memref<64x128xf32, #tpu.memory_space<vmem>>, vector<64x128xf32>
    %c0_2 = arith.constant 0 : index
    %c0_3 = arith.constant 0 : index
    %c0_4 = arith.constant 0 : index
    %4 = vector.load %arg4[%c0_2, %c0_3, %c0_4] : memref<1x1x384xf32, #tpu.memory_space<vmem>>, vector<1x1x384xf32>
    %5 = vector.shape_cast %4 : vector<1x1x384xf32> to vector<1x384xf32>
    %c0_5 = arith.constant 0 : index
    %c0_6 = arith.constant 0 : index
    %c0_7 = arith.constant 0 : index
    %6 = vector.load %arg6[%c0_5, %c0_6, %c0_7] : memref<1x1x128xf32, #tpu.memory_space<vmem>>, vector<1x1x128xf32>
    %7 = vector.shape_cast %6 : vector<1x1x128xf32> to vector<1x128xf32>
    %c0_8 = arith.constant 0 : index
    %c0_9 = arith.constant 0 : index
    %c0_10 = arith.constant 0 : index
    %8 = vector.load %arg12[%c0_8, %c0_9, %c0_10] : memref<1x1x256xf32, #tpu.memory_space<vmem>>, vector<1x1x256xf32>
    %9 = vector.shape_cast %8 : vector<1x1x256xf32> to vector<1x256xf32>
    %c0_11 = arith.constant 0 : index
    %c0_12 = arith.constant 0 : index
    %c0_13 = arith.constant 0 : index
    %10 = vector.load %arg14[%c0_11, %c0_12, %c0_13] : memref<1x1x128xf32, #tpu.memory_space<vmem>>, vector<1x1x128xf32>
    %11 = vector.shape_cast %10 : vector<1x1x128xf32> to vector<1x128xf32>
    %c0_14 = arith.constant 0 : index
    %c0_15 = arith.constant 0 : index
    %c0_16 = arith.constant 0 : index
    %12 = vector.load %arg7[%c0_14, %c0_15, %c0_16] : memref<1x1x128xf32, #tpu.memory_space<vmem>>, vector<1x1x128xf32>
    %13 = vector.shape_cast %12 : vector<1x1x128xf32> to vector<1x128xf32>
    %c0_17 = arith.constant 0 : index
    %c0_18 = arith.constant 0 : index
    %c0_19 = arith.constant 0 : index
    %14 = vector.load %arg8[%c0_17, %c0_18, %c0_19] : memref<1x1x128xf32, #tpu.memory_space<vmem>>, vector<1x1x128xf32>
    %15 = vector.shape_cast %14 : vector<1x1x128xf32> to vector<1x128xf32>
    %c0_20 = arith.constant 0 : index
    %c0_21 = arith.constant 0 : index
    %c0_22 = arith.constant 0 : index
    %16 = vector.load %arg9[%c0_20, %c0_21, %c0_22] : memref<1x1x128xf32, #tpu.memory_space<vmem>>, vector<1x1x128xf32>
    %17 = vector.shape_cast %16 : vector<1x1x128xf32> to vector<1x128xf32>
    %c0_23 = arith.constant 0 : index
    %c0_24 = arith.constant 0 : index
    %c0_25 = arith.constant 0 : index
    %18 = vector.load %arg10[%c0_23, %c0_24, %c0_25] : memref<1x1x128xf32, #tpu.memory_space<vmem>>, vector<1x1x128xf32>
    %19 = vector.shape_cast %18 : vector<1x1x128xf32> to vector<1x128xf32>
    %20 = arith.truncf %3 : vector<64x128xf32> to vector<64x128xbf16>
    %c0_26 = arith.constant 0 : index
    %c0_27 = arith.constant 0 : index
    %c0_28 = arith.constant 0 : index
    %21 = vector.load %arg3[%c0_26, %c0_27, %c0_28] : memref<1x128x384xbf16, #tpu.memory_space<vmem>>, vector<1x128x384xbf16>
    %22 = vector.shape_cast %21 : vector<1x128x384xbf16> to vector<128x384xbf16>
    %cst = arith.constant dense<0.000000e+00> : vector<64x384xf32>
    %23 = tpu.matmul %20, %22, %cst {dimension_numbers = #tpu.dot_dimension_numbers<[1], [0], [0], [1], [0, 0, 1, 1], [], []>} : vector<64x128xbf16>, vector<128x384xbf16>, vector<64x384xf32> -> vector<64x384xf32>
    %24 = vector.broadcast %5 : vector<1x384xf32> to vector<64x384xf32>
    %25 = arith.addf %23, %24 : vector<64x384xf32>
    %26 = vector.extract_strided_slice %25 {offsets = [0, 0], sizes = [64, 32], strides = [1, 1]} : vector<64x384xf32> to vector<64x32xf32>
    %27 = vector.shape_cast %26 : vector<64x32xf32> to vector<4x16x32xf32>
    %28 = arith.truncf %27 : vector<4x16x32xf32> to vector<4x16x32xbf16>
    %29 = vector.extract_strided_slice %25 {offsets = [0, 128], sizes = [64, 32], strides = [1, 1]} : vector<64x384xf32> to vector<64x32xf32>
    %30 = vector.shape_cast %29 : vector<64x32xf32> to vector<4x16x32xf32>
    %31 = arith.truncf %30 : vector<4x16x32xf32> to vector<4x16x32xbf16>
    %32 = vector.extract_strided_slice %25 {offsets = [0, 256], sizes = [64, 32], strides = [1, 1]} : vector<64x384xf32> to vector<64x32xf32>
    %33 = vector.shape_cast %32 : vector<64x32xf32> to vector<4x16x32xf32>
    %34 = arith.truncf %33 : vector<4x16x32xf32> to vector<4x16x32xbf16>
    "tpu.trace_start"() <{level = 10 : i32, message = "bqd,bkd->bqk"}> : () -> ()
    %cst_29 = arith.constant dense<0.000000e+00> : vector<4x16x16xf32>
    %35 = tpu.matmul %28, %31, %cst_29 {dimension_numbers = #tpu.dot_dimension_numbers<[2], [2], [1], [1], [0, 0, 0, 1, 1, 1], [0], [0]>} : vector<4x16x32xbf16>, vector<4x16x32xbf16>, vector<4x16x16xf32> -> vector<4x16x16xf32>
    "tpu.trace_stop"() : () -> ()
    %cst_30 = arith.constant dense<0xFF800000> : vector<4x16xf32>
    %36 = vector.multi_reduction <maximumf>, %35, %cst_30 [2] : vector<4x16x16xf32> to vector<4x16xf32>
    %37 = vector.shape_cast %36 : vector<4x16xf32> to vector<4x16x1xf32>
    %38 = vector.broadcast %37 : vector<4x16x1xf32> to vector<4x16x16xf32>
    %39 = arith.subf %35, %38 : vector<4x16x16xf32>
    %40 = math.exp %39 : vector<4x16x16xf32>
    %cst_31 = arith.constant dense<0.000000e+00> : vector<4x16xf32>
    %41 = vector.multi_reduction <add>, %40, %cst_31 [2] : vector<4x16x16xf32> to vector<4x16xf32>
    %42 = vector.shape_cast %41 : vector<4x16xf32> to vector<4x16x1xf32>
    %43 = tpu.reciprocal %42 {approx = true} : vector<4x16x1xf32> -> vector<4x16x1xf32>
    %44 = vector.broadcast %43 : vector<4x16x1xf32> to vector<4x16x16xf32>
    %45 = arith.mulf %40, %44 : vector<4x16x16xf32>
    %46 = arith.truncf %45 : vector<4x16x16xf32> to vector<4x16x16xbf16>
    "tpu.trace_start"() <{level = 10 : i32, message = "bqk,bkd->bqd"}> : () -> ()
    %cst_32 = arith.constant dense<0.000000e+00> : vector<4x16x32xf32>
    %47 = tpu.matmul %46, %34, %cst_32 {dimension_numbers = #tpu.dot_dimension_numbers<[2], [1], [1], [2], [0, 0, 0, 1, 1, 2], [0], [0]>} : vector<4x16x16xbf16>, vector<4x16x32xbf16>, vector<4x16x32xf32> -> vector<4x16x32xf32>
    "tpu.trace_stop"() : () -> ()
    %48 = vector.shape_cast %47 : vector<4x16x32xf32> to vector<64x32xf32>
    %49 = arith.truncf %48 : vector<64x32xf32> to vector<64x32xbf16>
    %c0_33 = arith.constant 0 : index
    %c0_34 = arith.constant 0 : index
    %50 = vector.load %arg17[%c0_33, %c0_34] : memref<64x128xbf16, #tpu.memory_space<vmem>>, vector<64x32xbf16>
    tpu.vector_store %arg17[%c0_33, %c0_34], %49 {strides = array<i32>} : memref<64x128xbf16, #tpu.memory_space<vmem>>, vector<64x32xbf16>,
    %51 = vector.extract_strided_slice %25 {offsets = [0, 32], sizes = [64, 32], strides = [1, 1]} : vector<64x384xf32> to vector<64x32xf32>
    %52 = vector.shape_cast %51 : vector<64x32xf32> to vector<4x16x32xf32>
    %53 = arith.truncf %52 : vector<4x16x32xf32> to vector<4x16x32xbf16>
    %54 = vector.extract_strided_slice %25 {offsets = [0, 160], sizes = [64, 32], strides = [1, 1]} : vector<64x384xf32> to vector<64x32xf32>
    %55 = vector.shape_cast %54 : vector<64x32xf32> to vector<4x16x32xf32>
    %56 = arith.truncf %55 : vector<4x16x32xf32> to vector<4x16x32xbf16>
    %57 = vector.extract_strided_slice %25 {offsets = [0, 288], sizes = [64, 32], strides = [1, 1]} : vector<64x384xf32> to vector<64x32xf32>
    %58 = vector.shape_cast %57 : vector<64x32xf32> to vector<4x16x32xf32>
    %59 = arith.truncf %58 : vector<4x16x32xf32> to vector<4x16x32xbf16>
    "tpu.trace_start"() <{level = 10 : i32, message = "bqd,bkd->bqk"}> : () -> ()
    %cst_35 = arith.constant dense<0.000000e+00> : vector<4x16x16xf32>
    %60 = tpu.matmul %53, %56, %cst_35 {dimension_numbers = #tpu.dot_dimension_numbers<[2], [2], [1], [1], [0, 0, 0, 1, 1, 1], [0], [0]>} : vector<4x16x32xbf16>, vector<4x16x32xbf16>, vector<4x16x16xf32> -> vector<4x16x16xf32>
    "tpu.trace_stop"() : () -> ()
    %cst_36 = arith.constant dense<0xFF800000> : vector<4x16xf32>
    %61 = vector.multi_reduction <maximumf>, %60, %cst_36 [2] : vector<4x16x16xf32> to vector<4x16xf32>
    %62 = vector.shape_cast %61 : vector<4x16xf32> to vector<4x16x1xf32>
    %63 = vector.broadcast %62 : vector<4x16x1xf32> to vector<4x16x16xf32>
    %64 = arith.subf %60, %63 : vector<4x16x16xf32>
    %65 = math.exp %64 : vector<4x16x16xf32>
    %cst_37 = arith.constant dense<0.000000e+00> : vector<4x16xf32>
    %66 = vector.multi_reduction <add>, %65, %cst_37 [2] : vector<4x16x16xf32> to vector<4x16xf32>
    %67 = vector.shape_cast %66 : vector<4x16xf32> to vector<4x16x1xf32>
    %68 = tpu.reciprocal %67 {approx = true} : vector<4x16x1xf32> -> vector<4x16x1xf32>
    %69 = vector.broadcast %68 : vector<4x16x1xf32> to vector<4x16x16xf32>
    %70 = arith.mulf %65, %69 : vector<4x16x16xf32>
    %71 = arith.truncf %70 : vector<4x16x16xf32> to vector<4x16x16xbf16>
    "tpu.trace_start"() <{level = 10 : i32, message = "bqk,bkd->bqd"}> : () -> ()
    %cst_38 = arith.constant dense<0.000000e+00> : vector<4x16x32xf32>
    %72 = tpu.matmul %71, %59, %cst_38 {dimension_numbers = #tpu.dot_dimension_numbers<[2], [1], [1], [2], [0, 0, 0, 1, 1, 2], [0], [0]>} : vector<4x16x16xbf16>, vector<4x16x32xbf16>, vector<4x16x32xf32> -> vector<4x16x32xf32>
    "tpu.trace_stop"() : () -> ()
    %73 = vector.shape_cast %72 : vector<4x16x32xf32> to vector<64x32xf32>
    %74 = arith.truncf %73 : vector<64x32xf32> to vector<64x32xbf16>
    %c0_39 = arith.constant 0 : index
    %c32 = arith.constant 32 : index
    %75 = vector.load %arg17[%c0_39, %c32] : memref<64x128xbf16, #tpu.memory_space<vmem>>, vector<64x32xbf16>
    tpu.vector_store %arg17[%c0_39, %c32], %74 {strides = array<i32>} : memref<64x128xbf16, #tpu.memory_space<vmem>>, vector<64x32xbf16>,
    %76 = vector.extract_strided_slice %25 {offsets = [0, 64], sizes = [64, 32], strides = [1, 1]} : vector<64x384xf32> to vector<64x32xf32>
    %77 = vector.shape_cast %76 : vector<64x32xf32> to vector<4x16x32xf32>
    %78 = arith.truncf %77 : vector<4x16x32xf32> to vector<4x16x32xbf16>
    %79 = vector.extract_strided_slice %25 {offsets = [0, 192], sizes = [64, 32], strides = [1, 1]} : vector<64x384xf32> to vector<64x32xf32>
    %80 = vector.shape_cast %79 : vector<64x32xf32> to vector<4x16x32xf32>
    %81 = arith.truncf %80 : vector<4x16x32xf32> to vector<4x16x32xbf16>
    %82 = vector.extract_strided_slice %25 {offsets = [0, 320], sizes = [64, 32], strides = [1, 1]} : vector<64x384xf32> to vector<64x32xf32>
    %83 = vector.shape_cast %82 : vector<64x32xf32> to vector<4x16x32xf32>
    %84 = arith.truncf %83 : vector<4x16x32xf32> to vector<4x16x32xbf16>
    "tpu.trace_start"() <{level = 10 : i32, message = "bqd,bkd->bqk"}> : () -> ()
    %cst_40 = arith.constant dense<0.000000e+00> : vector<4x16x16xf32>
    %85 = tpu.matmul %78, %81, %cst_40 {dimension_numbers = #tpu.dot_dimension_numbers<[2], [2], [1], [1], [0, 0, 0, 1, 1, 1], [0], [0]>} : vector<4x16x32xbf16>, vector<4x16x32xbf16>, vector<4x16x16xf32> -> vector<4x16x16xf32>
    "tpu.trace_stop"() : () -> ()
    %cst_41 = arith.constant dense<0xFF800000> : vector<4x16xf32>
    %86 = vector.multi_reduction <maximumf>, %85, %cst_41 [2] : vector<4x16x16xf32> to vector<4x16xf32>
    %87 = vector.shape_cast %86 : vector<4x16xf32> to vector<4x16x1xf32>
    %88 = vector.broadcast %87 : vector<4x16x1xf32> to vector<4x16x16xf32>
    %89 = arith.subf %85, %88 : vector<4x16x16xf32>
    %90 = math.exp %89 : vector<4x16x16xf32>
    %cst_42 = arith.constant dense<0.000000e+00> : vector<4x16xf32>
    %91 = vector.multi_reduction <add>, %90, %cst_42 [2] : vector<4x16x16xf32> to vector<4x16xf32>
    %92 = vector.shape_cast %91 : vector<4x16xf32> to vector<4x16x1xf32>
    %93 = tpu.reciprocal %92 {approx = true} : vector<4x16x1xf32> -> vector<4x16x1xf32>
    %94 = vector.broadcast %93 : vector<4x16x1xf32> to vector<4x16x16xf32>
    %95 = arith.mulf %90, %94 : vector<4x16x16xf32>
    %96 = arith.truncf %95 : vector<4x16x16xf32> to vector<4x16x16xbf16>
    "tpu.trace_start"() <{level = 10 : i32, message = "bqk,bkd->bqd"}> : () -> ()
    %cst_43 = arith.constant dense<0.000000e+00> : vector<4x16x32xf32>
    %97 = tpu.matmul %96, %84, %cst_43 {dimension_numbers = #tpu.dot_dimension_numbers<[2], [1], [1], [2], [0, 0, 0, 1, 1, 2], [0], [0]>} : vector<4x16x16xbf16>, vector<4x16x32xbf16>, vector<4x16x32xf32> -> vector<4x16x32xf32>
    "tpu.trace_stop"() : () -> ()
    %98 = vector.shape_cast %97 : vector<4x16x32xf32> to vector<64x32xf32>
    %99 = arith.truncf %98 : vector<64x32xf32> to vector<64x32xbf16>
    %c0_44 = arith.constant 0 : index
    %c64 = arith.constant 64 : index
    %100 = vector.load %arg17[%c0_44, %c64] : memref<64x128xbf16, #tpu.memory_space<vmem>>, vector<64x32xbf16>
    tpu.vector_store %arg17[%c0_44, %c64], %99 {strides = array<i32>} : memref<64x128xbf16, #tpu.memory_space<vmem>>, vector<64x32xbf16>,
    %101 = vector.extract_strided_slice %25 {offsets = [0, 96], sizes = [64, 32], strides = [1, 1]} : vector<64x384xf32> to vector<64x32xf32>
    %102 = vector.shape_cast %101 : vector<64x32xf32> to vector<4x16x32xf32>
    %103 = arith.truncf %102 : vector<4x16x32xf32> to vector<4x16x32xbf16>
    %104 = vector.extract_strided_slice %25 {offsets = [0, 224], sizes = [64, 32], strides = [1, 1]} : vector<64x384xf32> to vector<64x32xf32>
    %105 = vector.shape_cast %104 : vector<64x32xf32> to vector<4x16x32xf32>
    %106 = arith.truncf %105 : vector<4x16x32xf32> to vector<4x16x32xbf16>
    %107 = vector.extract_strided_slice %25 {offsets = [0, 352], sizes = [64, 32], strides = [1, 1]} : vector<64x384xf32> to vector<64x32xf32>
    %108 = vector.shape_cast %107 : vector<64x32xf32> to vector<4x16x32xf32>
    %109 = arith.truncf %108 : vector<4x16x32xf32> to vector<4x16x32xbf16>
    "tpu.trace_start"() <{level = 10 : i32, message = "bqd,bkd->bqk"}> : () -> ()
    %cst_45 = arith.constant dense<0.000000e+00> : vector<4x16x16xf32>
    %110 = tpu.matmul %103, %106, %cst_45 {dimension_numbers = #tpu.dot_dimension_numbers<[2], [2], [1], [1], [0, 0, 0, 1, 1, 1], [0], [0]>} : vector<4x16x32xbf16>, vector<4x16x32xbf16>, vector<4x16x16xf32> -> vector<4x16x16xf32>
    "tpu.trace_stop"() : () -> ()
    %cst_46 = arith.constant dense<0xFF800000> : vector<4x16xf32>
    %111 = vector.multi_reduction <maximumf>, %110, %cst_46 [2] : vector<4x16x16xf32> to vector<4x16xf32>
    %112 = vector.shape_cast %111 : vector<4x16xf32> to vector<4x16x1xf32>
    %113 = vector.broadcast %112 : vector<4x16x1xf32> to vector<4x16x16xf32>
    %114 = arith.subf %110, %113 : vector<4x16x16xf32>
    %115 = math.exp %114 : vector<4x16x16xf32>
    %cst_47 = arith.constant dense<0.000000e+00> : vector<4x16xf32>
    %116 = vector.multi_reduction <add>, %115, %cst_47 [2] : vector<4x16x16xf32> to vector<4x16xf32>
    %117 = vector.shape_cast %116 : vector<4x16xf32> to vector<4x16x1xf32>
    %118 = tpu.reciprocal %117 {approx = true} : vector<4x16x1xf32> -> vector<4x16x1xf32>
    %119 = vector.broadcast %118 : vector<4x16x1xf32> to vector<4x16x16xf32>
    %120 = arith.mulf %115, %119 : vector<4x16x16xf32>
    %121 = arith.truncf %120 : vector<4x16x16xf32> to vector<4x16x16xbf16>
    "tpu.trace_start"() <{level = 10 : i32, message = "bqk,bkd->bqd"}> : () -> ()
    %cst_48 = arith.constant dense<0.000000e+00> : vector<4x16x32xf32>
    %122 = tpu.matmul %121, %109, %cst_48 {dimension_numbers = #tpu.dot_dimension_numbers<[2], [1], [1], [2], [0, 0, 0, 1, 1, 2], [0], [0]>} : vector<4x16x16xbf16>, vector<4x16x32xbf16>, vector<4x16x32xf32> -> vector<4x16x32xf32>
    "tpu.trace_stop"() : () -> ()
    %123 = vector.shape_cast %122 : vector<4x16x32xf32> to vector<64x32xf32>
    %124 = arith.truncf %123 : vector<64x32xf32> to vector<64x32xbf16>
    %c0_49 = arith.constant 0 : index
    %c96 = arith.constant 96 : index
    %125 = vector.load %arg17[%c0_49, %c96] : memref<64x128xbf16, #tpu.memory_space<vmem>>, vector<64x32xbf16>
    tpu.vector_store %arg17[%c0_49, %c96], %124 {strides = array<i32>} : memref<64x128xbf16, #tpu.memory_space<vmem>>, vector<64x32xbf16>,
    %c0_50 = arith.constant 0 : index
    %c0_51 = arith.constant 0 : index
    %126 = vector.load %arg17[%c0_50, %c0_51] : memref<64x128xbf16, #tpu.memory_space<vmem>>, vector<64x128xbf16>
    %c0_52 = arith.constant 0 : index
    %c0_53 = arith.constant 0 : index
    %c0_54 = arith.constant 0 : index
    %127 = vector.load %arg5[%c0_52, %c0_53, %c0_54] : memref<1x128x128xbf16, #tpu.memory_space<vmem>>, vector<1x128x128xbf16>
    %128 = vector.shape_cast %127 : vector<1x128x128xbf16> to vector<128x128xbf16>
    %cst_55 = arith.constant dense<0.000000e+00> : vector<64x128xf32>
    %129 = tpu.matmul %126, %128, %cst_55 {dimension_numbers = #tpu.dot_dimension_numbers<[1], [0], [0], [1], [0, 0, 1, 1], [], []>} : vector<64x128xbf16>, vector<128x128xbf16>, vector<64x128xf32> -> vector<64x128xf32>
    %130 = vector.broadcast %7 : vector<1x128xf32> to vector<64x128xf32>
    %131 = arith.addf %129, %130 : vector<64x128xf32>
    %132 = arith.addf %3, %131 : vector<64x128xf32>
    %cst_56 = arith.constant dense<0.000000e+00> : vector<64xf32>
    %133 = vector.multi_reduction <add>, %132, %cst_56 [1] : vector<64x128xf32> to vector<64xf32>
    %134 = vector.shape_cast %133 : vector<64xf32> to vector<64x1xf32>
    %cst_57 = arith.constant 1.280000e+02 : f32
    %135 = vector.broadcast %cst_57 : f32 to vector<64x1xf32>
    %136 = arith.divf %134, %135 : vector<64x1xf32>
    %137 = vector.broadcast %136 : vector<64x1xf32> to vector<64x128xf32>
    %138 = arith.subf %132, %137 : vector<64x128xf32>
    %139 = arith.mulf %138, %138 : vector<64x128xf32>
    %cst_58 = arith.constant dense<0.000000e+00> : vector<64xf32>
    %140 = vector.multi_reduction <add>, %139, %cst_58 [1] : vector<64x128xf32> to vector<64xf32>
    %141 = vector.shape_cast %140 : vector<64xf32> to vector<64x1xf32>
    %cst_59 = arith.constant 1.280000e+02 : f32
    %142 = vector.broadcast %cst_59 : f32 to vector<64x1xf32>
    %143 = arith.divf %141, %142 : vector<64x1xf32>
    %cst_60 = arith.constant 9.99999974E-6 : f32
    %144 = vector.broadcast %cst_60 : f32 to vector<64x1xf32>
    %145 = arith.addf %143, %144 : vector<64x1xf32>
    %146 = math.rsqrt %145 : vector<64x1xf32>
    %147 = vector.broadcast %146 : vector<64x1xf32> to vector<64x128xf32>
    %148 = arith.mulf %138, %147 : vector<64x128xf32>
    %149 = vector.broadcast %13 : vector<1x128xf32> to vector<64x128xf32>
    %150 = arith.mulf %148, %149 : vector<64x128xf32>
    %151 = vector.broadcast %15 : vector<1x128xf32> to vector<64x128xf32>
    %152 = arith.addf %150, %151 : vector<64x128xf32>
    %153 = arith.truncf %152 : vector<64x128xf32> to vector<64x128xbf16>
    %c0_61 = arith.constant 0 : index
    %c0_62 = arith.constant 0 : index
    %c0_63 = arith.constant 0 : index
    %154 = vector.load %arg11[%c0_61, %c0_62, %c0_63] : memref<1x128x256xbf16, #tpu.memory_space<vmem>>, vector<1x128x256xbf16>
    %155 = vector.shape_cast %154 : vector<1x128x256xbf16> to vector<128x256xbf16>
    %cst_64 = arith.constant dense<0.000000e+00> : vector<64x256xf32>
    %156 = tpu.matmul %153, %155, %cst_64 {dimension_numbers = #tpu.dot_dimension_numbers<[1], [0], [0], [1], [0, 0, 1, 1], [], []>} : vector<64x128xbf16>, vector<128x256xbf16>, vector<64x256xf32> -> vector<64x256xf32>
    %157 = vector.broadcast %9 : vector<1x256xf32> to vector<64x256xf32>
    %158 = arith.addf %156, %157 : vector<64x256xf32>
    %cst_65 = arith.constant 0.000000e+00 : f32
    %159 = vector.broadcast %cst_65 : f32 to vector<64x256xf32>
    %160 = arith.maximumf %158, %159 : vector<64x256xf32>
    %161 = arith.truncf %160 : vector<64x256xf32> to vector<64x256xbf16>
    %c0_66 = arith.constant 0 : index
    %c0_67 = arith.constant 0 : index
    %c0_68 = arith.constant 0 : index
    %162 = vector.load %arg13[%c0_66, %c0_67, %c0_68] : memref<1x256x128xbf16, #tpu.memory_space<vmem>>, vector<1x256x128xbf16>
    %163 = vector.shape_cast %162 : vector<1x256x128xbf16> to vector<256x128xbf16>
    %cst_69 = arith.constant dense<0.000000e+00> : vector<64x128xf32>
    %164 = tpu.matmul %161, %163, %cst_69 {dimension_numbers = #tpu.dot_dimension_numbers<[1], [0], [0], [1], [0, 0, 1, 1], [], []>} : vector<64x256xbf16>, vector<256x128xbf16>, vector<64x128xf32> -> vector<64x128xf32>
    %165 = vector.broadcast %11 : vector<1x128xf32> to vector<64x128xf32>
    %166 = arith.addf %164, %165 : vector<64x128xf32>
    %167 = arith.addf %152, %166 : vector<64x128xf32>
    %cst_70 = arith.constant dense<0.000000e+00> : vector<64xf32>
    %168 = vector.multi_reduction <add>, %167, %cst_70 [1] : vector<64x128xf32> to vector<64xf32>
    %169 = vector.shape_cast %168 : vector<64xf32> to vector<64x1xf32>
    %cst_71 = arith.constant 1.280000e+02 : f32
    %170 = vector.broadcast %cst_71 : f32 to vector<64x1xf32>
    %171 = arith.divf %169, %170 : vector<64x1xf32>
    %172 = vector.broadcast %171 : vector<64x1xf32> to vector<64x128xf32>
    %173 = arith.subf %167, %172 : vector<64x128xf32>
    %174 = arith.mulf %173, %173 : vector<64x128xf32>
    %cst_72 = arith.constant dense<0.000000e+00> : vector<64xf32>
    %175 = vector.multi_reduction <add>, %174, %cst_72 [1] : vector<64x128xf32> to vector<64xf32>
    %176 = vector.shape_cast %175 : vector<64xf32> to vector<64x1xf32>
    %cst_73 = arith.constant 1.280000e+02 : f32
    %177 = vector.broadcast %cst_73 : f32 to vector<64x1xf32>
    %178 = arith.divf %176, %177 : vector<64x1xf32>
    %cst_74 = arith.constant 9.99999974E-6 : f32
    %179 = vector.broadcast %cst_74 : f32 to vector<64x1xf32>
    %180 = arith.addf %178, %179 : vector<64x1xf32>
    %181 = math.rsqrt %180 : vector<64x1xf32>
    %182 = vector.broadcast %181 : vector<64x1xf32> to vector<64x128xf32>
    %183 = arith.mulf %173, %182 : vector<64x128xf32>
    %184 = vector.broadcast %17 : vector<1x128xf32> to vector<64x128xf32>
    %185 = arith.mulf %183, %184 : vector<64x128xf32>
    %186 = vector.broadcast %19 : vector<1x128xf32> to vector<64x128xf32>
    %187 = arith.addf %185, %186 : vector<64x128xf32>
    %c0_75 = arith.constant 0 : index
    %c0_76 = arith.constant 0 : index
    %188 = vector.load %arg16[%c0_75, %c0_76] : memref<64x128xf32, #tpu.memory_space<vmem>>, vector<64x128xf32>
    tpu.vector_store %arg16[%c0_75, %c0_76], %187 {strides = array<i32>} : memref<64x128xf32, #tpu.memory_space<vmem>>, vector<64x128xf32>,
    %c1_i32 = arith.constant 1 : i32
    %189 = arith.cmpi eq, %arg1, %c1_i32 : i32
    %190 = arith.extui %189 : i1 to i32
    %c0_i32_77 = arith.constant 0 : i32
    %191 = arith.cmpi ne, %190, %c0_i32_77 : i32
    scf.if %191 {
      %192 = vector.shape_cast %187 : vector<64x128xf32> to vector<4x16x128xf32>
      %c0_78 = arith.constant 0 : index
      %c0_79 = arith.constant 0 : index
      %c0_80 = arith.constant 0 : index
      %193 = vector.load %arg15[%c0_78, %c0_79, %c0_80] : memref<4x16x128xf32, #tpu.memory_space<vmem>>, vector<4x16x128xf32>
      tpu.vector_store %arg15[%c0_78, %c0_79, %c0_80], %192 {strides = array<i32>} : memref<4x16x128xf32, #tpu.memory_space<vmem>>, vector<4x16x128xf32>,
    } else {
    }
    return
  }
  func.func @transform_0(%arg0: i32, %arg1: i32) -> (i32, i32, i32) {
    %c0_i32 = arith.constant 0 : i32
    %c0_i32_0 = arith.constant 0 : i32
    %c0_i32_1 = arith.constant 0 : i32
    return %arg0, %c0_i32, %c0_i32_0 : i32, i32, i32
  }
  func.func @transform_1(%arg0: i32, %arg1: i32) -> (i32, i32, i32) {
    %c0_i32 = arith.constant 0 : i32
    %c0_i32_0 = arith.constant 0 : i32
    %c0_i32_1 = arith.constant 0 : i32
    return %arg1, %c0_i32, %c0_i32_0 : i32, i32, i32
  }
  func.func @transform_2(%arg0: i32, %arg1: i32) -> (i32, i32, i32) {
    %c0_i32 = arith.constant 0 : i32
    %c0_i32_0 = arith.constant 0 : i32
    %c0_i32_1 = arith.constant 0 : i32
    return %arg1, %c0_i32, %c0_i32_0 : i32, i32, i32
  }
  func.func @transform_3(%arg0: i32, %arg1: i32) -> (i32, i32, i32) {
    %c0_i32 = arith.constant 0 : i32
    %c0_i32_0 = arith.constant 0 : i32
    %c0_i32_1 = arith.constant 0 : i32
    return %arg1, %c0_i32, %c0_i32_0 : i32, i32, i32
  }
  func.func @transform_4(%arg0: i32, %arg1: i32) -> (i32, i32, i32) {
    %c0_i32 = arith.constant 0 : i32
    %c0_i32_0 = arith.constant 0 : i32
    %c0_i32_1 = arith.constant 0 : i32
    return %arg1, %c0_i32, %c0_i32_0 : i32, i32, i32
  }
  func.func @transform_5(%arg0: i32, %arg1: i32) -> (i32, i32, i32) {
    %c0_i32 = arith.constant 0 : i32
    %c0_i32_0 = arith.constant 0 : i32
    %c0_i32_1 = arith.constant 0 : i32
    return %arg1, %c0_i32, %c0_i32_0 : i32, i32, i32
  }
  func.func @transform_6(%arg0: i32, %arg1: i32) -> (i32, i32, i32) {
    %c0_i32 = arith.constant 0 : i32
    %c0_i32_0 = arith.constant 0 : i32
    %c0_i32_1 = arith.constant 0 : i32
    return %arg1, %c0_i32, %c0_i32_0 : i32, i32, i32
  }
  func.func @transform_7(%arg0: i32, %arg1: i32) -> (i32, i32, i32) {
    %c0_i32 = arith.constant 0 : i32
    %c0_i32_0 = arith.constant 0 : i32
    %c0_i32_1 = arith.constant 0 : i32
    return %arg1, %c0_i32, %c0_i32_0 : i32, i32, i32
  }
  func.func @transform_8(%arg0: i32, %arg1: i32) -> (i32, i32, i32) {
    %c0_i32 = arith.constant 0 : i32
    %c0_i32_0 = arith.constant 0 : i32
    %c0_i32_1 = arith.constant 0 : i32
    return %arg1, %c0_i32, %c0_i32_0 : i32, i32, i32
  }
  func.func @transform_9(%arg0: i32, %arg1: i32) -> (i32, i32, i32) {
    %c0_i32 = arith.constant 0 : i32
    %c0_i32_0 = arith.constant 0 : i32
    %c0_i32_1 = arith.constant 0 : i32
    return %arg1, %c0_i32, %c0_i32_0 : i32, i32, i32
  }
  func.func @transform_10(%arg0: i32, %arg1: i32) -> (i32, i32, i32) {
    %c0_i32 = arith.constant 0 : i32
    %c0_i32_0 = arith.constant 0 : i32
    %c0_i32_1 = arith.constant 0 : i32
    return %arg1, %c0_i32, %c0_i32_0 : i32, i32, i32
  }
  func.func @transform_11(%arg0: i32, %arg1: i32) -> (i32, i32, i32) {
    %c0_i32 = arith.constant 0 : i32
    %c0_i32_0 = arith.constant 0 : i32
    %c0_i32_1 = arith.constant 0 : i32
    return %arg1, %c0_i32, %c0_i32_0 : i32, i32, i32
  }
  func.func @transform_12(%arg0: i32, %arg1: i32) -> (i32, i32, i32) {
    %c0_i32 = arith.constant 0 : i32
    %c0_i32_0 = arith.constant 0 : i32
    %c0_i32_1 = arith.constant 0 : i32
    return %arg1, %c0_i32, %c0_i32_0 : i32, i32, i32
  }
  func.func @transform_13(%arg0: i32, %arg1: i32) -> (i32, i32, i32) {
    %c0_i32 = arith.constant 0 : i32
    %c0_i32_0 = arith.constant 0 : i32
    %c0_i32_1 = arith.constant 0 : i32
    return %arg0, %c0_i32, %c0_i32_0 : i32, i32, i32
  }
}

</mosaic_0001>

<llo_original>
// kernel: tpu_custom_call.1
$region0: #{tpu_custom_call.1}
  #allocation0 [shape = 'u32[]', space=smem, size = 0x4, offset = 0x4, fixed_abs, tag = 'smem constant byte address 0x4 - core index']
  #allocation1 [shape = 'u32[144,128]{1,0:T(1,128)}', space=vmem, size = 0x12000, scoped, tag = 'internal scratch']
  #allocation2 [shape = 'f32[64,128]{1,0:T(8,128)}', space=vmem, size = 0x8000, scoped, tag = 'scratch operand']
  #allocation3 [shape = 'bf16[64,128]{1,0:T(16,128)(2,1)}', space=vmem, size = 0x4000, scoped, tag = 'scratch operand']
  %s0 = inlined_call_operand.hbm [shape: f32[4,16,128], index: 0, kind: input, shape index: {}]
  %s1 = inlined_call_operand.hbm [shape: bf16[2,128,384], index: 1, kind: input, shape index: {}]
  %s2 = inlined_call_operand.vmem [shape: f32[2,1,384], index: 2, kind: input, shape index: {}]
  %s3 = inlined_call_operand.hbm [shape: bf16[2,128,128], index: 3, kind: input, shape index: {}]
  %s4 = inlined_call_operand.vmem [shape: f32[2,1,128], index: 4, kind: input, shape index: {}]
  %s5 = inlined_call_operand.vmem [shape: f32[2,1,128], index: 5, kind: input, shape index: {}]
  %s6 = inlined_call_operand.vmem [shape: f32[2,1,128], index: 6, kind: input, shape index: {}]
  %s7 = inlined_call_operand.vmem [shape: f32[2,1,128], index: 7, kind: input, shape index: {}]
  %s8 = inlined_call_operand.vmem [shape: f32[2,1,128], index: 8, kind: input, shape index: {}]
  %s9 = inlined_call_operand.hbm [shape: bf16[2,128,256], index: 9, kind: input, shape index: {}]
  %s10 = inlined_call_operand.vmem [shape: f32[2,1,256], index: 10, kind: input, shape index: {}]
  %s11 = inlined_call_operand.hbm [shape: bf16[2,256,128], index: 11, kind: input, shape index: {}]
  %s12 = inlined_call_operand.vmem [shape: f32[2,1,128], index: 12, kind: input, shape index: {}]
  %s13 = inlined_call_operand.hbm [shape: f32[4,16,128], index: 13, kind: output, shape index: {}]
  %s14 = sld [smem:[#allocation0]]
  $region113: #{tpu_custom_call.1} parent=0
    _
  %s16 = ssub.s32 1, %s14
  %s17 = scalar_select 0, %s16, %s14
  $region1: #{tpu_custom_call.1} parent=0
    #allocation4 [shape = 'u8[32768]{0}', space=vmem, size = 0x8000, scoped, tag = 'input window, operand 0, single buffered']
    #allocation5 [shape = 's32[2]{0}', space=sflag, size = 0x8, scoped, tag = 'scoped memory for tpu_custom_call.1']
    #allocation6 [shape = 's32[2]{0}', space=sflag, size = 0x8, scoped, tag = 'scoped memory for tpu_custom_call.1']
    #allocation7 [shape = 'u8[196608]{0}', space=vmem, size = 0x30000, scoped, tag = 'input window, operand 1']
    #allocation8 [shape = 's32[2]{0}', space=sflag, size = 0x8, scoped, tag = 'scoped memory for tpu_custom_call.1']
    #allocation9 [shape = 'u8[65536]{0}', space=vmem, size = 0x10000, scoped, tag = 'input window, operand 3']
    #allocation10 [shape = 'u8[131072]{0}', space=vmem, size = 0x20000, scoped, tag = 'input window, operand 9']
    #allocation11 [shape = 's32[2]{0}', space=sflag, size = 0x8, scoped, tag = 'scoped memory for tpu_custom_call.1']
    #allocation12 [shape = 'u8[131072]{0}', space=vmem, size = 0x20000, scoped, tag = 'input window, operand 11']
    #allocation13 [shape = 'u8[32768]{0}', space=vmem, size = 0x8000, scoped, tag = 'output window, operand 0, single buffered']
    %18 = vsyncpa [#allocation5], 0
    %19 = vsyncpa [#allocation8], 0
    %s20 = scalar_lea.sflag [#allocation8], 1
    %21 = vsyncpa %s20, 0
    %22 = vsyncpa [#allocation11], 0
    %s23 = scalar_lea.sflag [#allocation11], 1
    %24 = vsyncpa %s23, 0
    %25 = vsyncpa [#allocation6], 0
    loop: start=0, step=1, limit=4
    $region2: #{tpu_custom_call.1} parent=1 // loop_pre_header
      _
    $region3: #{tpu_custom_call.1} parent=1 // loop_header
      %s27 = sphi 0, %s31
      %p28 = scmp.ge.s32.totalorder %s27, 4
      %s34 = sphi 0, %s46
      %s35 = sphi 0, %s42
      %s36 = sphi 0, %s34
      %s37 = sphi 0, %s35
      %s38 = sphi 0, %s36
      %s39 = sphi 0, %s37
      %s49 = sphi 0, %s51
      %s52 = sphi 0, %s49
      %s53 = sphi 0, %s52
      %s69 = sphi 0, %s53
      %s75 = sphi 0, %s77
      %s78 = sphi 0, %s75
      %s79 = sphi 0, %s78
      %s95 = sphi 0, %s79
      %s101 = sphi 0, %s103
      %s104 = sphi 0, %s101
      %s105 = sphi 0, %s104
      %s121 = sphi 0, %s105
      %s127 = sphi 0, %s129
      %s130 = sphi 0, %s127
      %s131 = sphi 0, %s130
      %s147 = sphi 0, %s131
      %s153 = sphi 0, %s155
      %s156 = sphi 0, %s153
      %s157 = sphi 0, %s156
      %s173 = sphi 0, %s157
      %s179 = sphi 0, %s181
      %s182 = sphi 0, %s179
      %s183 = sphi 0, %s182
      %s199 = sphi 0, %s183
      %s205 = sphi 0, %s207
      %s208 = sphi 0, %s205
      %s209 = sphi 0, %s208
      %s225 = sphi 0, %s209
      %s231 = sphi 0, %s233
      %s234 = sphi 0, %s231
      %s235 = sphi 0, %s234
      %s251 = sphi 0, %s235
      %s257 = sphi 0, %s259
      %s260 = sphi 0, %s257
      %s261 = sphi 0, %s260
      %s277 = sphi 0, %s261
      %s283 = sphi 0, %s285
      %s286 = sphi 0, %s283
      %s287 = sphi 0, %s286
      %s303 = sphi 0, %s287
      %s309 = sphi 0, %s311
      %s312 = sphi 0, %s309
      %s313 = sphi 0, %s312
      %s329 = sphi 0, %s313
      %s335 = sphi 0, %s337
      %s338 = sphi 0, %s335
      %s339 = sphi 0, %s338
      %s355 = sphi 0, %s339
      %s361 = sphi 0, %s363
      %s364 = sphi 0, %s361
      %s365 = sphi 0, %s364
      %s381 = sphi 0, %s365
      %s387 = sphi 0, %s389
      %s390 = sphi 0, %s387
      %s391 = sphi 0, %s390
      %s407 = sphi 0, %s391
    $region4: #{tpu_custom_call.1} parent=1 // loop_header_branch
      %30 = sbr.rel (%p28) target = $region8
    $region5: #{tpu_custom_call.1} parent=1 // loop_body
      %s32 = ssub.s32 %s27, 1
      %s33 = ssub.s32 %s27, 2
      %s40 = sadd.s32 1, %s35
      %p41 = scmp.ge.s32.totalorder %s40, 2
      %s42 = scalar_select %p41, 0, %s40
      %s43 = sadd.s32 1, %s34
      %s44 = scalar_select %p41, %s43, %s34
      %p45 = scmp.ge.s32.totalorder %s44, 1
      %s46 = scalar_select %p45, 0, %s44
      %s47 = ssub.s32 %s34, %s46
      %p48 = scmp.eq.s32.totalorder %s47, 0
      %s50 = sadd.s32 %s49, 1
      %s51 = scalar_select %p48, %s49, %s50
      %p54 = pneg %p48
      %p55 = scmp.eq.s32.totalorder %s27, 1
      %p56 = por %p54, %p55
      %p57 = scmp.ne.s32.totalorder %s49, %s52
      %p58 = scmp.eq.s32.totalorder %s27, 0
      %p59 = por %p57, %p58
      %p60 = scmp.ne.s32.totalorder %s49, %s52
      %p61 = scmp.eq.s32.totalorder %s32, 1
      %p62 = por %p60, %p61
      %p63 = scmp.ne.s32.totalorder %s52, %s53
      %p64 = scmp.eq.s32.totalorder %s32, 0
      %p65 = por %p63, %p64
      %p66 = scmp.ne.s32.totalorder %s52, %s53
      %p67 = scmp.eq.s32.totalorder %s33, 1
      %p68 = por %p66, %p67
      %p70 = scmp.ne.s32.totalorder %s53, %s69
      %p71 = scmp.eq.s32.totalorder %s33, 0
      %p72 = por %p70, %p71
      %s73 = ssub.s32 %s35, %s42
      %p74 = scmp.eq.s32.totalorder %s73, 0
      %s76 = sadd.s32 %s75, 1
      %s77 = scalar_select %p74, %s75, %s76
      %p80 = pneg %p74
      %p81 = scmp.eq.s32.totalorder %s27, 1
      %p82 = por %p80, %p81
      %p83 = scmp.ne.s32.totalorder %s75, %s78
      %p84 = scmp.eq.s32.totalorder %s27, 0
      %p85 = por %p83, %p84
      %p86 = scmp.ne.s32.totalorder %s75, %s78
      %p87 = scmp.eq.s32.totalorder %s32, 1
      %p88 = por %p86, %p87
      %p89 = scmp.ne.s32.totalorder %s78, %s79
      %p90 = scmp.eq.s32.totalorder %s32, 0
      %p91 = por %p89, %p90
      %p92 = scmp.ne.s32.totalorder %s78, %s79
      %p93 = scmp.eq.s32.totalorder %s33, 1
      %p94 = por %p92, %p93
      %p96 = scmp.ne.s32.totalorder %s79, %s95
      %p97 = scmp.eq.s32.totalorder %s33, 0
      %p98 = por %p96, %p97
      %s99 = ssub.s32 %s35, %s42
      %p100 = scmp.eq.s32.totalorder %s99, 0
      %s102 = sadd.s32 %s101, 1
      %s103 = scalar_select %p100, %s101, %s102
      %p106 = pneg %p100
      %p107 = scmp.eq.s32.totalorder %s27, 1
      %p108 = por %p106, %p107
      %p109 = scmp.ne.s32.totalorder %s101, %s104
      %p110 = scmp.eq.s32.totalorder %s27, 0
      %p111 = por %p109, %p110
      %p112 = scmp.ne.s32.totalorder %s101, %s104
      %p113 = scmp.eq.s32.totalorder %s32, 1
      %p114 = por %p112, %p113
      %p115 = scmp.ne.s32.totalorder %s104, %s105
      %p116 = scmp.eq.s32.totalorder %s32, 0
      %p117 = por %p115, %p116
      %p118 = scmp.ne.s32.totalorder %s104, %s105
      %p119 = scmp.eq.s32.totalorder %s33, 1
      %p120 = por %p118, %p119
      %p122 = scmp.ne.s32.totalorder %s105, %s121
      %p123 = scmp.eq.s32.totalorder %s33, 0
      %p124 = por %p122, %p123
      %s125 = ssub.s32 %s35, %s42
      %p126 = scmp.eq.s32.totalorder %s125, 0
      %s128 = sadd.s32 %s127, 1
      %s129 = scalar_select %p126, %s127, %s128
      %p132 = pneg %p126
      %p133 = scmp.eq.s32.totalorder %s27, 1
      %p134 = por %p132, %p133
      %p135 = scmp.ne.s32.totalorder %s127, %s130
      %p136 = scmp.eq.s32.totalorder %s27, 0
      %p137 = por %p135, %p136
      %p138 = scmp.ne.s32.totalorder %s127, %s130
      %p139 = scmp.eq.s32.totalorder %s32, 1
      %p140 = por %p138, %p139
      %p141 = scmp.ne.s32.totalorder %s130, %s131
      %p142 = scmp.eq.s32.totalorder %s32, 0
      %p143 = por %p141, %p142
      %p144 = scmp.ne.s32.totalorder %s130, %s131
      %p145 = scmp.eq.s32.totalorder %s33, 1
      %p146 = por %p144, %p145
      %p148 = scmp.ne.s32.totalorder %s131, %s147
      %p149 = scmp.eq.s32.totalorder %s33, 0
      %p150 = por %p148, %p149
      %s151 = ssub.s32 %s35, %s42
      %p152 = scmp.eq.s32.totalorder %s151, 0
      %s154 = sadd.s32 %s153, 1
      %s155 = scalar_select %p152, %s153, %s154
      %p158 = pneg %p152
      %p159 = scmp.eq.s32.totalorder %s27, 1
      %p160 = por %p158, %p159
      %p161 = scmp.ne.s32.totalorder %s153, %s156
      %p162 = scmp.eq.s32.totalorder %s27, 0
      %p163 = por %p161, %p162
      %p164 = scmp.ne.s32.totalorder %s153, %s156
      %p165 = scmp.eq.s32.totalorder %s32, 1
      %p166 = por %p164, %p165
      %p167 = scmp.ne.s32.totalorder %s156, %s157
      %p168 = scmp.eq.s32.totalorder %s32, 0
      %p169 = por %p167, %p168
      %p170 = scmp.ne.s32.totalorder %s156, %s157
      %p171 = scmp.eq.s32.totalorder %s33, 1
      %p172 = por %p170, %p171
      %p174 = scmp.ne.s32.totalorder %s157, %s173
      %p175 = scmp.eq.s32.totalorder %s33, 0
      %p176 = por %p174, %p175
      %s177 = ssub.s32 %s35, %s42
      %p178 = scmp.eq.s32.totalorder %s177, 0
      %s180 = sadd.s32 %s179, 1
      %s181 = scalar_select %p178, %s179, %s180
      %p184 = pneg %p178
      %p185 = scmp.eq.s32.totalorder %s27, 1
      %p186 = por %p184, %p185
      %p187 = scmp.ne.s32.totalorder %s179, %s182
      %p188 = scmp.eq.s32.totalorder %s27, 0
      %p189 = por %p187, %p188
      %p190 = scmp.ne.s32.totalorder %s179, %s182
      %p191 = scmp.eq.s32.totalorder %s32, 1
      %p192 = por %p190, %p191
      %p193 = scmp.ne.s32.totalorder %s182, %s183
      %p194 = scmp.eq.s32.totalorder %s32, 0
      %p195 = por %p193, %p194
      %p196 = scmp.ne.s32.totalorder %s182, %s183
      %p197 = scmp.eq.s32.totalorder %s33, 1
      %p198 = por %p196, %p197
      %p200 = scmp.ne.s32.totalorder %s183, %s199
      %p201 = scmp.eq.s32.totalorder %s33, 0
      %p202 = por %p200, %p201
      %s203 = ssub.s32 %s35, %s42
      %p204 = scmp.eq.s32.totalorder %s203, 0
      %s206 = sadd.s32 %s205, 1
      %s207 = scalar_select %p204, %s205, %s206
      %p210 = pneg %p204
      %p211 = scmp.eq.s32.totalorder %s27, 1
      %p212 = por %p210, %p211
      %p213 = scmp.ne.s32.totalorder %s205, %s208
      %p214 = scmp.eq.s32.totalorder %s27, 0
      %p215 = por %p213, %p214
      %p216 = scmp.ne.s32.totalorder %s205, %s208
      %p217 = scmp.eq.s32.totalorder %s32, 1
      %p218 = por %p216, %p217
      %p219 = scmp.ne.s32.totalorder %s208, %s209
      %p220 = scmp.eq.s32.totalorder %s32, 0
      %p221 = por %p219, %p220
      %p222 = scmp.ne.s32.totalorder %s208, %s209
      %p223 = scmp.eq.s32.totalorder %s33, 1
      %p224 = por %p222, %p223
      %p226 = scmp.ne.s32.totalorder %s209, %s225
      %p227 = scmp.eq.s32.totalorder %s33, 0
      %p228 = por %p226, %p227
      %s229 = ssub.s32 %s35, %s42
      %p230 = scmp.eq.s32.totalorder %s229, 0
      %s232 = sadd.s32 %s231, 1
      %s233 = scalar_select %p230, %s231, %s232
      %p236 = pneg %p230
      %p237 = scmp.eq.s32.totalorder %s27, 1
      %p238 = por %p236, %p237
      %p239 = scmp.ne.s32.totalorder %s231, %s234
      %p240 = scmp.eq.s32.totalorder %s27, 0
      %p241 = por %p239, %p240
      %p242 = scmp.ne.s32.totalorder %s231, %s234
      %p243 = scmp.eq.s32.totalorder %s32, 1
      %p244 = por %p242, %p243
      %p245 = scmp.ne.s32.totalorder %s234, %s235
      %p246 = scmp.eq.s32.totalorder %s32, 0
      %p247 = por %p245, %p246
      %p248 = scmp.ne.s32.totalorder %s234, %s235
      %p249 = scmp.eq.s32.totalorder %s33, 1
      %p250 = por %p248, %p249
      %p252 = scmp.ne.s32.totalorder %s235, %s251
      %p253 = scmp.eq.s32.totalorder %s33, 0
      %p254 = por %p252, %p253
      %s255 = ssub.s32 %s35, %s42
      %p256 = scmp.eq.s32.totalorder %s255, 0
      %s258 = sadd.s32 %s257, 1
      %s259 = scalar_select %p256, %s257, %s258
      %p262 = pneg %p256
      %p263 = scmp.eq.s32.totalorder %s27, 1
      %p264 = por %p262, %p263
      %p265 = scmp.ne.s32.totalorder %s257, %s260
      %p266 = scmp.eq.s32.totalorder %s27, 0
      %p267 = por %p265, %p266
      %p268 = scmp.ne.s32.totalorder %s257, %s260
      %p269 = scmp.eq.s32.totalorder %s32, 1
      %p270 = por %p268, %p269
      %p271 = scmp.ne.s32.totalorder %s260, %s261
      %p272 = scmp.eq.s32.totalorder %s32, 0
      %p273 = por %p271, %p272
      %p274 = scmp.ne.s32.totalorder %s260, %s261
      %p275 = scmp.eq.s32.totalorder %s33, 1
      %p276 = por %p274, %p275
      %p278 = scmp.ne.s32.totalorder %s261, %s277
      %p279 = scmp.eq.s32.totalorder %s33, 0
      %p280 = por %p278, %p279
      %s281 = ssub.s32 %s35, %s42
      %p282 = scmp.eq.s32.totalorder %s281, 0
      %s284 = sadd.s32 %s283, 1
      %s285 = scalar_select %p282, %s283, %s284
      %p288 = pneg %p282
      %p289 = scmp.eq.s32.totalorder %s27, 1
      %p290 = por %p288, %p289
      %p291 = scmp.ne.s32.totalorder %s283, %s286
      %p292 = scmp.eq.s32.totalorder %s27, 0
      %p293 = por %p291, %p292
      %p294 = scmp.ne.s32.totalorder %s283, %s286
      %p295 = scmp.eq.s32.totalorder %s32, 1
      %p296 = por %p294, %p295
      %p297 = scmp.ne.s32.totalorder %s286, %s287
      %p298 = scmp.eq.s32.totalorder %s32, 0
      %p299 = por %p297, %p298
      %p300 = scmp.ne.s32.totalorder %s286, %s287
      %p301 = scmp.eq.s32.totalorder %s33, 1
      %p302 = por %p300, %p301
      %p304 = scmp.ne.s32.totalorder %s287, %s303
      %p305 = scmp.eq.s32.totalorder %s33, 0
      %p306 = por %p304, %p305
      %s307 = ssub.s32 %s35, %s42
      %p308 = scmp.eq.s32.totalorder %s307, 0
      %s310 = sadd.s32 %s309, 1
      %s311 = scalar_select %p308, %s309, %s310
      %p314 = pneg %p308
      %p315 = scmp.eq.s32.totalorder %s27, 1
      %p316 = por %p314, %p315
      %p317 = scmp.ne.s32.totalorder %s309, %s312
      %p318 = scmp.eq.s32.totalorder %s27, 0
      %p319 = por %p317, %p318
      %p320 = scmp.ne.s32.totalorder %s309, %s312
      %p321 = scmp.eq.s32.totalorder %s32, 1
      %p322 = por %p320, %p321
      %p323 = scmp.ne.s32.totalorder %s312, %s313
      %p324 = scmp.eq.s32.totalorder %s32, 0
      %p325 = por %p323, %p324
      %p326 = scmp.ne.s32.totalorder %s312, %s313
      %p327 = scmp.eq.s32.totalorder %s33, 1
      %p328 = por %p326, %p327
      %p330 = scmp.ne.s32.totalorder %s313, %s329
      %p331 = scmp.eq.s32.totalorder %s33, 0
      %p332 = por %p330, %p331
      %s333 = ssub.s32 %s35, %s42
      %p334 = scmp.eq.s32.totalorder %s333, 0
      %s336 = sadd.s32 %s335, 1
      %s337 = scalar_select %p334, %s335, %s336
      %p340 = pneg %p334
      %p341 = scmp.eq.s32.totalorder %s27, 1
      %p342 = por %p340, %p341
      %p343 = scmp.ne.s32.totalorder %s335, %s338
      %p344 = scmp.eq.s32.totalorder %s27, 0
      %p345 = por %p343, %p344
      %p346 = scmp.ne.s32.totalorder %s335, %s338
      %p347 = scmp.eq.s32.totalorder %s32, 1
      %p348 = por %p346, %p347
      %p349 = scmp.ne.s32.totalorder %s338, %s339
      %p350 = scmp.eq.s32.totalorder %s32, 0
      %p351 = por %p349, %p350
      %p352 = scmp.ne.s32.totalorder %s338, %s339
      %p353 = scmp.eq.s32.totalorder %s33, 1
      %p354 = por %p352, %p353
      %p356 = scmp.ne.s32.totalorder %s339, %s355
      %p357 = scmp.eq.s32.totalorder %s33, 0
      %p358 = por %p356, %p357
      %s359 = ssub.s32 %s35, %s42
      %p360 = scmp.eq.s32.totalorder %s359, 0
      %s362 = sadd.s32 %s361, 1
      %s363 = scalar_select %p360, %s361, %s362
      %p366 = pneg %p360
      %p367 = scmp.eq.s32.totalorder %s27, 1
      %p368 = por %p366, %p367
      %p369 = scmp.ne.s32.totalorder %s361, %s364
      %p370 = scmp.eq.s32.totalorder %s27, 0
      %p371 = por %p369, %p370
      %p372 = scmp.ne.s32.totalorder %s361, %s364
      %p373 = scmp.eq.s32.totalorder %s32, 1
      %p374 = por %p372, %p373
      %p375 = scmp.ne.s32.totalorder %s364, %s365
      %p376 = scmp.eq.s32.totalorder %s32, 0
      %p377 = por %p375, %p376
      %p378 = scmp.ne.s32.totalorder %s364, %s365
      %p379 = scmp.eq.s32.totalorder %s33, 1
      %p380 = por %p378, %p379
      %p382 = scmp.ne.s32.totalorder %s365, %s381
      %p383 = scmp.eq.s32.totalorder %s33, 0
      %p384 = por %p382, %p383
      %s385 = ssub.s32 %s34, %s46
      %p386 = scmp.eq.s32.totalorder %s385, 0
      %s388 = sadd.s32 %s387, 1
      %s389 = scalar_select %p386, %s387, %s388
      %p392 = pneg %p386
      %p393 = scmp.eq.s32.totalorder %s27, 1
      %p394 = por %p392, %p393
      %p395 = scmp.ne.s32.totalorder %s387, %s390
      %p396 = scmp.eq.s32.totalorder %s27, 0
      %p397 = por %p395, %p396
      %p398 = scmp.ne.s32.totalorder %s387, %s390
      %p399 = scmp.eq.s32.totalorder %s32, 1
      %p400 = por %p398, %p399
      %p401 = scmp.ne.s32.totalorder %s390, %s391
      %p402 = scmp.eq.s32.totalorder %s32, 0
      %p403 = por %p401, %p402
      %p404 = scmp.ne.s32.totalorder %s390, %s391
      %p405 = scmp.eq.s32.totalorder %s33, 1
      %p406 = por %p404, %p405
      %p408 = scmp.ne.s32.totalorder %s391, %s407
      %p409 = scmp.eq.s32.totalorder %s33, 0
      %p410 = por %p408, %p409
      %p411 = scmp.le.s32.totalorder 1, %s27
      %p412 = scmp.lt.s32.totalorder %s27, 3
      %p413 = pnand %p411, %p412
      %p414 = pneg %p413
      // Predicated region
      $region9: #{tpu_custom_call.1} parent=5 // pred_check
        _
      $region10: #{tpu_custom_call.1} parent=5 // pred_check_branch
        %416 = sbr.rel (%p413) target = $region12
      $region11: #{tpu_custom_call.1} parent=5 // pred_region
        %s417 = ssub.s32 %s27, 1
        // Predicated region
        $region13: #{tpu_custom_call.1} parent=11 // pred_check
          %p418 = pneg %p65
        $region14: #{tpu_custom_call.1} parent=11 // pred_check_branch
          %420 = sbr.rel (%p418) target = $region16
        $region15: #{tpu_custom_call.1} parent=11 // pred_region
          %s421 = smul.u32 4, %s36
          %s423 = ssub.s32 1024, 1024
          %424 = vsyncadd [#allocation5], %s423
          %s425 = smul.addr %s421, 2
          %s426 = smul.addr %s425, 128
          %s427 = scalar_lea.hbm %s0, %s426
          %s428 = sshll.u32 [#allocation4], 4
          %s429 = int_to_ptr.vmem [resolvable:$true] %s428
          %434 = dma.hbm_to_vmem [thread:$0]  %s427, 1024, %s429, [#allocation5], 128, 128, 8
        $region16: #{tpu_custom_call.1} parent=11 // pred_fallthru
          _
      $region12: #{tpu_custom_call.1} parent=5 // pred_fallthru
        _
      %p435 = scmp.lt.s32.totalorder %s27, 2
      // Predicated region
      $region17: #{tpu_custom_call.1} parent=5 // pred_check
        %p436 = pneg %p435
      $region18: #{tpu_custom_call.1} parent=5 // pred_check_branch
        %438 = sbr.rel (%p436) target = $region20
      $region19: #{tpu_custom_call.1} parent=5 // pred_region
        // Predicated region
        $region21: #{tpu_custom_call.1} parent=19 // pred_check
          %p439 = pneg %p85
        $region22: #{tpu_custom_call.1} parent=19 // pred_check_branch
          %441 = sbr.rel (%p439) target = $region24
        $region23: #{tpu_custom_call.1} parent=19 // pred_region
          %s442 = sand.u32 %s27, 1
          %s443 = scalar_lea.sflag [#allocation8], %s442
          %s444 = sand.u32 %s75, 1
          %s445 = smul.addr %s444, 192
          %s446 = scalar_lea.vmem [#allocation7], %s445
          %s448 = ssub.s32 3072, 3072
          %449 = vsyncadd %s443, %s448
          %s450 = smul.addr %s35, 48
          %s451 = smul.addr %s450, 64
          %s452 = scalar_lea.hbm %s1, %s451
          %s453 = sshll.u32 %s446, 4
          %s454 = int_to_ptr.vmem [resolvable:$true] %s453
          %459 = dma.hbm_to_vmem [thread:$0]  %s452, 3072, %s454, %s443, 192, 192, 12
        $region24: #{tpu_custom_call.1} parent=19 // pred_fallthru
          _
        // Predicated region
        $region25: #{tpu_custom_call.1} parent=19 // pred_check
          %p460 = pneg %p111
        $region26: #{tpu_custom_call.1} parent=19 // pred_check_branch
          %462 = sbr.rel (%p460) target = $region28
        $region27: #{tpu_custom_call.1} parent=19 // pred_region
          %p463 = scmp.lt.s32.totalorder %s35, 1
          %s464 = scalar_select %p463, %s35, 1
          %s465 = smul.addr %s464, 3
          %s466 = scalar_lea.vmem %s2, %s465
        $region28: #{tpu_custom_call.1} parent=19 // pred_fallthru
          _
        // Predicated region
        $region29: #{tpu_custom_call.1} parent=19 // pred_check
          %p467 = pneg %p137
        $region30: #{tpu_custom_call.1} parent=19 // pred_check_branch
          %469 = sbr.rel (%p467) target = $region32
        $region31: #{tpu_custom_call.1} parent=19 // pred_region
          %s470 = sand.u32 %s27, 1
          %s471 = scalar_lea.sflag [#allocation8], %s470
          %s472 = sand.u32 %s127, 1
          %s473 = smul.addr %s472, 64
          %s474 = scalar_lea.vmem [#allocation9], %s473
          %s476 = ssub.s32 1024, 1024
          %477 = vsyncadd %s471, %s476
          %s478 = smul.addr %s35, 16
          %s479 = smul.addr %s478, 64
          %s480 = scalar_lea.hbm %s3, %s479
          %s481 = sshll.u32 %s474, 4
          %s482 = int_to_ptr.vmem [resolvable:$true] %s481
          %487 = dma.hbm_to_vmem [thread:$0]  %s480, 1024, %s482, %s471, 64, 64, 4
        $region32: #{tpu_custom_call.1} parent=19 // pred_fallthru
          _
        // Predicated region
        $region33: #{tpu_custom_call.1} parent=19 // pred_check
          %p488 = pneg %p163
        $region34: #{tpu_custom_call.1} parent=19 // pred_check_branch
          %490 = sbr.rel (%p488) target = $region36
        $region35: #{tpu_custom_call.1} parent=19 // pred_region
          %p491 = scmp.lt.s32.totalorder %s35, 1
          %s492 = scalar_select %p491, %s35, 1
          %s493 = scalar_lea.vmem %s4, %s492
        $region36: #{tpu_custom_call.1} parent=19 // pred_fallthru
          _
        // Predicated region
        $region37: #{tpu_custom_call.1} parent=19 // pred_check
          %p494 = pneg %p189
        $region38: #{tpu_custom_call.1} parent=19 // pred_check_branch
          %496 = sbr.rel (%p494) target = $region40
        $region39: #{tpu_custom_call.1} parent=19 // pred_region
          %p497 = scmp.lt.s32.totalorder %s35, 1
          %s498 = scalar_select %p497, %s35, 1
          %s499 = scalar_lea.vmem %s5, %s498
        $region40: #{tpu_custom_call.1} parent=19 // pred_fallthru
          _
        // Predicated region
        $region41: #{tpu_custom_call.1} parent=19 // pred_check
          %p500 = pneg %p215
        $region42: #{tpu_custom_call.1} parent=19 // pred_check_branch
          %502 = sbr.rel (%p500) target = $region44
        $region43: #{tpu_custom_call.1} parent=19 // pred_region
          %p503 = scmp.lt.s32.totalorder %s35, 1
          %s504 = scalar_select %p503, %s35, 1
          %s505 = scalar_lea.vmem %s6, %s504
        $region44: #{tpu_custom_call.1} parent=19 // pred_fallthru
          _
        // Predicated region
        $region45: #{tpu_custom_call.1} parent=19 // pred_check
          %p506 = pneg %p241
        $region46: #{tpu_custom_call.1} parent=19 // pred_check_branch
          %508 = sbr.rel (%p506) target = $region48
        $region47: #{tpu_custom_call.1} parent=19 // pred_region
          %p509 = scmp.lt.s32.totalorder %s35, 1
          %s510 = scalar_select %p509, %s35, 1
          %s511 = scalar_lea.vmem %s7, %s510
        $region48: #{tpu_custom_call.1} parent=19 // pred_fallthru
          _
        // Predicated region
        $region49: #{tpu_custom_call.1} parent=19 // pred_check
          %p512 = pneg %p267
        $region50: #{tpu_custom_call.1} parent=19 // pred_check_branch
          %514 = sbr.rel (%p512) target = $region52
        $region51: #{tpu_custom_call.1} parent=19 // pred_region
          %p515 = scmp.lt.s32.totalorder %s35, 1
          %s516 = scalar_select %p515, %s35, 1
          %s517 = scalar_lea.vmem %s8, %s516
        $region52: #{tpu_custom_call.1} parent=19 // pred_fallthru
          _
        // Predicated region
        $region53: #{tpu_custom_call.1} parent=19 // pred_check
          %p518 = pneg %p293
        $region54: #{tpu_custom_call.1} parent=19 // pred_check_branch
          %520 = sbr.rel (%p518) target = $region56
        $region55: #{tpu_custom_call.1} parent=19 // pred_region
          %s521 = sand.u32 %s27, 1
          %s522 = scalar_lea.sflag [#allocation11], %s521
          %s523 = sand.u32 %s283, 1
          %s524 = smul.addr %s523, 128
          %s525 = scalar_lea.vmem [#allocation10], %s524
          %s527 = ssub.s32 2048, 2048
          %528 = vsyncadd %s522, %s527
          %s529 = smul.addr %s35, 32
          %s530 = smul.addr %s529, 64
          %s531 = scalar_lea.hbm %s9, %s530
          %s532 = sshll.u32 %s525, 4
          %s533 = int_to_ptr.vmem [resolvable:$true] %s532
          %538 = dma.hbm_to_vmem [thread:$0]  %s531, 2048, %s533, %s522, 128, 128, 8
        $region56: #{tpu_custom_call.1} parent=19 // pred_fallthru
          _
        // Predicated region
        $region57: #{tpu_custom_call.1} parent=19 // pred_check
          %p539 = pneg %p319
        $region58: #{tpu_custom_call.1} parent=19 // pred_check_branch
          %541 = sbr.rel (%p539) target = $region60
        $region59: #{tpu_custom_call.1} parent=19 // pred_region
          %p542 = scmp.lt.s32.totalorder %s35, 1
          %s543 = scalar_select %p542, %s35, 1
          %s544 = smul.addr %s543, 2
          %s545 = scalar_lea.vmem %s10, %s544
        $region60: #{tpu_custom_call.1} parent=19 // pred_fallthru
          _
        // Predicated region
        $region61: #{tpu_custom_call.1} parent=19 // pred_check
          %p546 = pneg %p345
        $region62: #{tpu_custom_call.1} parent=19 // pred_check_branch
          %548 = sbr.rel (%p546) target = $region64
        $region63: #{tpu_custom_call.1} parent=19 // pred_region
          %s549 = sand.u32 %s27, 1
          %s550 = scalar_lea.sflag [#allocation11], %s549
          %s551 = sand.u32 %s335, 1
          %s552 = smul.addr %s551, 128
          %s553 = scalar_lea.vmem [#allocation12], %s552
          %s555 = ssub.s32 2048, 2048
          %556 = vsyncadd %s550, %s555
          %s557 = smul.addr %s35, 32
          %s558 = smul.addr %s557, 64
          %s559 = scalar_lea.hbm %s11, %s558
          %s560 = sshll.u32 %s553, 4
          %s561 = int_to_ptr.vmem [resolvable:$true] %s560
          %566 = dma.hbm_to_vmem [thread:$0]  %s559, 2048, %s561, %s550, 64, 64, 4
        $region64: #{tpu_custom_call.1} parent=19 // pred_fallthru
          _
        // Predicated region
        $region65: #{tpu_custom_call.1} parent=19 // pred_check
          %p567 = pneg %p371
        $region66: #{tpu_custom_call.1} parent=19 // pred_check_branch
          %569 = sbr.rel (%p567) target = $region68
        $region67: #{tpu_custom_call.1} parent=19 // pred_region
          %p570 = scmp.lt.s32.totalorder %s35, 1
          %s571 = scalar_select %p570, %s35, 1
          %s572 = scalar_lea.vmem %s12, %s571
        $region68: #{tpu_custom_call.1} parent=19 // pred_fallthru
          _
      $region20: #{tpu_custom_call.1} parent=5 // pred_fallthru
        _
      %p573 = scmp.le.s32.totalorder 1, %s27
      %p574 = scmp.lt.s32.totalorder %s27, 3
      %p575 = pnand %p573, %p574
      %p576 = pneg %p575
      // Predicated region
      $region69: #{tpu_custom_call.1} parent=5 // pred_check
        _
      $region70: #{tpu_custom_call.1} parent=5 // pred_check_branch
        %578 = sbr.rel (%p575) target = $region72
      $region71: #{tpu_custom_call.1} parent=5 // pred_region
        %s579 = ssub.s32 %s27, 1
        // Predicated region
        $region73: #{tpu_custom_call.1} parent=71 // pred_check
          %p580 = pneg %p65
        $region74: #{tpu_custom_call.1} parent=71 // pred_check_branch
          %582 = sbr.rel (%p580) target = $region76
        $region75: #{tpu_custom_call.1} parent=71 // pred_region
          %583 = dma.done [#allocation5], 1024
        $region76: #{tpu_custom_call.1} parent=71 // pred_fallthru
          _
        %s584 = sand.u32 %s32, 1
        %s585 = scalar_lea.sflag [#allocation8], %s584
        %s586 = sand.u32 %s78, 1
        %s587 = smul.addr %s586, 192
        %s588 = scalar_lea.vmem [#allocation7], %s587
        // Predicated region
        $region77: #{tpu_custom_call.1} parent=71 // pred_check
          %p589 = pneg %p91
        $region78: #{tpu_custom_call.1} parent=71 // pred_check_branch
          %591 = sbr.rel (%p589) target = $region80
        $region79: #{tpu_custom_call.1} parent=71 // pred_region
          %592 = dma.done %s585, 3072
        $region80: #{tpu_custom_call.1} parent=71 // pred_fallthru
          _
        %s593 = sand.u32 %s32, 1
        %s594 = scalar_lea.sflag [#allocation8], %s593
        %s595 = sand.u32 %s130, 1
        %s596 = smul.addr %s595, 64
        %s597 = scalar_lea.vmem [#allocation9], %s596
        // Predicated region
        $region81: #{tpu_custom_call.1} parent=71 // pred_check
          %p598 = pneg %p143
        $region82: #{tpu_custom_call.1} parent=71 // pred_check_branch
          %600 = sbr.rel (%p598) target = $region84
        $region83: #{tpu_custom_call.1} parent=71 // pred_region
          %601 = dma.done %s594, 1024
        $region84: #{tpu_custom_call.1} parent=71 // pred_fallthru
          _
        %s602 = sand.u32 %s32, 1
        %s603 = scalar_lea.sflag [#allocation11], %s602
        %s604 = sand.u32 %s286, 1
        %s605 = smul.addr %s604, 128
        %s606 = scalar_lea.vmem [#allocation10], %s605
        // Predicated region
        $region85: #{tpu_custom_call.1} parent=71 // pred_check
          %p607 = pneg %p299
        $region86: #{tpu_custom_call.1} parent=71 // pred_check_branch
          %609 = sbr.rel (%p607) target = $region88
        $region87: #{tpu_custom_call.1} parent=71 // pred_region
          %610 = dma.done %s603, 2048
        $region88: #{tpu_custom_call.1} parent=71 // pred_fallthru
          _
        %s611 = sand.u32 %s32, 1
        %s612 = scalar_lea.sflag [#allocation11], %s611
        %s613 = sand.u32 %s338, 1
        %s614 = smul.addr %s613, 128
        %s615 = scalar_lea.vmem [#allocation12], %s614
        // Predicated region
        $region89: #{tpu_custom_call.1} parent=71 // pred_check
          %p616 = pneg %p351
        $region90: #{tpu_custom_call.1} parent=71 // pred_check_branch
          %618 = sbr.rel (%p616) target = $region92
        $region91: #{tpu_custom_call.1} parent=71 // pred_region
          %619 = dma.done %s612, 2048
        $region92: #{tpu_custom_call.1} parent=71 // pred_fallthru
          _
        %p620 = pneg %p65
        %p621 = pneg %p62
        %s622 = sand.u32 %s32, 1
        %s623 = scalar_lea.sflag [#allocation8], %s622
        %s624 = sand.u32 %s78, 1
        %s625 = smul.addr %s624, 192
        %s626 = scalar_lea.vmem [#allocation7], %s625
        %p627 = pneg %p91
        %p628 = pneg %p88
        %p629 = scmp.lt.s32.totalorder %s37, 1
        %s630 = scalar_select %p629, %s37, 1
        %s631 = smul.addr %s630, 3
        %s632 = scalar_lea.vmem %s2, %s631
        %p633 = pneg %p117
        %p634 = pneg %p114
        %s635 = sand.u32 %s32, 1
        %s636 = scalar_lea.sflag [#allocation8], %s635
        %s637 = sand.u32 %s130, 1
        %s638 = smul.addr %s637, 64
        %s639 = scalar_lea.vmem [#allocation9], %s638
        %p640 = pneg %p143
        %p641 = pneg %p140
        %p642 = scmp.lt.s32.totalorder %s37, 1
        %s643 = scalar_select %p642, %s37, 1
        %s644 = scalar_lea.vmem %s4, %s643
        %p645 = pneg %p169
        %p646 = pneg %p166
        %p647 = scmp.lt.s32.totalorder %s37, 1
        %s648 = scalar_select %p647, %s37, 1
        %s649 = scalar_lea.vmem %s5, %s648
        %p650 = pneg %p195
        %p651 = pneg %p192
        %p652 = scmp.lt.s32.totalorder %s37, 1
        %s653 = scalar_select %p652, %s37, 1
        %s654 = scalar_lea.vmem %s6, %s653
        %p655 = pneg %p221
        %p656 = pneg %p218
        %p657 = scmp.lt.s32.totalorder %s37, 1
        %s658 = scalar_select %p657, %s37, 1
        %s659 = scalar_lea.vmem %s7, %s658
        %p660 = pneg %p247
        %p661 = pneg %p244
        %p662 = scmp.lt.s32.totalorder %s37, 1
        %s663 = scalar_select %p662, %s37, 1
        %s664 = scalar_lea.vmem %s8, %s663
        %p665 = pneg %p273
        %p666 = pneg %p270
        %s667 = sand.u32 %s32, 1
        %s668 = scalar_lea.sflag [#allocation11], %s667
        %s669 = sand.u32 %s286, 1
        %s670 = smul.addr %s669, 128
        %s671 = scalar_lea.vmem [#allocation10], %s670
        %p672 = pneg %p299
        %p673 = pneg %p296
        %p674 = scmp.lt.s32.totalorder %s37, 1
        %s675 = scalar_select %p674, %s37, 1
        %s676 = smul.addr %s675, 2
        %s677 = scalar_lea.vmem %s10, %s676
        %p678 = pneg %p325
        %p679 = pneg %p322
        %s680 = sand.u32 %s32, 1
        %s681 = scalar_lea.sflag [#allocation11], %s680
        %s682 = sand.u32 %s338, 1
        %s683 = smul.addr %s682, 128
        %s684 = scalar_lea.vmem [#allocation12], %s683
        %p685 = pneg %p351
        %p686 = pneg %p348
        %p687 = scmp.lt.s32.totalorder %s37, 1
        %s688 = scalar_select %p687, %s37, 1
        %s689 = scalar_lea.vmem %s12, %s688
        %p690 = pneg %p377
        %p691 = pneg %p374
        %p692 = pneg %p403
        %p693 = pneg %p400
        %s694 = smul.u32 4, %s36
        %p695 = scmp.lt.s32.totalorder %s37, 1
        %s696 = scalar_select %p695, %s37, 1
        %s697 = smul.addr %s696, 3
        %s698 = scalar_lea.vmem %s2, %s697
        %p699 = scmp.lt.s32.totalorder %s37, 1
        %s700 = scalar_select %p699, %s37, 1
        %s701 = scalar_lea.vmem %s4, %s700
        %p702 = scmp.lt.s32.totalorder %s37, 1
        %s703 = scalar_select %p702, %s37, 1
        %s704 = scalar_lea.vmem %s5, %s703
        %p705 = scmp.lt.s32.totalorder %s37, 1
        %s706 = scalar_select %p705, %s37, 1
        %s707 = scalar_lea.vmem %s6, %s706
        %p708 = scmp.lt.s32.totalorder %s37, 1
        %s709 = scalar_select %p708, %s37, 1
        %s710 = scalar_lea.vmem %s7, %s709
        %p711 = scmp.lt.s32.totalorder %s37, 1
        %s712 = scalar_select %p711, %s37, 1
        %s713 = scalar_lea.vmem %s8, %s712
        %p714 = scmp.lt.s32.totalorder %s37, 1
        %s715 = scalar_select %p714, %s37, 1
        %s716 = smul.addr %s715, 2
        %s717 = scalar_lea.vmem %s10, %s716
        %p718 = scmp.lt.s32.totalorder %s37, 1
        %s719 = scalar_select %p718, %s37, 1
        %s720 = scalar_lea.vmem %s12, %s719
        %s721 = smul.u32 4, %s36
        %p723 = scmp.eq.s32.totalorder %s37, 0
        // Predicated region
        $region93: #{tpu_custom_call.1} parent=71 // pred_check
          %p724 = pneg %p723
        $region94: #{tpu_custom_call.1} parent=71 // pred_check_branch
          %726 = sbr.rel (%p724) target = $region96
        $region95: #{tpu_custom_call.1} parent=71 // pred_region
          %v727 = vld [vmem:[#allocation4] sm:$0xff]
          %v728 = vld [vmem:[#allocation4 + $0x8] sm:$0xff]
          %v729 = vld [vmem:[#allocation4 + $0x10] sm:$0xff]
          %v730 = vld [vmem:[#allocation4 + $0x18] sm:$0xff]
          %v731 = vld [vmem:[#allocation4 + $0x20] sm:$0xff]
          %v732 = vld [vmem:[#allocation4 + $0x28] sm:$0xff]
          %v733 = vld [vmem:[#allocation4 + $0x30] sm:$0xff]
          %v734 = vld [vmem:[#allocation4 + $0x38] sm:$0xff]
          %735 = vst [vmem:[#allocation2] sm:$0xff] %v727
          %736 = vst [vmem:[#allocation2 + $0x8] sm:$0xff] %v728
          %737 = vst [vmem:[#allocation2 + $0x10] sm:$0xff] %v729
          %738 = vst [vmem:[#allocation2 + $0x18] sm:$0xff] %v730
          %739 = vst [vmem:[#allocation2 + $0x20] sm:$0xff] %v731
          %740 = vst [vmem:[#allocation2 + $0x28] sm:$0xff] %v732
          %741 = vst [vmem:[#allocation2 + $0x30] sm:$0xff] %v733
          %742 = vst [vmem:[#allocation2 + $0x38] sm:$0xff] %v734
        $region96: #{tpu_custom_call.1} parent=71 // pred_fallthru
          _
        %v743 = vld [vmem:[#allocation2] sm:$0xff]
        %v744 = vld [vmem:[#allocation2 + $0x8] sm:$0xff]
        %v745 = vld [vmem:[#allocation2 + $0x10] sm:$0xff]
        %v746 = vld [vmem:[#allocation2 + $0x18] sm:$0xff]
        %v747 = vld [vmem:[#allocation2 + $0x20] sm:$0xff]
        %v748 = vld [vmem:[#allocation2 + $0x28] sm:$0xff]
        %v749 = vld [vmem:[#allocation2 + $0x30] sm:$0xff]
        %v750 = vld [vmem:[#allocation2 + $0x38] sm:$0xff]
        %v751 = vld [vmem:[%s698] sm:$0x7]
        %v752 = vld [vmem:[%s701] sm:$0x1]
        %v753 = vld [vmem:[%s717] sm:$0x3]
        %v754 = vld [vmem:[%s720] sm:$0x1]
        %v755 = vld [vmem:[%s704] sm:$0x1]
        %v756 = vld [vmem:[%s707] sm:$0x1]
        %v757 = vld [vmem:[%s710] sm:$0x1]
        %v758 = vld [vmem:[%s713] sm:$0x1]
        %v759 = vpack.c.bf16 %v744, %v743
        %v760 = vpack.c.bf16 %v746, %v745
        %v761 = vpack.c.bf16 %v748, %v747
        %v762 = vpack.c.bf16 %v750, %v749
        %v763 = vld [vmem:[%s588] sm:$0xff]
        %v764 = vld [vmem:[%s588 + $0x8] sm:$0xf]
        %v765 = vld [vmem:[%s588 + $0xc] sm:$0xff]
        %v766 = vld [vmem:[%s588 + $0x14] sm:$0xf]
        %v767 = vld [vmem:[%s588 + $0x18] sm:$0xff]
        %v768 = vld [vmem:[%s588 + $0x20] sm:$0xf]
        %v769 = vld [vmem:[%s588 + $0x24] sm:$0xff]
        %v770 = vld [vmem:[%s588 + $0x2c] sm:$0xf]
        %v771 = vld [vmem:[%s588 + $0x30] sm:$0xff]
        %v772 = vld [vmem:[%s588 + $0x38] sm:$0xf]
        %v773 = vld [vmem:[%s588 + $0x3c] sm:$0xff]
        %v774 = vld [vmem:[%s588 + $0x44] sm:$0xf]
        %v775 = vld [vmem:[%s588 + $0x48] sm:$0xff]
        %v776 = vld [vmem:[%s588 + $0x50] sm:$0xf]
        %v777 = vld [vmem:[%s588 + $0x54] sm:$0xff]
        %v778 = vld [vmem:[%s588 + $0x5c] sm:$0xf]
        %v779 = vld [vmem:[%s588 + $0x60] sm:$0xff]
        %v780 = vld [vmem:[%s588 + $0x68] sm:$0xf]
        %v781 = vld [vmem:[%s588 + $0x6c] sm:$0xff]
        %v782 = vld [vmem:[%s588 + $0x74] sm:$0xf]
        %v783 = vld [vmem:[%s588 + $0x78] sm:$0xff]
        %v784 = vld [vmem:[%s588 + $0x80] sm:$0xf]
        %v785 = vld [vmem:[%s588 + $0x84] sm:$0xff]
        %v786 = vld [vmem:[%s588 + $0x8c] sm:$0xf]
        %v787 = vld [vmem:[%s588 + $0x90] sm:$0xff]
        %v788 = vld [vmem:[%s588 + $0x98] sm:$0xf]
        %v789 = vld [vmem:[%s588 + $0x9c] sm:$0xff]
        %v790 = vld [vmem:[%s588 + $0xa4] sm:$0xf]
        %v791 = vld [vmem:[%s588 + $0xa8] sm:$0xff]
        %v792 = vld [vmem:[%s588 + $0xb0] sm:$0xf]
        %v793 = vld [vmem:[%s588 + $0xb4] sm:$0xff]
        %v794 = vld [vmem:[%s588 + $0xbc] sm:$0xf]
        %v796 = vlaneseq
        %v797 = vshrl.u32 %v796, 7
        %v798 = vsub.s32 0, %v797
        %v799 = vrot.slane %v751, %v798
        %v800 = vlaneseq
        %v801 = vshrl.u32 %v800, 7
        %v802 = vsub.s32 1, %v801
        %v803 = vrot.slane %v751, %v802
        %v804 = vlaneseq
        %v805 = vshrl.u32 %v804, 7
        %v806 = vsub.s32 2, %v805
        %v807 = vrot.slane %v751, %v806
        %v843 = vunpack.c.l.b16 %v763
        %v844 = vunpack.c.h.b16 %v763
        %v845 = vunpack.c.l.b16 %v764
        %v846 = vunpack.c.l.b16 %v765
        %v847 = vunpack.c.h.b16 %v765
        %v848 = vunpack.c.l.b16 %v766
        %v849 = vunpack.c.l.b16 %v767
        %v850 = vunpack.c.h.b16 %v767
        %v851 = vunpack.c.l.b16 %v768
        %v852 = vunpack.c.l.b16 %v769
        %v853 = vunpack.c.h.b16 %v769
        %v854 = vunpack.c.l.b16 %v770
        %v855 = vunpack.c.l.b16 %v771
        %v856 = vunpack.c.h.b16 %v771
        %v857 = vunpack.c.l.b16 %v772
        %v858 = vunpack.c.l.b16 %v773
        %v859 = vunpack.c.h.b16 %v773
        %v860 = vunpack.c.l.b16 %v774
        %v861 = vunpack.c.l.b16 %v775
        %v862 = vunpack.c.h.b16 %v775
        %v863 = vunpack.c.l.b16 %v776
        %v864 = vunpack.c.l.b16 %v777
        %v865 = vunpack.c.h.b16 %v777
        %v866 = vunpack.c.l.b16 %v778
        %v867 = vunpack.c.l.b16 %v779
        %v868 = vunpack.c.h.b16 %v779
        %v869 = vunpack.c.l.b16 %v780
        %v870 = vunpack.c.l.b16 %v781
        %v871 = vunpack.c.h.b16 %v781
        %v872 = vunpack.c.l.b16 %v782
        %v873 = vunpack.c.l.b16 %v783
        %v874 = vunpack.c.h.b16 %v783
        %v875 = vunpack.c.l.b16 %v784
        %v876 = vunpack.c.l.b16 %v785
        %v877 = vunpack.c.h.b16 %v785
        %v878 = vunpack.c.l.b16 %v786
        %v879 = vunpack.c.l.b16 %v787
        %v880 = vunpack.c.h.b16 %v787
        %v881 = vunpack.c.l.b16 %v788
        %v882 = vunpack.c.l.b16 %v789
        %v883 = vunpack.c.h.b16 %v789
        %v884 = vunpack.c.l.b16 %v790
        %v885 = vunpack.c.l.b16 %v791
        %v886 = vunpack.c.h.b16 %v791
        %v887 = vunpack.c.l.b16 %v792
        %v888 = vunpack.c.l.b16 %v793
        %v889 = vunpack.c.h.b16 %v793
        %v890 = vunpack.c.l.b16 %v794
        %v891 = vpack.c.b16 %v846, %v843
        %v892 = vpack.c.b16 %v847, %v844
        %v893 = vpack.c.b16 %v848, %v845
        %v894 = vpack.c.b16 %v852, %v849
        %v895 = vpack.c.b16 %v853, %v850
        %v896 = vpack.c.b16 %v854, %v851
        %v897 = vpack.c.b16 %v858, %v855
        %v898 = vpack.c.b16 %v859, %v856
        %v899 = vpack.c.b16 %v860, %v857
        %v900 = vpack.c.b16 %v864, %v861
        %v901 = vpack.c.b16 %v865, %v862
        %v902 = vpack.c.b16 %v866, %v863
        %v903 = vpack.c.b16 %v870, %v867
        %v904 = vpack.c.b16 %v871, %v868
        %v905 = vpack.c.b16 %v872, %v869
        %v906 = vpack.c.b16 %v876, %v873
        %v907 = vpack.c.b16 %v877, %v874
        %v908 = vpack.c.b16 %v878, %v875
        %v909 = vpack.c.b16 %v882, %v879
        %v910 = vpack.c.b16 %v883, %v880
        %v911 = vpack.c.b16 %v884, %v881
        %v912 = vpack.c.b16 %v888, %v885
        %v913 = vpack.c.b16 %v889, %v886
        %v914 = vpack.c.b16 %v890, %v887
        %939 = vmatprep.subr.bf16.mxu0 %v892
        %940 = vmatpush1.bf16.msra.mxu0 %v891
        %941 = vmatprep.subr.bf16.mxu0 %v895
        %942 = vmatpush1.bf16.msra.mxu0 %v894
        %943 = vmatprep.subr.bf16.mxu0 %v898
        %944 = vmatpush1.bf16.msra.mxu0 %v897
        %945 = vmatprep.subr.bf16.mxu0 %v901
        %946 = vmatpush1.bf16.msra.mxu0 %v900
        %947 = vmatprep.subr.bf16.mxu0 %v904
        %948 = vmatpush1.bf16.msra.mxu0 %v903
        %949 = vmatprep.subr.bf16.mxu0 %v907
        %950 = vmatpush1.bf16.msra.mxu0 %v906
        %951 = vmatprep.subr.bf16.mxu0 %v910
        %952 = vmatpush1.bf16.msra.mxu0 %v909
        %953 = vmatprep.subr.bf16.mxu0 %v913
        %954 = vmatpush1.bf16.msra.mxu0 %v912
        %955 = vmatprep.subr.bf16.mxu0 0
        %956 = vmatpush1.bf16.msra.mxu0 0
        %957 = vmatprep.subr.bf16.mxu0 0
        %958 = vmatpush1.bf16.msra.mxu0 0
        %959 = vmatprep.subr.bf16.mxu0 0
        %960 = vmatpush1.bf16.msra.mxu0 0
        %961 = vmatprep.subr.bf16.mxu0 0
        %962 = vmatpush1.bf16.msra.mxu0 0
        %963 = vmatprep.subr.bf16.mxu0 0
        %964 = vmatpush1.bf16.msra.mxu0 0
        %965 = vmatprep.subr.bf16.mxu0 0
        %966 = vmatpush1.bf16.msra.mxu0 0
        %967 = vmatprep.subr.bf16.mxu0 0
        %968 = vmatpush1.bf16.msra.mxu0 0
        %969 = vmatprep.subr.bf16.mxu0 0
        %970 = vmatpush1.bf16.msra.mxu0 0
        %971 = vmatprep.mubr.bf16.mxu0 0
        %972 = vmatmul.mubr.bf16.gmra.mrb[0].mxu0 %v759
        %v973 = vpop.f32.mrb[0].mxu0
        %v974 = vadd.f32 %v799, %v973
        %v975 = vpop.f32.mrb[0].mxu0
        %v976 = vadd.f32 %v803, %v975
        %v977 = vpop.f32.mrb[0].mxu0
        %v978 = vadd.f32 %v799, %v977
        %v979 = vpop.f32.mrb[0].mxu0
        %v980 = vadd.f32 %v803, %v979
        %981 = vmatprep.mubr.bf16.mxu0 0
        %982 = vmatmul.mubr.bf16.gmra.mrb[0].mxu0 %v760
        %v983 = vpop.f32.mrb[0].mxu0
        %v984 = vadd.f32 %v799, %v983
        %v985 = vpop.f32.mrb[0].mxu0
        %v986 = vadd.f32 %v803, %v985
        %v987 = vpop.f32.mrb[0].mxu0
        %v988 = vadd.f32 %v799, %v987
        %v989 = vpop.f32.mrb[0].mxu0
        %v990 = vadd.f32 %v803, %v989
        %991 = vmatprep.mubr.bf16.mxu0 0
        %992 = vmatmul.mubr.bf16.gmra.mrb[0].mxu0 %v761
        %v993 = vpop.f32.mrb[0].mxu0
        %v994 = vadd.f32 %v799, %v993
        %v995 = vpop.f32.mrb[0].mxu0
        %v996 = vadd.f32 %v803, %v995
        %v997 = vpop.f32.mrb[0].mxu0
        %v998 = vadd.f32 %v799, %v997
        %v999 = vpop.f32.mrb[0].mxu0
        %v1000 = vadd.f32 %v803, %v999
        %1001 = vmatprep.mubr.bf16.mxu0 0
        %1002 = vmatmul.mubr.bf16.gmra.mrb[0].mxu0 %v762
        %v1003 = vpop.f32.mrb[0].mxu0
        %v1004 = vadd.f32 %v799, %v1003
        %v1005 = vpop.f32.mrb[0].mxu0
        %v1006 = vadd.f32 %v803, %v1005
        %v1007 = vpop.f32.mrb[0].mxu0
        %v1008 = vadd.f32 %v799, %v1007
        %v1009 = vpop.f32.mrb[0].mxu0
        %v1010 = vadd.f32 %v803, %v1009
        %1011 = vdwg.mxu0
        %1012 = vmatprep.subr.bf16.mxu0 0
        %1013 = vmatpush1.bf16.msra.mxu0 %v893
        %1014 = vmatprep.subr.bf16.mxu0 0
        %1015 = vmatpush1.bf16.msra.mxu0 %v896
        %1016 = vmatprep.subr.bf16.mxu0 0
        %1017 = vmatpush1.bf16.msra.mxu0 %v899
        %1018 = vmatprep.subr.bf16.mxu0 0
        %1019 = vmatpush1.bf16.msra.mxu0 %v902
        %1020 = vmatprep.subr.bf16.mxu0 0
        %1021 = vmatpush1.bf16.msra.mxu0 %v905
        %1022 = vmatprep.subr.bf16.mxu0 0
        %1023 = vmatpush1.bf16.msra.mxu0 %v908
        %1024 = vmatprep.subr.bf16.mxu0 0
        %1025 = vmatpush1.bf16.msra.mxu0 %v911
        %1026 = vmatprep.subr.bf16.mxu0 0
        %1027 = vmatpush1.bf16.msra.mxu0 %v914
        %1028 = vmatprep.subr.bf16.mxu0 0
        %1029 = vmatpush1.bf16.msra.mxu0 0
        %1030 = vmatprep.subr.bf16.mxu0 0
        %1031 = vmatpush1.bf16.msra.mxu0 0
        %1032 = vmatprep.subr.bf16.mxu0 0
        %1033 = vmatpush1.bf16.msra.mxu0 0
        %1034 = vmatprep.subr.bf16.mxu0 0
        %1035 = vmatpush1.bf16.msra.mxu0 0
        %1036 = vmatprep.subr.bf16.mxu0 0
        %1037 = vmatpush1.bf16.msra.mxu0 0
        %1038 = vmatprep.subr.bf16.mxu0 0
        %1039 = vmatpush1.bf16.msra.mxu0 0
        %1040 = vmatprep.subr.bf16.mxu0 0
        %1041 = vmatpush1.bf16.msra.mxu0 0
        %1042 = vmatprep.subr.bf16.mxu0 0
        %1043 = vmatpush1.bf16.msra.mxu0 0
        %1044 = vmatprep.mubr.bf16.mxu0 0
        %1045 = vmatmul.mubr.bf16.gmra.mrb[0].mxu0 %v759
        %v1046 = vpop.f32.mrb[0].mxu0
        %v1047 = vadd.f32 %v807, %v1046
        %v1048 = vpop.f32.mrb[0].mxu0
        %v1049 = vpop.f32.mrb[0].mxu0
        %v1050 = vadd.f32 %v807, %v1049
        %v1051 = vpop.f32.mrb[0].mxu0
        %1052 = vmatprep.mubr.bf16.mxu0 0
        %1053 = vmatmul.mubr.bf16.gmra.mrb[0].mxu0 %v760
        %v1054 = vpop.f32.mrb[0].mxu0
        %v1055 = vadd.f32 %v807, %v1054
        %v1056 = vpop.f32.mrb[0].mxu0
        %v1057 = vpop.f32.mrb[0].mxu0
        %v1058 = vadd.f32 %v807, %v1057
        %v1059 = vpop.f32.mrb[0].mxu0
        %1060 = vmatprep.mubr.bf16.mxu0 0
        %1061 = vmatmul.mubr.bf16.gmra.mrb[0].mxu0 %v761
        %v1062 = vpop.f32.mrb[0].mxu0
        %v1063 = vadd.f32 %v807, %v1062
        %v1064 = vpop.f32.mrb[0].mxu0
        %v1065 = vpop.f32.mrb[0].mxu0
        %v1066 = vadd.f32 %v807, %v1065
        %v1067 = vpop.f32.mrb[0].mxu0
        %1068 = vmatprep.mubr.bf16.mxu0 0
        %1069 = vmatmul.mubr.bf16.gmra.mrb[0].mxu0 %v762
        %v1070 = vpop.f32.mrb[0].mxu0
        %v1071 = vadd.f32 %v807, %v1070
        %v1072 = vpop.f32.mrb[0].mxu0
        %v1073 = vpop.f32.mrb[0].mxu0
        %v1074 = vadd.f32 %v807, %v1073
        %v1075 = vpop.f32.mrb[0].mxu0
        %1076 = vdwg.mxu0
        %v1077 = vpack.c.bf16 %v978, %v974
        %v1078 = vpack.c.bf16 %v988, %v984
        %v1079 = vpack.c.bf16 %v998, %v994
        %v1080 = vpack.c.bf16 %v1008, %v1004
        %v1081 = vpack.c.bf16 %v980, %v976
        %v1082 = vpack.c.bf16 %v990, %v986
        %v1083 = vpack.c.bf16 %v1000, %v996
        %v1084 = vpack.c.bf16 %v1010, %v1006
        %v1085 = vpack.c.bf16 %v1050, %v1047
        %v1086 = vpack.c.bf16 %v1058, %v1055
        %v1087 = vpack.c.bf16 %v1066, %v1063
        %v1088 = vpack.c.bf16 %v1074, %v1071
        %vm1089 = vcmask 261120
        %v1091 = vsel %vm1089, %v1077, 0
        %v1094 = vsel %vm1089, %v1081, 0
        %1096 = vmatprep.subr.bf16.mxu0 0
        %1097 = vmatpush1.bf16.xpose.msra.mxu0 %v1094
        %1098 = vmatprep.subr.bf16.mxu0 0
        %1099 = vmatpush1.bf16.xpose.msra.mxu0 0
        %1100 = vmatprep.subr.bf16.mxu0 0
        %1101 = vmatpush1.bf16.xpose.msra.mxu0 0
        %1102 = vmatprep.subr.bf16.mxu0 0
        %1103 = vmatpush1.bf16.xpose.msra.mxu0 0
        %1104 = vmatprep.subr.bf16.mxu0 0
        %1105 = vmatpush1.bf16.xpose.msra.mxu0 0
        %1106 = vmatprep.subr.bf16.mxu0 0
        %1107 = vmatpush1.bf16.xpose.msra.mxu0 0
        %1108 = vmatprep.subr.bf16.mxu0 0
        %1109 = vmatpush1.bf16.xpose.msra.mxu0 0
        %1110 = vmatprep.subr.bf16.mxu0 0
        %1111 = vmatpush1.bf16.xpose.msra.mxu0 0
        %1112 = vmatprep.subr.bf16.mxu0 0
        %1113 = vmatpush1.bf16.xpose.msra.mxu0 0
        %1114 = vmatprep.subr.bf16.mxu0 0
        %1115 = vmatpush1.bf16.xpose.msra.mxu0 0
        %1116 = vmatprep.subr.bf16.mxu0 0
        %1117 = vmatpush1.bf16.xpose.msra.mxu0 0
        %1118 = vmatprep.subr.bf16.mxu0 0
        %1119 = vmatpush1.bf16.xpose.msra.mxu0 0
        %1120 = vmatprep.subr.bf16.mxu0 0
        %1121 = vmatpush1.bf16.xpose.msra.mxu0 0
        %1122 = vmatprep.subr.bf16.mxu0 0
        %1123 = vmatpush1.bf16.xpose.msra.mxu0 0
        %1124 = vmatprep.subr.bf16.mxu0 0
        %1125 = vmatpush1.bf16.xpose.msra.mxu0 0
        %1126 = vmatprep.subr.bf16.mxu0 0
        %1127 = vmatpush1.bf16.xpose.msra.mxu0 0
        %1128 = vmatprep.mubr.bf16.mxu0 0
        %1129 = vmatmul.mubr.bf16.gmra.mrb[0].mxu0 %v1091
        %v1130 = vpop.f32.mrb[0].mxu0
        %v1131 = vadd.f32 0.0, %v1130
        %v1132 = vpop.f32.mrb[0].mxu0
        %v1133 = vpop.f32.mrb[0].mxu0
        %v1134 = vadd.f32 0.0, %v1133
        %v1135 = vpop.f32.mrb[0].mxu0
        %1136 = vdwg.mxu0
        %v1138 = vsel %vm1089, %v1078, 0
        %v1141 = vsel %vm1089, %v1082, 0
        %1143 = vmatprep.subr.bf16.mxu0 0
        %1144 = vmatpush1.bf16.xpose.msra.mxu0 %v1141
        %1145 = vmatprep.subr.bf16.mxu0 0
        %1146 = vmatpush1.bf16.xpose.msra.mxu0 0
        %1147 = vmatprep.subr.bf16.mxu0 0
        %1148 = vmatpush1.bf16.xpose.msra.mxu0 0
        %1149 = vmatprep.subr.bf16.mxu0 0
        %1150 = vmatpush1.bf16.xpose.msra.mxu0 0
        %1151 = vmatprep.subr.bf16.mxu0 0
        %1152 = vmatpush1.bf16.xpose.msra.mxu0 0
        %1153 = vmatprep.subr.bf16.mxu0 0
        %1154 = vmatpush1.bf16.xpose.msra.mxu0 0
        %1155 = vmatprep.subr.bf16.mxu0 0
        %1156 = vmatpush1.bf16.xpose.msra.mxu0 0
        %1157 = vmatprep.subr.bf16.mxu0 0
        %1158 = vmatpush1.bf16.xpose.msra.mxu0 0
        %1159 = vmatprep.subr.bf16.mxu0 0
        %1160 = vmatpush1.bf16.xpose.msra.mxu0 0
        %1161 = vmatprep.subr.bf16.mxu0 0
        %1162 = vmatpush1.bf16.xpose.msra.mxu0 0
        %1163 = vmatprep.subr.bf16.mxu0 0
        %1164 = vmatpush1.bf16.xpose.msra.mxu0 0
        %1165 = vmatprep.subr.bf16.mxu0 0
        %1166 = vmatpush1.bf16.xpose.msra.mxu0 0
        %1167 = vmatprep.subr.bf16.mxu0 0
        %1168 = vmatpush1.bf16.xpose.msra.mxu0 0
        %1169 = vmatprep.subr.bf16.mxu0 0
        %1170 = vmatpush1.bf16.xpose.msra.mxu0 0
        %1171 = vmatprep.subr.bf16.mxu0 0
        %1172 = vmatpush1.bf16.xpose.msra.mxu0 0
        %1173 = vmatprep.subr.bf16.mxu0 0
        %1174 = vmatpush1.bf16.xpose.msra.mxu0 0
        %1175 = vmatprep.mubr.bf16.mxu0 0
        %1176 = vmatmul.mubr.bf16.gmra.mrb[0].mxu0 %v1138
        %v1177 = vpop.f32.mrb[0].mxu0
        %v1178 = vadd.f32 0.0, %v1177
        %v1179 = vpop.f32.mrb[0].mxu0
        %v1180 = vpop.f32.mrb[0].mxu0
        %v1181 = vadd.f32 0.0, %v1180
        %v1182 = vpop.f32.mrb[0].mxu0
        %1183 = vdwg.mxu0
        %v1185 = vsel %vm1089, %v1079, 0
        %v1188 = vsel %vm1089, %v1083, 0
        %1190 = vmatprep.subr.bf16.mxu0 0
        %1191 = vmatpush1.bf16.xpose.msra.mxu0 %v1188
        %1192 = vmatprep.subr.bf16.mxu0 0
        %1193 = vmatpush1.bf16.xpose.msra.mxu0 0
        %1194 = vmatprep.subr.bf16.mxu0 0
        %1195 = vmatpush1.bf16.xpose.msra.mxu0 0
        %1196 = vmatprep.subr.bf16.mxu0 0
        %1197 = vmatpush1.bf16.xpose.msra.mxu0 0
        %1198 = vmatprep.subr.bf16.mxu0 0
        %1199 = vmatpush1.bf16.xpose.msra.mxu0 0
        %1200 = vmatprep.subr.bf16.mxu0 0
        %1201 = vmatpush1.bf16.xpose.msra.mxu0 0
        %1202 = vmatprep.subr.bf16.mxu0 0
        %1203 = vmatpush1.bf16.xpose.msra.mxu0 0
        %1204 = vmatprep.subr.bf16.mxu0 0
        %1205 = vmatpush1.bf16.xpose.msra.mxu0 0
        %1206 = vmatprep.subr.bf16.mxu0 0
        %1207 = vmatpush1.bf16.xpose.msra.mxu0 0
        %1208 = vmatprep.subr.bf16.mxu0 0
        %1209 = vmatpush1.bf16.xpose.msra.mxu0 0
        %1210 = vmatprep.subr.bf16.mxu0 0
        %1211 = vmatpush1.bf16.xpose.msra.mxu0 0
        %1212 = vmatprep.subr.bf16.mxu0 0
        %1213 = vmatpush1.bf16.xpose.msra.mxu0 0
        %1214 = vmatprep.subr.bf16.mxu0 0
        %1215 = vmatpush1.bf16.xpose.msra.mxu0 0
        %1216 = vmatprep.subr.bf16.mxu0 0
        %1217 = vmatpush1.bf16.xpose.msra.mxu0 0
        %1218 = vmatprep.subr.bf16.mxu0 0
        %1219 = vmatpush1.bf16.xpose.msra.mxu0 0
        %1220 = vmatprep.subr.bf16.mxu0 0
        %1221 = vmatpush1.bf16.xpose.msra.mxu0 0
        %1222 = vmatprep.mubr.bf16.mxu0 0
        %1223 = vmatmul.mubr.bf16.gmra.mrb[0].mxu0 %v1185
        %v1224 = vpop.f32.mrb[0].mxu0
        %v1225 = vadd.f32 0.0, %v1224
        %v1226 = vpop.f32.mrb[0].mxu0
        %v1227 = vpop.f32.mrb[0].mxu0
        %v1228 = vadd.f32 0.0, %v1227
        %v1229 = vpop.f32.mrb[0].mxu0
        %1230 = vdwg.mxu0
        %v1232 = vsel %vm1089, %v1080, 0
        %v1235 = vsel %vm1089, %v1084, 0
        %1237 = vmatprep.subr.bf16.mxu0 0
        %1238 = vmatpush1.bf16.xpose.msra.mxu0 %v1235
        %1239 = vmatprep.subr.bf16.mxu0 0
        %1240 = vmatpush1.bf16.xpose.msra.mxu0 0
        %1241 = vmatprep.subr.bf16.mxu0 0
        %1242 = vmatpush1.bf16.xpose.msra.mxu0 0
        %1243 = vmatprep.subr.bf16.mxu0 0
        %1244 = vmatpush1.bf16.xpose.msra.mxu0 0
        %1245 = vmatprep.subr.bf16.mxu0 0
        %1246 = vmatpush1.bf16.xpose.msra.mxu0 0
        %1247 = vmatprep.subr.bf16.mxu0 0
        %1248 = vmatpush1.bf16.xpose.msra.mxu0 0
        %1249 = vmatprep.subr.bf16.mxu0 0
        %1250 = vmatpush1.bf16.xpose.msra.mxu0 0
        %1251 = vmatprep.subr.bf16.mxu0 0
        %1252 = vmatpush1.bf16.xpose.msra.mxu0 0
        %1253 = vmatprep.subr.bf16.mxu0 0
        %1254 = vmatpush1.bf16.xpose.msra.mxu0 0
        %1255 = vmatprep.subr.bf16.mxu0 0
        %1256 = vmatpush1.bf16.xpose.msra.mxu0 0
        %1257 = vmatprep.subr.bf16.mxu0 0
        %1258 = vmatpush1.bf16.xpose.msra.mxu0 0
        %1259 = vmatprep.subr.bf16.mxu0 0
        %1260 = vmatpush1.bf16.xpose.msra.mxu0 0
        %1261 = vmatprep.subr.bf16.mxu0 0
        %1262 = vmatpush1.bf16.xpose.msra.mxu0 0
        %1263 = vmatprep.subr.bf16.mxu0 0
        %1264 = vmatpush1.bf16.xpose.msra.mxu0 0
        %1265 = vmatprep.subr.bf16.mxu0 0
        %1266 = vmatpush1.bf16.xpose.msra.mxu0 0
        %1267 = vmatprep.subr.bf16.mxu0 0
        %1268 = vmatpush1.bf16.xpose.msra.mxu0 0
        %1269 = vmatprep.mubr.bf16.mxu0 0
        %1270 = vmatmul.mubr.bf16.gmra.mrb[0].mxu0 %v1232
        %v1271 = vpop.f32.mrb[0].mxu0
        %v1272 = vadd.f32 0.0, %v1271
        %v1273 = vpop.f32.mrb[0].mxu0
        %v1274 = vpop.f32.mrb[0].mxu0
        %v1275 = vadd.f32 0.0, %v1274
        %v1276 = vpop.f32.mrb[0].mxu0
        %1277 = vdwg.mxu0
        %vm1278 = vcmask 130048
        %v1279 = vsel %vm1278, %v1131, -inf
        %1280 = vmax.xlane.f32.xlu0 %v1279
        %v1281 = vpop.xlane.xlu0 %1280
        %v1282 = vsel %vm1278, %v1134, -inf
        %1283 = vmax.xlane.f32.xlu0 %v1282
        %v1284 = vpop.xlane.xlu0 %1283
        %v1285 = vsel %vm1278, %v1178, -inf
        %1286 = vmax.xlane.f32.xlu0 %v1285
        %v1287 = vpop.xlane.xlu0 %1286
        %v1288 = vsel %vm1278, %v1181, -inf
        %1289 = vmax.xlane.f32.xlu0 %v1288
        %v1290 = vpop.xlane.xlu0 %1289
        %v1291 = vsel %vm1278, %v1225, -inf
        %1292 = vmax.xlane.f32.xlu0 %v1291
        %v1293 = vpop.xlane.xlu0 %1292
        %v1294 = vsel %vm1278, %v1228, -inf
        %1295 = vmax.xlane.f32.xlu0 %v1294
        %v1296 = vpop.xlane.xlu0 %1295
        %v1297 = vsel %vm1278, %v1272, -inf
        %1298 = vmax.xlane.f32.xlu0 %v1297
        %v1299 = vpop.xlane.xlu0 %1298
        %v1300 = vsel %vm1278, %v1275, -inf
        %1301 = vmax.xlane.f32.xlu0 %v1300
        %v1302 = vpop.xlane.xlu0 %1301
        %v1303 = vsub.f32 %v1131, %v1281
        %v1304 = vsub.f32 %v1134, %v1284
        %v1305 = vsub.f32 %v1178, %v1287
        %v1306 = vsub.f32 %v1181, %v1290
        %v1307 = vsub.f32 %v1225, %v1293
        %v1308 = vsub.f32 %v1228, %v1296
        %v1309 = vsub.f32 %v1272, %v1299
        %v1310 = vsub.f32 %v1275, %v1302
        %v1311 = vmul.f32 %v1303, 1.442695
        %v1312 = vpow.pop %v1311
        %v1313 = vmul.f32 %v1304, 1.442695
        %v1314 = vpow.pop %v1313
        %v1315 = vmul.f32 %v1305, 1.442695
        %v1316 = vpow.pop %v1315
        %v1317 = vmul.f32 %v1306, 1.442695
        %v1318 = vpow.pop %v1317
        %v1319 = vmul.f32 %v1307, 1.442695
        %v1320 = vpow.pop %v1319
        %v1321 = vmul.f32 %v1308, 1.442695
        %v1322 = vpow.pop %v1321
        %v1323 = vmul.f32 %v1309, 1.442695
        %v1324 = vpow.pop %v1323
        %v1325 = vmul.f32 %v1310, 1.442695
        %v1326 = vpow.pop %v1325
        %v1327 = vsel %vm1278, %v1312, 0.0
        %1328 = vadd.xlane.f32.xlu0 %v1327
        %v1329 = vpop.xlane.xlu0 %1328
        %v1330 = vsel %vm1278, %v1314, 0.0
        %1331 = vadd.xlane.f32.xlu0 %v1330
        %v1332 = vpop.xlane.xlu0 %1331
        %v1333 = vsel %vm1278, %v1316, 0.0
        %1334 = vadd.xlane.f32.xlu0 %v1333
        %v1335 = vpop.xlane.xlu0 %1334
        %v1336 = vsel %vm1278, %v1318, 0.0
        %1337 = vadd.xlane.f32.xlu0 %v1336
        %v1338 = vpop.xlane.xlu0 %1337
        %v1339 = vsel %vm1278, %v1320, 0.0
        %1340 = vadd.xlane.f32.xlu0 %v1339
        %v1341 = vpop.xlane.xlu0 %1340
        %v1342 = vsel %vm1278, %v1322, 0.0
        %1343 = vadd.xlane.f32.xlu0 %v1342
        %v1344 = vpop.xlane.xlu0 %1343
        %v1345 = vsel %vm1278, %v1324, 0.0
        %1346 = vadd.xlane.f32.xlu0 %v1345
        %v1347 = vpop.xlane.xlu0 %1346
        %v1348 = vsel %vm1278, %v1326, 0.0
        %1349 = vadd.xlane.f32.xlu0 %v1348
        %v1350 = vpop.xlane.xlu0 %1349
        %v1351 = vrcp.pop %v1329
        %v1352 = vrcp.pop %v1332
        %v1353 = vrcp.pop %v1335
        %v1354 = vrcp.pop %v1338
        %v1355 = vrcp.pop %v1341
        %v1356 = vrcp.pop %v1344
        %v1357 = vrcp.pop %v1347
        %v1358 = vrcp.pop %v1350
        %v1359 = vmul.f32 %v1312, %v1351
        %v1360 = vmul.f32 %v1314, %v1352
        %v1361 = vmul.f32 %v1316, %v1353
        %v1362 = vmul.f32 %v1318, %v1354
        %v1363 = vmul.f32 %v1320, %v1355
        %v1364 = vmul.f32 %v1322, %v1356
        %v1365 = vmul.f32 %v1324, %v1357
        %v1366 = vmul.f32 %v1326, %v1358
        %v1367 = vpack.c.bf16 %v1360, %v1359
        %v1368 = vpack.c.bf16 %v1362, %v1361
        %v1369 = vpack.c.bf16 %v1364, %v1363
        %v1370 = vpack.c.bf16 %v1366, %v1365
        %v1372 = vsel %vm1278, %v1367, 0
        %1374 = vmatprep.subr.bf16.mxu0 0
        %1375 = vmatpush1.bf16.msra.mxu0 %v1085
        %1376 = vmatprep.subr.bf16.mxu0 0
        %1377 = vmatpush1.bf16.msra.mxu0 0
        %1378 = vmatprep.subr.bf16.mxu0 0
        %1379 = vmatpush1.bf16.msra.mxu0 0
        %1380 = vmatprep.subr.bf16.mxu0 0
        %1381 = vmatpush1.bf16.msra.mxu0 0
        %1382 = vmatprep.subr.bf16.mxu0 0
        %1383 = vmatpush1.bf16.msra.mxu0 0
        %1384 = vmatprep.subr.bf16.mxu0 0
        %1385 = vmatpush1.bf16.msra.mxu0 0
        %1386 = vmatprep.subr.bf16.mxu0 0
        %1387 = vmatpush1.bf16.msra.mxu0 0
        %1388 = vmatprep.subr.bf16.mxu0 0
        %1389 = vmatpush1.bf16.msra.mxu0 0
        %1390 = vmatprep.subr.bf16.mxu0 0
        %1391 = vmatpush1.bf16.msra.mxu0 0
        %1392 = vmatprep.subr.bf16.mxu0 0
        %1393 = vmatpush1.bf16.msra.mxu0 0
        %1394 = vmatprep.subr.bf16.mxu0 0
        %1395 = vmatpush1.bf16.msra.mxu0 0
        %1396 = vmatprep.subr.bf16.mxu0 0
        %1397 = vmatpush1.bf16.msra.mxu0 0
        %1398 = vmatprep.subr.bf16.mxu0 0
        %1399 = vmatpush1.bf16.msra.mxu0 0
        %1400 = vmatprep.subr.bf16.mxu0 0
        %1401 = vmatpush1.bf16.msra.mxu0 0
        %1402 = vmatprep.subr.bf16.mxu0 0
        %1403 = vmatpush1.bf16.msra.mxu0 0
        %1404 = vmatprep.subr.bf16.mxu0 0
        %1405 = vmatpush1.bf16.msra.mxu0 0
        %1406 = vmatprep.mubr.bf16.mxu0 0
        %1407 = vmatmul.mubr.bf16.gmra.mrb[0].mxu0 %v1372
        %v1408 = vpop.f32.mrb[0].mxu0
        %v1409 = vadd.f32 0.0, %v1408
        %v1410 = vpop.f32.mrb[0].mxu0
        %v1411 = vpop.f32.mrb[0].mxu0
        %v1412 = vadd.f32 0.0, %v1411
        %v1413 = vpop.f32.mrb[0].mxu0
        %1414 = vdwg.mxu0
        %v1416 = vsel %vm1278, %v1368, 0
        %1418 = vmatprep.subr.bf16.mxu0 0
        %1419 = vmatpush1.bf16.msra.mxu0 %v1086
        %1420 = vmatprep.subr.bf16.mxu0 0
        %1421 = vmatpush1.bf16.msra.mxu0 0
        %1422 = vmatprep.subr.bf16.mxu0 0
        %1423 = vmatpush1.bf16.msra.mxu0 0
        %1424 = vmatprep.subr.bf16.mxu0 0
        %1425 = vmatpush1.bf16.msra.mxu0 0
        %1426 = vmatprep.subr.bf16.mxu0 0
        %1427 = vmatpush1.bf16.msra.mxu0 0
        %1428 = vmatprep.subr.bf16.mxu0 0
        %1429 = vmatpush1.bf16.msra.mxu0 0
        %1430 = vmatprep.subr.bf16.mxu0 0
        %1431 = vmatpush1.bf16.msra.mxu0 0
        %1432 = vmatprep.subr.bf16.mxu0 0
        %1433 = vmatpush1.bf16.msra.mxu0 0
        %1434 = vmatprep.subr.bf16.mxu0 0
        %1435 = vmatpush1.bf16.msra.mxu0 0
        %1436 = vmatprep.subr.bf16.mxu0 0
        %1437 = vmatpush1.bf16.msra.mxu0 0
        %1438 = vmatprep.subr.bf16.mxu0 0
        %1439 = vmatpush1.bf16.msra.mxu0 0
        %1440 = vmatprep.subr.bf16.mxu0 0
        %1441 = vmatpush1.bf16.msra.mxu0 0
        %1442 = vmatprep.subr.bf16.mxu0 0
        %1443 = vmatpush1.bf16.msra.mxu0 0
        %1444 = vmatprep.subr.bf16.mxu0 0
        %1445 = vmatpush1.bf16.msra.mxu0 0
        %1446 = vmatprep.subr.bf16.mxu0 0
        %1447 = vmatpush1.bf16.msra.mxu0 0
        %1448 = vmatprep.subr.bf16.mxu0 0
        %1449 = vmatpush1.bf16.msra.mxu0 0
        %1450 = vmatprep.mubr.bf16.mxu0 0
        %1451 = vmatmul.mubr.bf16.gmra.mrb[0].mxu0 %v1416
        %v1452 = vpop.f32.mrb[0].mxu0
        %v1453 = vadd.f32 0.0, %v1452
        %v1454 = vpop.f32.mrb[0].mxu0
        %v1455 = vpop.f32.mrb[0].mxu0
        %v1456 = vadd.f32 0.0, %v1455
        %v1457 = vpop.f32.mrb[0].mxu0
        %1458 = vdwg.mxu0
        %v1460 = vsel %vm1278, %v1369, 0
        %1462 = vmatprep.subr.bf16.mxu0 0
        %1463 = vmatpush1.bf16.msra.mxu0 %v1087
        %1464 = vmatprep.subr.bf16.mxu0 0
        %1465 = vmatpush1.bf16.msra.mxu0 0
        %1466 = vmatprep.subr.bf16.mxu0 0
        %1467 = vmatpush1.bf16.msra.mxu0 0
        %1468 = vmatprep.subr.bf16.mxu0 0
        %1469 = vmatpush1.bf16.msra.mxu0 0
        %1470 = vmatprep.subr.bf16.mxu0 0
        %1471 = vmatpush1.bf16.msra.mxu0 0
        %1472 = vmatprep.subr.bf16.mxu0 0
        %1473 = vmatpush1.bf16.msra.mxu0 0
        %1474 = vmatprep.subr.bf16.mxu0 0
        %1475 = vmatpush1.bf16.msra.mxu0 0
        %1476 = vmatprep.subr.bf16.mxu0 0
        %1477 = vmatpush1.bf16.msra.mxu0 0
        %1478 = vmatprep.subr.bf16.mxu0 0
        %1479 = vmatpush1.bf16.msra.mxu0 0
        %1480 = vmatprep.subr.bf16.mxu0 0
        %1481 = vmatpush1.bf16.msra.mxu0 0
        %1482 = vmatprep.subr.bf16.mxu0 0
        %1483 = vmatpush1.bf16.msra.mxu0 0
        %1484 = vmatprep.subr.bf16.mxu0 0
        %1485 = vmatpush1.bf16.msra.mxu0 0
        %1486 = vmatprep.subr.bf16.mxu0 0
        %1487 = vmatpush1.bf16.msra.mxu0 0
        %1488 = vmatprep.subr.bf16.mxu0 0
        %1489 = vmatpush1.bf16.msra.mxu0 0
        %1490 = vmatprep.subr.bf16.mxu0 0
        %1491 = vmatpush1.bf16.msra.mxu0 0
        %1492 = vmatprep.subr.bf16.mxu0 0
        %1493 = vmatpush1.bf16.msra.mxu0 0
        %1494 = vmatprep.mubr.bf16.mxu0 0
        %1495 = vmatmul.mubr.bf16.gmra.mrb[0].mxu0 %v1460
        %v1496 = vpop.f32.mrb[0].mxu0
        %v1497 = vadd.f32 0.0, %v1496
        %v1498 = vpop.f32.mrb[0].mxu0
        %v1499 = vpop.f32.mrb[0].mxu0
        %v1500 = vadd.f32 0.0, %v1499
        %v1501 = vpop.f32.mrb[0].mxu0
        %1502 = vdwg.mxu0
        %v1504 = vsel %vm1278, %v1370, 0
        %1506 = vmatprep.subr.bf16.mxu0 0
        %1507 = vmatpush1.bf16.msra.mxu0 %v1088
        %1508 = vmatprep.subr.bf16.mxu0 0
        %1509 = vmatpush1.bf16.msra.mxu0 0
        %1510 = vmatprep.subr.bf16.mxu0 0
        %1511 = vmatpush1.bf16.msra.mxu0 0
        %1512 = vmatprep.subr.bf16.mxu0 0
        %1513 = vmatpush1.bf16.msra.mxu0 0
        %1514 = vmatprep.subr.bf16.mxu0 0
        %1515 = vmatpush1.bf16.msra.mxu0 0
        %1516 = vmatprep.subr.bf16.mxu0 0
        %1517 = vmatpush1.bf16.msra.mxu0 0
        %1518 = vmatprep.subr.bf16.mxu0 0
        %1519 = vmatpush1.bf16.msra.mxu0 0
        %1520 = vmatprep.subr.bf16.mxu0 0
        %1521 = vmatpush1.bf16.msra.mxu0 0
        %1522 = vmatprep.subr.bf16.mxu0 0
        %1523 = vmatpush1.bf16.msra.mxu0 0
        %1524 = vmatprep.subr.bf16.mxu0 0
        %1525 = vmatpush1.bf16.msra.mxu0 0
        %1526 = vmatprep.subr.bf16.mxu0 0
        %1527 = vmatpush1.bf16.msra.mxu0 0
        %1528 = vmatprep.subr.bf16.mxu0 0
        %1529 = vmatpush1.bf16.msra.mxu0 0
        %1530 = vmatprep.subr.bf16.mxu0 0
        %1531 = vmatpush1.bf16.msra.mxu0 0
        %1532 = vmatprep.subr.bf16.mxu0 0
        %1533 = vmatpush1.bf16.msra.mxu0 0
        %1534 = vmatprep.subr.bf16.mxu0 0
        %1535 = vmatpush1.bf16.msra.mxu0 0
        %1536 = vmatprep.subr.bf16.mxu0 0
        %1537 = vmatpush1.bf16.msra.mxu0 0
        %1538 = vmatprep.mubr.bf16.mxu0 0
        %1539 = vmatmul.mubr.bf16.gmra.mrb[0].mxu0 %v1504
        %v1540 = vpop.f32.mrb[0].mxu0
        %v1541 = vadd.f32 0.0, %v1540
        %v1542 = vpop.f32.mrb[0].mxu0
        %v1543 = vpop.f32.mrb[0].mxu0
        %v1544 = vadd.f32 0.0, %v1543
        %v1545 = vpop.f32.mrb[0].mxu0
        %1546 = vdwg.mxu0
        %v1547 = vpack.c.bf16 %v1412, %v1409
        %v1548 = vpack.c.bf16 %v1456, %v1453
        %v1549 = vpack.c.bf16 %v1500, %v1497
        %v1550 = vpack.c.bf16 %v1544, %v1541
        %1551 = vst.msk [vmem:[#allocation3] sm:$0xff] %vm1089, %v1547
        %1552 = vst.msk [vmem:[#allocation3 + $0x8] sm:$0xff] %vm1089, %v1548
        %1553 = vst.msk [vmem:[#allocation3 + $0x10] sm:$0xff] %vm1089, %v1549
        %1554 = vst.msk [vmem:[#allocation3 + $0x18] sm:$0xff] %vm1089, %v1550
        %1556 = vrot.lane.b32.xlu0 %v1077, 96
        %v1557 = vpop.permute.xlu0 %1556
        %1559 = vrot.lane.b32.xlu0 %v1081, 96
        %v1560 = vpop.permute.xlu0 %1559
        %v1562 = vsel %vm1089, %v1557, 0
        %v1565 = vsel %vm1089, %v1560, 0
        %1567 = vmatprep.subr.bf16.mxu0 0
        %1568 = vmatpush1.bf16.xpose.msra.mxu0 %v1565
        %1569 = vmatprep.subr.bf16.mxu0 0
        %1570 = vmatpush1.bf16.xpose.msra.mxu0 0
        %1571 = vmatprep.subr.bf16.mxu0 0
        %1572 = vmatpush1.bf16.xpose.msra.mxu0 0
        %1573 = vmatprep.subr.bf16.mxu0 0
        %1574 = vmatpush1.bf16.xpose.msra.mxu0 0
        %1575 = vmatprep.subr.bf16.mxu0 0
        %1576 = vmatpush1.bf16.xpose.msra.mxu0 0
        %1577 = vmatprep.subr.bf16.mxu0 0
        %1578 = vmatpush1.bf16.xpose.msra.mxu0 0
        %1579 = vmatprep.subr.bf16.mxu0 0
        %1580 = vmatpush1.bf16.xpose.msra.mxu0 0
        %1581 = vmatprep.subr.bf16.mxu0 0
        %1582 = vmatpush1.bf16.xpose.msra.mxu0 0
        %1583 = vmatprep.subr.bf16.mxu0 0
        %1584 = vmatpush1.bf16.xpose.msra.mxu0 0
        %1585 = vmatprep.subr.bf16.mxu0 0
        %1586 = vmatpush1.bf16.xpose.msra.mxu0 0
        %1587 = vmatprep.subr.bf16.mxu0 0
        %1588 = vmatpush1.bf16.xpose.msra.mxu0 0
        %1589 = vmatprep.subr.bf16.mxu0 0
        %1590 = vmatpush1.bf16.xpose.msra.mxu0 0
        %1591 = vmatprep.subr.bf16.mxu0 0
        %1592 = vmatpush1.bf16.xpose.msra.mxu0 0
        %1593 = vmatprep.subr.bf16.mxu0 0
        %1594 = vmatpush1.bf16.xpose.msra.mxu0 0
        %1595 = vmatprep.subr.bf16.mxu0 0
        %1596 = vmatpush1.bf16.xpose.msra.mxu0 0
        %1597 = vmatprep.subr.bf16.mxu0 0
        %1598 = vmatpush1.bf16.xpose.msra.mxu0 0
        %1599 = vmatprep.mubr.bf16.mxu0 0
        %1600 = vmatmul.mubr.bf16.gmra.mrb[0].mxu0 %v1562
        %v1601 = vpop.f32.mrb[0].mxu0
        %v1602 = vadd.f32 0.0, %v1601
        %v1603 = vpop.f32.mrb[0].mxu0
        %v1604 = vpop.f32.mrb[0].mxu0
        %v1605 = vadd.f32 0.0, %v1604
        %v1606 = vpop.f32.mrb[0].mxu0
        %1607 = vdwg.mxu0
        %1609 = vrot.lane.b32.xlu0 %v1078, 96
        %v1610 = vpop.permute.xlu0 %1609
        %1612 = vrot.lane.b32.xlu0 %v1082, 96
        %v1613 = vpop.permute.xlu0 %1612
        %v1615 = vsel %vm1089, %v1610, 0
        %v1618 = vsel %vm1089, %v1613, 0
        %1620 = vmatprep.subr.bf16.mxu0 0
        %1621 = vmatpush1.bf16.xpose.msra.mxu0 %v1618
        %1622 = vmatprep.subr.bf16.mxu0 0
        %1623 = vmatpush1.bf16.xpose.msra.mxu0 0
        %1624 = vmatprep.subr.bf16.mxu0 0
        %1625 = vmatpush1.bf16.xpose.msra.mxu0 0
        %1626 = vmatprep.subr.bf16.mxu0 0
        %1627 = vmatpush1.bf16.xpose.msra.mxu0 0
        %1628 = vmatprep.subr.bf16.mxu0 0
        %1629 = vmatpush1.bf16.xpose.msra.mxu0 0
        %1630 = vmatprep.subr.bf16.mxu0 0
        %1631 = vmatpush1.bf16.xpose.msra.mxu0 0
        %1632 = vmatprep.subr.bf16.mxu0 0
        %1633 = vmatpush1.bf16.xpose.msra.mxu0 0
        %1634 = vmatprep.subr.bf16.mxu0 0
        %1635 = vmatpush1.bf16.xpose.msra.mxu0 0
        %1636 = vmatprep.subr.bf16.mxu0 0
        %1637 = vmatpush1.bf16.xpose.msra.mxu0 0
        %1638 = vmatprep.subr.bf16.mxu0 0
        %1639 = vmatpush1.bf16.xpose.msra.mxu0 0
        %1640 = vmatprep.subr.bf16.mxu0 0
        %1641 = vmatpush1.bf16.xpose.msra.mxu0 0
        %1642 = vmatprep.subr.bf16.mxu0 0
        %1643 = vmatpush1.bf16.xpose.msra.mxu0 0
        %1644 = vmatprep.subr.bf16.mxu0 0
        %1645 = vmatpush1.bf16.xpose.msra.mxu0 0
        %1646 = vmatprep.subr.bf16.mxu0 0
        %1647 = vmatpush1.bf16.xpose.msra.mxu0 0
        %1648 = vmatprep.subr.bf16.mxu0 0
        %1649 = vmatpush1.bf16.xpose.msra.mxu0 0
        %1650 = vmatprep.subr.bf16.mxu0 0
        %1651 = vmatpush1.bf16.xpose.msra.mxu0 0
        %1652 = vmatprep.mubr.bf16.mxu0 0
        %1653 = vmatmul.mubr.bf16.gmra.mrb[0].mxu0 %v1615
        %v1654 = vpop.f32.mrb[0].mxu0
        %v1655 = vadd.f32 0.0, %v1654
        %v1656 = vpop.f32.mrb[0].mxu0
        %v1657 = vpop.f32.mrb[0].mxu0
        %v1658 = vadd.f32 0.0, %v1657
        %v1659 = vpop.f32.mrb[0].mxu0
        %1660 = vdwg.mxu0
        %1662 = vrot.lane.b32.xlu0 %v1079, 96
        %v1663 = vpop.permute.xlu0 %1662
        %1665 = vrot.lane.b32.xlu0 %v1083, 96
        %v1666 = vpop.permute.xlu0 %1665
        %v1668 = vsel %vm1089, %v1663, 0
        %v1671 = vsel %vm1089, %v1666, 0
        %1673 = vmatprep.subr.bf16.mxu0 0
        %1674 = vmatpush1.bf16.xpose.msra.mxu0 %v1671
        %1675 = vmatprep.subr.bf16.mxu0 0
        %1676 = vmatpush1.bf16.xpose.msra.mxu0 0
        %1677 = vmatprep.subr.bf16.mxu0 0
        %1678 = vmatpush1.bf16.xpose.msra.mxu0 0
        %1679 = vmatprep.subr.bf16.mxu0 0
        %1680 = vmatpush1.bf16.xpose.msra.mxu0 0
        %1681 = vmatprep.subr.bf16.mxu0 0
        %1682 = vmatpush1.bf16.xpose.msra.mxu0 0
        %1683 = vmatprep.subr.bf16.mxu0 0
        %1684 = vmatpush1.bf16.xpose.msra.mxu0 0
        %1685 = vmatprep.subr.bf16.mxu0 0
        %1686 = vmatpush1.bf16.xpose.msra.mxu0 0
        %1687 = vmatprep.subr.bf16.mxu0 0
        %1688 = vmatpush1.bf16.xpose.msra.mxu0 0
        %1689 = vmatprep.subr.bf16.mxu0 0
        %1690 = vmatpush1.bf16.xpose.msra.mxu0 0
        %1691 = vmatprep.subr.bf16.mxu0 0
        %1692 = vmatpush1.bf16.xpose.msra.mxu0 0
        %1693 = vmatprep.subr.bf16.mxu0 0
        %1694 = vmatpush1.bf16.xpose.msra.mxu0 0
        %1695 = vmatprep.subr.bf16.mxu0 0
        %1696 = vmatpush1.bf16.xpose.msra.mxu0 0
        %1697 = vmatprep.subr.bf16.mxu0 0
        %1698 = vmatpush1.bf16.xpose.msra.mxu0 0
        %1699 = vmatprep.subr.bf16.mxu0 0
        %1700 = vmatpush1.bf16.xpose.msra.mxu0 0
        %1701 = vmatprep.subr.bf16.mxu0 0
        %1702 = vmatpush1.bf16.xpose.msra.mxu0 0
        %1703 = vmatprep.subr.bf16.mxu0 0
        %1704 = vmatpush1.bf16.xpose.msra.mxu0 0
        %1705 = vmatprep.mubr.bf16.mxu0 0
        %1706 = vmatmul.mubr.bf16.gmra.mrb[0].mxu0 %v1668
        %v1707 = vpop.f32.mrb[0].mxu0
        %v1708 = vadd.f32 0.0, %v1707
        %v1709 = vpop.f32.mrb[0].mxu0
        %v1710 = vpop.f32.mrb[0].mxu0
        %v1711 = vadd.f32 0.0, %v1710
        %v1712 = vpop.f32.mrb[0].mxu0
        %1713 = vdwg.mxu0
        %1715 = vrot.lane.b32.xlu0 %v1080, 96
        %v1716 = vpop.permute.xlu0 %1715
        %1718 = vrot.lane.b32.xlu0 %v1084, 96
        %v1719 = vpop.permute.xlu0 %1718
        %v1721 = vsel %vm1089, %v1716, 0
        %v1724 = vsel %vm1089, %v1719, 0
        %1726 = vmatprep.subr.bf16.mxu0 0
        %1727 = vmatpush1.bf16.xpose.msra.mxu0 %v1724
        %1728 = vmatprep.subr.bf16.mxu0 0
        %1729 = vmatpush1.bf16.xpose.msra.mxu0 0
        %1730 = vmatprep.subr.bf16.mxu0 0
        %1731 = vmatpush1.bf16.xpose.msra.mxu0 0
        %1732 = vmatprep.subr.bf16.mxu0 0
        %1733 = vmatpush1.bf16.xpose.msra.mxu0 0
        %1734 = vmatprep.subr.bf16.mxu0 0
        %1735 = vmatpush1.bf16.xpose.msra.mxu0 0
        %1736 = vmatprep.subr.bf16.mxu0 0
        %1737 = vmatpush1.bf16.xpose.msra.mxu0 0
        %1738 = vmatprep.subr.bf16.mxu0 0
        %1739 = vmatpush1.bf16.xpose.msra.mxu0 0
        %1740 = vmatprep.subr.bf16.mxu0 0
        %1741 = vmatpush1.bf16.xpose.msra.mxu0 0
        %1742 = vmatprep.subr.bf16.mxu0 0
        %1743 = vmatpush1.bf16.xpose.msra.mxu0 0
        %1744 = vmatprep.subr.bf16.mxu0 0
        %1745 = vmatpush1.bf16.xpose.msra.mxu0 0
        %1746 = vmatprep.subr.bf16.mxu0 0
        %1747 = vmatpush1.bf16.xpose.msra.mxu0 0
        %1748 = vmatprep.subr.bf16.mxu0 0
        %1749 = vmatpush1.bf16.xpose.msra.mxu0 0
        %1750 = vmatprep.subr.bf16.mxu0 0
        %1751 = vmatpush1.bf16.xpose.msra.mxu0 0
        %1752 = vmatprep.subr.bf16.mxu0 0
        %1753 = vmatpush1.bf16.xpose.msra.mxu0 0
        %1754 = vmatprep.subr.bf16.mxu0 0
        %1755 = vmatpush1.bf16.xpose.msra.mxu0 0
        %1756 = vmatprep.subr.bf16.mxu0 0
        %1757 = vmatpush1.bf16.xpose.msra.mxu0 0
        %1758 = vmatprep.mubr.bf16.mxu0 0
        %1759 = vmatmul.mubr.bf16.gmra.mrb[0].mxu0 %v1721
        %v1760 = vpop.f32.mrb[0].mxu0
        %v1761 = vadd.f32 0.0, %v1760
        %v1762 = vpop.f32.mrb[0].mxu0
        %v1763 = vpop.f32.mrb[0].mxu0
        %v1764 = vadd.f32 0.0, %v1763
        %v1765 = vpop.f32.mrb[0].mxu0
        %1766 = vdwg.mxu0
        %v1767 = vsel %vm1278, %v1602, -inf
        %1768 = vmax.xlane.f32.xlu0 %v1767
        %v1769 = vpop.xlane.xlu0 %1768
        %v1770 = vsel %vm1278, %v1605, -inf
        %1771 = vmax.xlane.f32.xlu0 %v1770
        %v1772 = vpop.xlane.xlu0 %1771
        %v1773 = vsel %vm1278, %v1655, -inf
        %1774 = vmax.xlane.f32.xlu0 %v1773
        %v1775 = vpop.xlane.xlu0 %1774
        %v1776 = vsel %vm1278, %v1658, -inf
        %1777 = vmax.xlane.f32.xlu0 %v1776
        %v1778 = vpop.xlane.xlu0 %1777
        %v1779 = vsel %vm1278, %v1708, -inf
        %1780 = vmax.xlane.f32.xlu0 %v1779
        %v1781 = vpop.xlane.xlu0 %1780
        %v1782 = vsel %vm1278, %v1711, -inf
        %1783 = vmax.xlane.f32.xlu0 %v1782
        %v1784 = vpop.xlane.xlu0 %1783
        %v1785 = vsel %vm1278, %v1761, -inf
        %1786 = vmax.xlane.f32.xlu0 %v1785
        %v1787 = vpop.xlane.xlu0 %1786
        %v1788 = vsel %vm1278, %v1764, -inf
        %1789 = vmax.xlane.f32.xlu0 %v1788
        %v1790 = vpop.xlane.xlu0 %1789
        %v1791 = vsub.f32 %v1602, %v1769
        %v1792 = vsub.f32 %v1605, %v1772
        %v1793 = vsub.f32 %v1655, %v1775
        %v1794 = vsub.f32 %v1658, %v1778
        %v1795 = vsub.f32 %v1708, %v1781
        %v1796 = vsub.f32 %v1711, %v1784
        %v1797 = vsub.f32 %v1761, %v1787
        %v1798 = vsub.f32 %v1764, %v1790
        %v1799 = vmul.f32 %v1791, 1.442695
        %v1800 = vpow.pop %v1799
        %v1801 = vmul.f32 %v1792, 1.442695
        %v1802 = vpow.pop %v1801
        %v1803 = vmul.f32 %v1793, 1.442695
        %v1804 = vpow.pop %v1803
        %v1805 = vmul.f32 %v1794, 1.442695
        %v1806 = vpow.pop %v1805
        %v1807 = vmul.f32 %v1795, 1.442695
        %v1808 = vpow.pop %v1807
        %v1809 = vmul.f32 %v1796, 1.442695
        %v1810 = vpow.pop %v1809
        %v1811 = vmul.f32 %v1797, 1.442695
        %v1812 = vpow.pop %v1811
        %v1813 = vmul.f32 %v1798, 1.442695
        %v1814 = vpow.pop %v1813
        %v1815 = vsel %vm1278, %v1800, 0.0
        %1816 = vadd.xlane.f32.xlu0 %v1815
        %v1817 = vpop.xlane.xlu0 %1816
        %v1818 = vsel %vm1278, %v1802, 0.0
        %1819 = vadd.xlane.f32.xlu0 %v1818
        %v1820 = vpop.xlane.xlu0 %1819
        %v1821 = vsel %vm1278, %v1804, 0.0
        %1822 = vadd.xlane.f32.xlu0 %v1821
        %v1823 = vpop.xlane.xlu0 %1822
        %v1824 = vsel %vm1278, %v1806, 0.0
        %1825 = vadd.xlane.f32.xlu0 %v1824
        %v1826 = vpop.xlane.xlu0 %1825
        %v1827 = vsel %vm1278, %v1808, 0.0
        %1828 = vadd.xlane.f32.xlu0 %v1827
        %v1829 = vpop.xlane.xlu0 %1828
        %v1830 = vsel %vm1278, %v1810, 0.0
        %1831 = vadd.xlane.f32.xlu0 %v1830
        %v1832 = vpop.xlane.xlu0 %1831
        %v1833 = vsel %vm1278, %v1812, 0.0
        %1834 = vadd.xlane.f32.xlu0 %v1833
        %v1835 = vpop.xlane.xlu0 %1834
        %v1836 = vsel %vm1278, %v1814, 0.0
        %1837 = vadd.xlane.f32.xlu0 %v1836
        %v1838 = vpop.xlane.xlu0 %1837
        %v1839 = vrcp.pop %v1817
        %v1840 = vrcp.pop %v1820
        %v1841 = vrcp.pop %v1823
        %v1842 = vrcp.pop %v1826
        %v1843 = vrcp.pop %v1829
        %v1844 = vrcp.pop %v1832
        %v1845 = vrcp.pop %v1835
        %v1846 = vrcp.pop %v1838
        %v1847 = vmul.f32 %v1800, %v1839
        %v1848 = vmul.f32 %v1802, %v1840
        %v1849 = vmul.f32 %v1804, %v1841
        %v1850 = vmul.f32 %v1806, %v1842
        %v1851 = vmul.f32 %v1808, %v1843
        %v1852 = vmul.f32 %v1810, %v1844
        %v1853 = vmul.f32 %v1812, %v1845
        %v1854 = vmul.f32 %v1814, %v1846
        %v1855 = vpack.c.bf16 %v1848, %v1847
        %v1856 = vpack.c.bf16 %v1850, %v1849
        %v1857 = vpack.c.bf16 %v1852, %v1851
        %v1858 = vpack.c.bf16 %v1854, %v1853
        %1860 = vrot.lane.b32.xlu0 %v1085, 96
        %v1861 = vpop.permute.xlu0 %1860
        %v1864 = vsel %vm1278, %v1855, 0
        %1866 = vmatprep.subr.bf16.mxu0 0
        %1867 = vmatpush1.bf16.msra.mxu0 %v1861
        %1868 = vmatprep.subr.bf16.mxu0 0
        %1869 = vmatpush1.bf16.msra.mxu0 0
        %1870 = vmatprep.subr.bf16.mxu0 0
        %1871 = vmatpush1.bf16.msra.mxu0 0
        %1872 = vmatprep.subr.bf16.mxu0 0
        %1873 = vmatpush1.bf16.msra.mxu0 0
        %1874 = vmatprep.subr.bf16.mxu0 0
        %1875 = vmatpush1.bf16.msra.mxu0 0
        %1876 = vmatprep.subr.bf16.mxu0 0
        %1877 = vmatpush1.bf16.msra.mxu0 0
        %1878 = vmatprep.subr.bf16.mxu0 0
        %1879 = vmatpush1.bf16.msra.mxu0 0
        %1880 = vmatprep.subr.bf16.mxu0 0
        %1881 = vmatpush1.bf16.msra.mxu0 0
        %1882 = vmatprep.subr.bf16.mxu0 0
        %1883 = vmatpush1.bf16.msra.mxu0 0
        %1884 = vmatprep.subr.bf16.mxu0 0
        %1885 = vmatpush1.bf16.msra.mxu0 0
        %1886 = vmatprep.subr.bf16.mxu0 0
        %1887 = vmatpush1.bf16.msra.mxu0 0
        %1888 = vmatprep.subr.bf16.mxu0 0
        %1889 = vmatpush1.bf16.msra.mxu0 0
        %1890 = vmatprep.subr.bf16.mxu0 0
        %1891 = vmatpush1.bf16.msra.mxu0 0
        %1892 = vmatprep.subr.bf16.mxu0 0
        %1893 = vmatpush1.bf16.msra.mxu0 0
        %1894 = vmatprep.subr.bf16.mxu0 0
        %1895 = vmatpush1.bf16.msra.mxu0 0
        %1896 = vmatprep.subr.bf16.mxu0 0
        %1897 = vmatpush1.bf16.msra.mxu0 0
        %1898 = vmatprep.mubr.bf16.mxu0 0
        %1899 = vmatmul.mubr.bf16.gmra.mrb[0].mxu0 %v1864
        %v1900 = vpop.f32.mrb[0].mxu0
        %v1901 = vadd.f32 0.0, %v1900
        %v1902 = vpop.f32.mrb[0].mxu0
        %v1903 = vpop.f32.mrb[0].mxu0
        %v1904 = vadd.f32 0.0, %v1903
        %v1905 = vpop.f32.mrb[0].mxu0
        %1906 = vdwg.mxu0
        %1908 = vrot.lane.b32.xlu0 %v1086, 96
        %v1909 = vpop.permute.xlu0 %1908
        %v1912 = vsel %vm1278, %v1856, 0
        %1914 = vmatprep.subr.bf16.mxu0 0
        %1915 = vmatpush1.bf16.msra.mxu0 %v1909
        %1916 = vmatprep.subr.bf16.mxu0 0
        %1917 = vmatpush1.bf16.msra.mxu0 0
        %1918 = vmatprep.subr.bf16.mxu0 0
        %1919 = vmatpush1.bf16.msra.mxu0 0
        %1920 = vmatprep.subr.bf16.mxu0 0
        %1921 = vmatpush1.bf16.msra.mxu0 0
        %1922 = vmatprep.subr.bf16.mxu0 0
        %1923 = vmatpush1.bf16.msra.mxu0 0
        %1924 = vmatprep.subr.bf16.mxu0 0
        %1925 = vmatpush1.bf16.msra.mxu0 0
        %1926 = vmatprep.subr.bf16.mxu0 0
        %1927 = vmatpush1.bf16.msra.mxu0 0
        %1928 = vmatprep.subr.bf16.mxu0 0
        %1929 = vmatpush1.bf16.msra.mxu0 0
        %1930 = vmatprep.subr.bf16.mxu0 0
        %1931 = vmatpush1.bf16.msra.mxu0 0
        %1932 = vmatprep.subr.bf16.mxu0 0
        %1933 = vmatpush1.bf16.msra.mxu0 0
        %1934 = vmatprep.subr.bf16.mxu0 0
        %1935 = vmatpush1.bf16.msra.mxu0 0
        %1936 = vmatprep.subr.bf16.mxu0 0
        %1937 = vmatpush1.bf16.msra.mxu0 0
        %1938 = vmatprep.subr.bf16.mxu0 0
        %1939 = vmatpush1.bf16.msra.mxu0 0
        %1940 = vmatprep.subr.bf16.mxu0 0
        %1941 = vmatpush1.bf16.msra.mxu0 0
        %1942 = vmatprep.subr.bf16.mxu0 0
        %1943 = vmatpush1.bf16.msra.mxu0 0
        %1944 = vmatprep.subr.bf16.mxu0 0
        %1945 = vmatpush1.bf16.msra.mxu0 0
        %1946 = vmatprep.mubr.bf16.mxu0 0
        %1947 = vmatmul.mubr.bf16.gmra.mrb[0].mxu0 %v1912
        %v1948 = vpop.f32.mrb[0].mxu0
        %v1949 = vadd.f32 0.0, %v1948
        %v1950 = vpop.f32.mrb[0].mxu0
        %v1951 = vpop.f32.mrb[0].mxu0
        %v1952 = vadd.f32 0.0, %v1951
        %v1953 = vpop.f32.mrb[0].mxu0
        %1954 = vdwg.mxu0
        %1956 = vrot.lane.b32.xlu0 %v1087, 96
        %v1957 = vpop.permute.xlu0 %1956
        %v1960 = vsel %vm1278, %v1857, 0
        %1962 = vmatprep.subr.bf16.mxu0 0
        %1963 = vmatpush1.bf16.msra.mxu0 %v1957
        %1964 = vmatprep.subr.bf16.mxu0 0
        %1965 = vmatpush1.bf16.msra.mxu0 0
        %1966 = vmatprep.subr.bf16.mxu0 0
        %1967 = vmatpush1.bf16.msra.mxu0 0
        %1968 = vmatprep.subr.bf16.mxu0 0
        %1969 = vmatpush1.bf16.msra.mxu0 0
        %1970 = vmatprep.subr.bf16.mxu0 0
        %1971 = vmatpush1.bf16.msra.mxu0 0
        %1972 = vmatprep.subr.bf16.mxu0 0
        %1973 = vmatpush1.bf16.msra.mxu0 0
        %1974 = vmatprep.subr.bf16.mxu0 0
        %1975 = vmatpush1.bf16.msra.mxu0 0
        %1976 = vmatprep.subr.bf16.mxu0 0
        %1977 = vmatpush1.bf16.msra.mxu0 0
        %1978 = vmatprep.subr.bf16.mxu0 0
        %1979 = vmatpush1.bf16.msra.mxu0 0
        %1980 = vmatprep.subr.bf16.mxu0 0
        %1981 = vmatpush1.bf16.msra.mxu0 0
        %1982 = vmatprep.subr.bf16.mxu0 0
        %1983 = vmatpush1.bf16.msra.mxu0 0
        %1984 = vmatprep.subr.bf16.mxu0 0
        %1985 = vmatpush1.bf16.msra.mxu0 0
        %1986 = vmatprep.subr.bf16.mxu0 0
        %1987 = vmatpush1.bf16.msra.mxu0 0
        %1988 = vmatprep.subr.bf16.mxu0 0
        %1989 = vmatpush1.bf16.msra.mxu0 0
        %1990 = vmatprep.subr.bf16.mxu0 0
        %1991 = vmatpush1.bf16.msra.mxu0 0
        %1992 = vmatprep.subr.bf16.mxu0 0
        %1993 = vmatpush1.bf16.msra.mxu0 0
        %1994 = vmatprep.mubr.bf16.mxu0 0
        %1995 = vmatmul.mubr.bf16.gmra.mrb[0].mxu0 %v1960
        %v1996 = vpop.f32.mrb[0].mxu0
        %v1997 = vadd.f32 0.0, %v1996
        %v1998 = vpop.f32.mrb[0].mxu0
        %v1999 = vpop.f32.mrb[0].mxu0
        %v2000 = vadd.f32 0.0, %v1999
        %v2001 = vpop.f32.mrb[0].mxu0
        %2002 = vdwg.mxu0
        %2004 = vrot.lane.b32.xlu0 %v1088, 96
        %v2005 = vpop.permute.xlu0 %2004
        %v2008 = vsel %vm1278, %v1858, 0
        %2010 = vmatprep.subr.bf16.mxu0 0
        %2011 = vmatpush1.bf16.msra.mxu0 %v2005
        %2012 = vmatprep.subr.bf16.mxu0 0
        %2013 = vmatpush1.bf16.msra.mxu0 0
        %2014 = vmatprep.subr.bf16.mxu0 0
        %2015 = vmatpush1.bf16.msra.mxu0 0
        %2016 = vmatprep.subr.bf16.mxu0 0
        %2017 = vmatpush1.bf16.msra.mxu0 0
        %2018 = vmatprep.subr.bf16.mxu0 0
        %2019 = vmatpush1.bf16.msra.mxu0 0
        %2020 = vmatprep.subr.bf16.mxu0 0
        %2021 = vmatpush1.bf16.msra.mxu0 0
        %2022 = vmatprep.subr.bf16.mxu0 0
        %2023 = vmatpush1.bf16.msra.mxu0 0
        %2024 = vmatprep.subr.bf16.mxu0 0
        %2025 = vmatpush1.bf16.msra.mxu0 0
        %2026 = vmatprep.subr.bf16.mxu0 0
        %2027 = vmatpush1.bf16.msra.mxu0 0
        %2028 = vmatprep.subr.bf16.mxu0 0
        %2029 = vmatpush1.bf16.msra.mxu0 0
        %2030 = vmatprep.subr.bf16.mxu0 0
        %2031 = vmatpush1.bf16.msra.mxu0 0
        %2032 = vmatprep.subr.bf16.mxu0 0
        %2033 = vmatpush1.bf16.msra.mxu0 0
        %2034 = vmatprep.subr.bf16.mxu0 0
        %2035 = vmatpush1.bf16.msra.mxu0 0
        %2036 = vmatprep.subr.bf16.mxu0 0
        %2037 = vmatpush1.bf16.msra.mxu0 0
        %2038 = vmatprep.subr.bf16.mxu0 0
        %2039 = vmatpush1.bf16.msra.mxu0 0
        %2040 = vmatprep.subr.bf16.mxu0 0
        %2041 = vmatpush1.bf16.msra.mxu0 0
        %2042 = vmatprep.mubr.bf16.mxu0 0
        %2043 = vmatmul.mubr.bf16.gmra.mrb[0].mxu0 %v2008
        %v2044 = vpop.f32.mrb[0].mxu0
        %v2045 = vadd.f32 0.0, %v2044
        %v2046 = vpop.f32.mrb[0].mxu0
        %v2047 = vpop.f32.mrb[0].mxu0
        %v2048 = vadd.f32 0.0, %v2047
        %v2049 = vpop.f32.mrb[0].mxu0
        %2050 = vdwg.mxu0
        %v2051 = vpack.c.bf16 %v1904, %v1901
        %v2052 = vpack.c.bf16 %v1952, %v1949
        %v2053 = vpack.c.bf16 %v2000, %v1997
        %v2054 = vpack.c.bf16 %v2048, %v2045
        %2059 = vrot.lane.b32.xlu0 %v2051, 32
        %v2060 = vpop.permute.xlu0 %2059
        %2061 = vrot.lane.b32.xlu0 %v2052, 32
        %v2062 = vpop.permute.xlu0 %2061
        %2063 = vrot.lane.b32.xlu0 %v2053, 32
        %v2064 = vpop.permute.xlu0 %2063
        %2065 = vrot.lane.b32.xlu0 %v2054, 32
        %v2066 = vpop.permute.xlu0 %2065
        %vm2071 = vcmask 523520
        %2072 = vst.msk [vmem:[#allocation3] sm:$0xff] %vm2071, %v2060
        %2073 = vst.msk [vmem:[#allocation3 + $0x8] sm:$0xff] %vm2071, %v2062
        %2074 = vst.msk [vmem:[#allocation3 + $0x10] sm:$0xff] %vm2071, %v2064
        %2075 = vst.msk [vmem:[#allocation3 + $0x18] sm:$0xff] %vm2071, %v2066
        %2076 = vrot.lane.b32.xlu0 %v1077, 64
        %v2077 = vpop.permute.xlu0 %2076
        %2078 = vrot.lane.b32.xlu0 %v1081, 64
        %v2079 = vpop.permute.xlu0 %2078
        %v2081 = vsel %vm1089, %v2077, 0
        %v2084 = vsel %vm1089, %v2079, 0
        %2086 = vmatprep.subr.bf16.mxu0 0
        %2087 = vmatpush1.bf16.xpose.msra.mxu0 %v2084
        %2088 = vmatprep.subr.bf16.mxu0 0
        %2089 = vmatpush1.bf16.xpose.msra.mxu0 0
        %2090 = vmatprep.subr.bf16.mxu0 0
        %2091 = vmatpush1.bf16.xpose.msra.mxu0 0
        %2092 = vmatprep.subr.bf16.mxu0 0
        %2093 = vmatpush1.bf16.xpose.msra.mxu0 0
        %2094 = vmatprep.subr.bf16.mxu0 0
        %2095 = vmatpush1.bf16.xpose.msra.mxu0 0
        %2096 = vmatprep.subr.bf16.mxu0 0
        %2097 = vmatpush1.bf16.xpose.msra.mxu0 0
        %2098 = vmatprep.subr.bf16.mxu0 0
        %2099 = vmatpush1.bf16.xpose.msra.mxu0 0
        %2100 = vmatprep.subr.bf16.mxu0 0
        %2101 = vmatpush1.bf16.xpose.msra.mxu0 0
        %2102 = vmatprep.subr.bf16.mxu0 0
        %2103 = vmatpush1.bf16.xpose.msra.mxu0 0
        %2104 = vmatprep.subr.bf16.mxu0 0
        %2105 = vmatpush1.bf16.xpose.msra.mxu0 0
        %2106 = vmatprep.subr.bf16.mxu0 0
        %2107 = vmatpush1.bf16.xpose.msra.mxu0 0
        %2108 = vmatprep.subr.bf16.mxu0 0
        %2109 = vmatpush1.bf16.xpose.msra.mxu0 0
        %2110 = vmatprep.subr.bf16.mxu0 0
        %2111 = vmatpush1.bf16.xpose.msra.mxu0 0
        %2112 = vmatprep.subr.bf16.mxu0 0
        %2113 = vmatpush1.bf16.xpose.msra.mxu0 0
        %2114 = vmatprep.subr.bf16.mxu0 0
        %2115 = vmatpush1.bf16.xpose.msra.mxu0 0
        %2116 = vmatprep.subr.bf16.mxu0 0
        %2117 = vmatpush1.bf16.xpose.msra.mxu0 0
        %2118 = vmatprep.mubr.bf16.mxu0 0
        %2119 = vmatmul.mubr.bf16.gmra.mrb[0].mxu0 %v2081
        %v2120 = vpop.f32.mrb[0].mxu0
        %v2121 = vadd.f32 0.0, %v2120
        %v2122 = vpop.f32.mrb[0].mxu0
        %v2123 = vpop.f32.mrb[0].mxu0
        %v2124 = vadd.f32 0.0, %v2123
        %v2125 = vpop.f32.mrb[0].mxu0
        %2126 = vdwg.mxu0
        %2127 = vrot.lane.b32.xlu0 %v1078, 64
        %v2128 = vpop.permute.xlu0 %2127
        %2129 = vrot.lane.b32.xlu0 %v1082, 64
        %v2130 = vpop.permute.xlu0 %2129
        %v2132 = vsel %vm1089, %v2128, 0
        %v2135 = vsel %vm1089, %v2130, 0
        %2137 = vmatprep.subr.bf16.mxu0 0
        %2138 = vmatpush1.bf16.xpose.msra.mxu0 %v2135
        %2139 = vmatprep.subr.bf16.mxu0 0
        %2140 = vmatpush1.bf16.xpose.msra.mxu0 0
        %2141 = vmatprep.subr.bf16.mxu0 0
        %2142 = vmatpush1.bf16.xpose.msra.mxu0 0
        %2143 = vmatprep.subr.bf16.mxu0 0
        %2144 = vmatpush1.bf16.xpose.msra.mxu0 0
        %2145 = vmatprep.subr.bf16.mxu0 0
        %2146 = vmatpush1.bf16.xpose.msra.mxu0 0
        %2147 = vmatprep.subr.bf16.mxu0 0
        %2148 = vmatpush1.bf16.xpose.msra.mxu0 0
        %2149 = vmatprep.subr.bf16.mxu0 0
        %2150 = vmatpush1.bf16.xpose.msra.mxu0 0
        %2151 = vmatprep.subr.bf16.mxu0 0
        %2152 = vmatpush1.bf16.xpose.msra.mxu0 0
        %2153 = vmatprep.subr.bf16.mxu0 0
        %2154 = vmatpush1.bf16.xpose.msra.mxu0 0
        %2155 = vmatprep.subr.bf16.mxu0 0
        %2156 = vmatpush1.bf16.xpose.msra.mxu0 0
        %2157 = vmatprep.subr.bf16.mxu0 0
        %2158 = vmatpush1.bf16.xpose.msra.mxu0 0
        %2159 = vmatprep.subr.bf16.mxu0 0
        %2160 = vmatpush1.bf16.xpose.msra.mxu0 0
        %2161 = vmatprep.subr.bf16.mxu0 0
        %2162 = vmatpush1.bf16.xpose.msra.mxu0 0
        %2163 = vmatprep.subr.bf16.mxu0 0
        %2164 = vmatpush1.bf16.xpose.msra.mxu0 0
        %2165 = vmatprep.subr.bf16.mxu0 0
        %2166 = vmatpush1.bf16.xpose.msra.mxu0 0
        %2167 = vmatprep.subr.bf16.mxu0 0
        %2168 = vmatpush1.bf16.xpose.msra.mxu0 0
        %2169 = vmatprep.mubr.bf16.mxu0 0
        %2170 = vmatmul.mubr.bf16.gmra.mrb[0].mxu0 %v2132
        %v2171 = vpop.f32.mrb[0].mxu0
        %v2172 = vadd.f32 0.0, %v2171
        %v2173 = vpop.f32.mrb[0].mxu0
        %v2174 = vpop.f32.mrb[0].mxu0
        %v2175 = vadd.f32 0.0, %v2174
        %v2176 = vpop.f32.mrb[0].mxu0
        %2177 = vdwg.mxu0
        %2178 = vrot.lane.b32.xlu0 %v1079, 64
        %v2179 = vpop.permute.xlu0 %2178
        %2180 = vrot.lane.b32.xlu0 %v1083, 64
        %v2181 = vpop.permute.xlu0 %2180
        %v2183 = vsel %vm1089, %v2179, 0
        %v2186 = vsel %vm1089, %v2181, 0
        %2188 = vmatprep.subr.bf16.mxu0 0
        %2189 = vmatpush1.bf16.xpose.msra.mxu0 %v2186
        %2190 = vmatprep.subr.bf16.mxu0 0
        %2191 = vmatpush1.bf16.xpose.msra.mxu0 0
        %2192 = vmatprep.subr.bf16.mxu0 0
        %2193 = vmatpush1.bf16.xpose.msra.mxu0 0
        %2194 = vmatprep.subr.bf16.mxu0 0
        %2195 = vmatpush1.bf16.xpose.msra.mxu0 0
        %2196 = vmatprep.subr.bf16.mxu0 0
        %2197 = vmatpush1.bf16.xpose.msra.mxu0 0
        %2198 = vmatprep.subr.bf16.mxu0 0
        %2199 = vmatpush1.bf16.xpose.msra.mxu0 0
        %2200 = vmatprep.subr.bf16.mxu0 0
        %2201 = vmatpush1.bf16.xpose.msra.mxu0 0
        %2202 = vmatprep.subr.bf16.mxu0 0
        %2203 = vmatpush1.bf16.xpose.msra.mxu0 0
        %2204 = vmatprep.subr.bf16.mxu0 0
        %2205 = vmatpush1.bf16.xpose.msra.mxu0 0
        %2206 = vmatprep.subr.bf16.mxu0 0
        %2207 = vmatpush1.bf16.xpose.msra.mxu0 0
        %2208 = vmatprep.subr.bf16.mxu0 0
        %2209 = vmatpush1.bf16.xpose.msra.mxu0 0
        %2210 = vmatprep.subr.bf16.mxu0 0
        %2211 = vmatpush1.bf16.xpose.msra.mxu0 0
        %2212 = vmatprep.subr.bf16.mxu0 0
        %2213 = vmatpush1.bf16.xpose.msra.mxu0 0
        %2214 = vmatprep.subr.bf16.mxu0 0
        %2215 = vmatpush1.bf16.xpose.msra.mxu0 0
        %2216 = vmatprep.subr.bf16.mxu0 0
        %2217 = vmatpush1.bf16.xpose.msra.mxu0 0
        %2218 = vmatprep.subr.bf16.mxu0 0
        %2219 = vmatpush1.bf16.xpose.msra.mxu0 0
        %2220 = vmatprep.mubr.bf16.mxu0 0
        %2221 = vmatmul.mubr.bf16.gmra.mrb[0].mxu0 %v2183
        %v2222 = vpop.f32.mrb[0].mxu0
        %v2223 = vadd.f32 0.0, %v2222
        %v2224 = vpop.f32.mrb[0].mxu0
        %v2225 = vpop.f32.mrb[0].mxu0
        %v2226 = vadd.f32 0.0, %v2225
        %v2227 = vpop.f32.mrb[0].mxu0
        %2228 = vdwg.mxu0
        %2229 = vrot.lane.b32.xlu0 %v1080, 64
        %v2230 = vpop.permute.xlu0 %2229
        %2231 = vrot.lane.b32.xlu0 %v1084, 64
        %v2232 = vpop.permute.xlu0 %2231
        %v2234 = vsel %vm1089, %v2230, 0
        %v2237 = vsel %vm1089, %v2232, 0
        %2239 = vmatprep.subr.bf16.mxu0 0
        %2240 = vmatpush1.bf16.xpose.msra.mxu0 %v2237
        %2241 = vmatprep.subr.bf16.mxu0 0
        %2242 = vmatpush1.bf16.xpose.msra.mxu0 0
        %2243 = vmatprep.subr.bf16.mxu0 0
        %2244 = vmatpush1.bf16.xpose.msra.mxu0 0
        %2245 = vmatprep.subr.bf16.mxu0 0
        %2246 = vmatpush1.bf16.xpose.msra.mxu0 0
        %2247 = vmatprep.subr.bf16.mxu0 0
        %2248 = vmatpush1.bf16.xpose.msra.mxu0 0
        %2249 = vmatprep.subr.bf16.mxu0 0
        %2250 = vmatpush1.bf16.xpose.msra.mxu0 0
        %2251 = vmatprep.subr.bf16.mxu0 0
        %2252 = vmatpush1.bf16.xpose.msra.mxu0 0
        %2253 = vmatprep.subr.bf16.mxu0 0
        %2254 = vmatpush1.bf16.xpose.msra.mxu0 0
        %2255 = vmatprep.subr.bf16.mxu0 0
        %2256 = vmatpush1.bf16.xpose.msra.mxu0 0
        %2257 = vmatprep.subr.bf16.mxu0 0
        %2258 = vmatpush1.bf16.xpose.msra.mxu0 0
        %2259 = vmatprep.subr.bf16.mxu0 0
        %2260 = vmatpush1.bf16.xpose.msra.mxu0 0
        %2261 = vmatprep.subr.bf16.mxu0 0
        %2262 = vmatpush1.bf16.xpose.msra.mxu0 0
        %2263 = vmatprep.subr.bf16.mxu0 0
        %2264 = vmatpush1.bf16.xpose.msra.mxu0 0
        %2265 = vmatprep.subr.bf16.mxu0 0
        %2266 = vmatpush1.bf16.xpose.msra.mxu0 0
        %2267 = vmatprep.subr.bf16.mxu0 0
        %2268 = vmatpush1.bf16.xpose.msra.mxu0 0
        %2269 = vmatprep.subr.bf16.mxu0 0
        %2270 = vmatpush1.bf16.xpose.msra.mxu0 0
        %2271 = vmatprep.mubr.bf16.mxu0 0
        %2272 = vmatmul.mubr.bf16.gmra.mrb[0].mxu0 %v2234
        %v2273 = vpop.f32.mrb[0].mxu0
        %v2274 = vadd.f32 0.0, %v2273
        %v2275 = vpop.f32.mrb[0].mxu0
        %v2276 = vpop.f32.mrb[0].mxu0
        %v2277 = vadd.f32 0.0, %v2276
        %v2278 = vpop.f32.mrb[0].mxu0
        %2279 = vdwg.mxu0
        %v2280 = vsel %vm1278, %v2121, -inf
        %2281 = vmax.xlane.f32.xlu0 %v2280
        %v2282 = vpop.xlane.xlu0 %2281
        %v2283 = vsel %vm1278, %v2124, -inf
        %2284 = vmax.xlane.f32.xlu0 %v2283
        %v2285 = vpop.xlane.xlu0 %2284
        %v2286 = vsel %vm1278, %v2172, -inf
        %2287 = vmax.xlane.f32.xlu0 %v2286
        %v2288 = vpop.xlane.xlu0 %2287
        %v2289 = vsel %vm1278, %v2175, -inf
        %2290 = vmax.xlane.f32.xlu0 %v2289
        %v2291 = vpop.xlane.xlu0 %2290
        %v2292 = vsel %vm1278, %v2223, -inf
        %2293 = vmax.xlane.f32.xlu0 %v2292
        %v2294 = vpop.xlane.xlu0 %2293
        %v2295 = vsel %vm1278, %v2226, -inf
        %2296 = vmax.xlane.f32.xlu0 %v2295
        %v2297 = vpop.xlane.xlu0 %2296
        %v2298 = vsel %vm1278, %v2274, -inf
        %2299 = vmax.xlane.f32.xlu0 %v2298
        %v2300 = vpop.xlane.xlu0 %2299
        %v2301 = vsel %vm1278, %v2277, -inf
        %2302 = vmax.xlane.f32.xlu0 %v2301
        %v2303 = vpop.xlane.xlu0 %2302
        %v2304 = vsub.f32 %v2121, %v2282
        %v2305 = vsub.f32 %v2124, %v2285
        %v2306 = vsub.f32 %v2172, %v2288
        %v2307 = vsub.f32 %v2175, %v2291
        %v2308 = vsub.f32 %v2223, %v2294
        %v2309 = vsub.f32 %v2226, %v2297
        %v2310 = vsub.f32 %v2274, %v2300
        %v2311 = vsub.f32 %v2277, %v2303
        %v2312 = vmul.f32 %v2304, 1.442695
        %v2313 = vpow.pop %v2312
        %v2314 = vmul.f32 %v2305, 1.442695
        %v2315 = vpow.pop %v2314
        %v2316 = vmul.f32 %v2306, 1.442695
        %v2317 = vpow.pop %v2316
        %v2318 = vmul.f32 %v2307, 1.442695
        %v2319 = vpow.pop %v2318
        %v2320 = vmul.f32 %v2308, 1.442695
        %v2321 = vpow.pop %v2320
        %v2322 = vmul.f32 %v2309, 1.442695
        %v2323 = vpow.pop %v2322
        %v2324 = vmul.f32 %v2310, 1.442695
        %v2325 = vpow.pop %v2324
        %v2326 = vmul.f32 %v2311, 1.442695
        %v2327 = vpow.pop %v2326
        %v2328 = vsel %vm1278, %v2313, 0.0
        %2329 = vadd.xlane.f32.xlu0 %v2328
        %v2330 = vpop.xlane.xlu0 %2329
        %v2331 = vsel %vm1278, %v2315, 0.0
        %2332 = vadd.xlane.f32.xlu0 %v2331
        %v2333 = vpop.xlane.xlu0 %2332
        %v2334 = vsel %vm1278, %v2317, 0.0
        %2335 = vadd.xlane.f32.xlu0 %v2334
        %v2336 = vpop.xlane.xlu0 %2335
        %v2337 = vsel %vm1278, %v2319, 0.0
        %2338 = vadd.xlane.f32.xlu0 %v2337
        %v2339 = vpop.xlane.xlu0 %2338
        %v2340 = vsel %vm1278, %v2321, 0.0
        %2341 = vadd.xlane.f32.xlu0 %v2340
        %v2342 = vpop.xlane.xlu0 %2341
        %v2343 = vsel %vm1278, %v2323, 0.0
        %2344 = vadd.xlane.f32.xlu0 %v2343
        %v2345 = vpop.xlane.xlu0 %2344
        %v2346 = vsel %vm1278, %v2325, 0.0
        %2347 = vadd.xlane.f32.xlu0 %v2346
        %v2348 = vpop.xlane.xlu0 %2347
        %v2349 = vsel %vm1278, %v2327, 0.0
        %2350 = vadd.xlane.f32.xlu0 %v2349
        %v2351 = vpop.xlane.xlu0 %2350
        %v2352 = vrcp.pop %v2330
        %v2353 = vrcp.pop %v2333
        %v2354 = vrcp.pop %v2336
        %v2355 = vrcp.pop %v2339
        %v2356 = vrcp.pop %v2342
        %v2357 = vrcp.pop %v2345
        %v2358 = vrcp.pop %v2348
        %v2359 = vrcp.pop %v2351
        %v2360 = vmul.f32 %v2313, %v2352
        %v2361 = vmul.f32 %v2315, %v2353
        %v2362 = vmul.f32 %v2317, %v2354
        %v2363 = vmul.f32 %v2319, %v2355
        %v2364 = vmul.f32 %v2321, %v2356
        %v2365 = vmul.f32 %v2323, %v2357
        %v2366 = vmul.f32 %v2325, %v2358
        %v2367 = vmul.f32 %v2327, %v2359
        %v2368 = vpack.c.bf16 %v2361, %v2360
        %v2369 = vpack.c.bf16 %v2363, %v2362
        %v2370 = vpack.c.bf16 %v2365, %v2364
        %v2371 = vpack.c.bf16 %v2367, %v2366
        %2372 = vrot.lane.b32.xlu0 %v1085, 64
        %v2373 = vpop.permute.xlu0 %2372
        %v2376 = vsel %vm1278, %v2368, 0
        %2378 = vmatprep.subr.bf16.mxu0 0
        %2379 = vmatpush1.bf16.msra.mxu0 %v2373
        %2380 = vmatprep.subr.bf16.mxu0 0
        %2381 = vmatpush1.bf16.msra.mxu0 0
        %2382 = vmatprep.subr.bf16.mxu0 0
        %2383 = vmatpush1.bf16.msra.mxu0 0
        %2384 = vmatprep.subr.bf16.mxu0 0
        %2385 = vmatpush1.bf16.msra.mxu0 0
        %2386 = vmatprep.subr.bf16.mxu0 0
        %2387 = vmatpush1.bf16.msra.mxu0 0
        %2388 = vmatprep.subr.bf16.mxu0 0
        %2389 = vmatpush1.bf16.msra.mxu0 0
        %2390 = vmatprep.subr.bf16.mxu0 0
        %2391 = vmatpush1.bf16.msra.mxu0 0
        %2392 = vmatprep.subr.bf16.mxu0 0
        %2393 = vmatpush1.bf16.msra.mxu0 0
        %2394 = vmatprep.subr.bf16.mxu0 0
        %2395 = vmatpush1.bf16.msra.mxu0 0
        %2396 = vmatprep.subr.bf16.mxu0 0
        %2397 = vmatpush1.bf16.msra.mxu0 0
        %2398 = vmatprep.subr.bf16.mxu0 0
        %2399 = vmatpush1.bf16.msra.mxu0 0
        %2400 = vmatprep.subr.bf16.mxu0 0
        %2401 = vmatpush1.bf16.msra.mxu0 0
        %2402 = vmatprep.subr.bf16.mxu0 0
        %2403 = vmatpush1.bf16.msra.mxu0 0
        %2404 = vmatprep.subr.bf16.mxu0 0
        %2405 = vmatpush1.bf16.msra.mxu0 0
        %2406 = vmatprep.subr.bf16.mxu0 0
        %2407 = vmatpush1.bf16.msra.mxu0 0
        %2408 = vmatprep.subr.bf16.mxu0 0
        %2409 = vmatpush1.bf16.msra.mxu0 0
        %2410 = vmatprep.mubr.bf16.mxu0 0
        %2411 = vmatmul.mubr.bf16.gmra.mrb[0].mxu0 %v2376
        %v2412 = vpop.f32.mrb[0].mxu0
        %v2413 = vadd.f32 0.0, %v2412
        %v2414 = vpop.f32.mrb[0].mxu0
        %v2415 = vpop.f32.mrb[0].mxu0
        %v2416 = vadd.f32 0.0, %v2415
        %v2417 = vpop.f32.mrb[0].mxu0
        %2418 = vdwg.mxu0
        %2419 = vrot.lane.b32.xlu0 %v1086, 64
        %v2420 = vpop.permute.xlu0 %2419
        %v2423 = vsel %vm1278, %v2369, 0
        %2425 = vmatprep.subr.bf16.mxu0 0
        %2426 = vmatpush1.bf16.msra.mxu0 %v2420
        %2427 = vmatprep.subr.bf16.mxu0 0
        %2428 = vmatpush1.bf16.msra.mxu0 0
        %2429 = vmatprep.subr.bf16.mxu0 0
        %2430 = vmatpush1.bf16.msra.mxu0 0
        %2431 = vmatprep.subr.bf16.mxu0 0
        %2432 = vmatpush1.bf16.msra.mxu0 0
        %2433 = vmatprep.subr.bf16.mxu0 0
        %2434 = vmatpush1.bf16.msra.mxu0 0
        %2435 = vmatprep.subr.bf16.mxu0 0
        %2436 = vmatpush1.bf16.msra.mxu0 0
        %2437 = vmatprep.subr.bf16.mxu0 0
        %2438 = vmatpush1.bf16.msra.mxu0 0
        %2439 = vmatprep.subr.bf16.mxu0 0
        %2440 = vmatpush1.bf16.msra.mxu0 0
        %2441 = vmatprep.subr.bf16.mxu0 0
        %2442 = vmatpush1.bf16.msra.mxu0 0
        %2443 = vmatprep.subr.bf16.mxu0 0
        %2444 = vmatpush1.bf16.msra.mxu0 0
        %2445 = vmatprep.subr.bf16.mxu0 0
        %2446 = vmatpush1.bf16.msra.mxu0 0
        %2447 = vmatprep.subr.bf16.mxu0 0
        %2448 = vmatpush1.bf16.msra.mxu0 0
        %2449 = vmatprep.subr.bf16.mxu0 0
        %2450 = vmatpush1.bf16.msra.mxu0 0
        %2451 = vmatprep.subr.bf16.mxu0 0
        %2452 = vmatpush1.bf16.msra.mxu0 0
        %2453 = vmatprep.subr.bf16.mxu0 0
        %2454 = vmatpush1.bf16.msra.mxu0 0
        %2455 = vmatprep.subr.bf16.mxu0 0
        %2456 = vmatpush1.bf16.msra.mxu0 0
        %2457 = vmatprep.mubr.bf16.mxu0 0
        %2458 = vmatmul.mubr.bf16.gmra.mrb[0].mxu0 %v2423
        %v2459 = vpop.f32.mrb[0].mxu0
        %v2460 = vadd.f32 0.0, %v2459
        %v2461 = vpop.f32.mrb[0].mxu0
        %v2462 = vpop.f32.mrb[0].mxu0
        %v2463 = vadd.f32 0.0, %v2462
        %v2464 = vpop.f32.mrb[0].mxu0
        %2465 = vdwg.mxu0
        %2466 = vrot.lane.b32.xlu0 %v1087, 64
        %v2467 = vpop.permute.xlu0 %2466
        %v2470 = vsel %vm1278, %v2370, 0
        %2472 = vmatprep.subr.bf16.mxu0 0
        %2473 = vmatpush1.bf16.msra.mxu0 %v2467
        %2474 = vmatprep.subr.bf16.mxu0 0
        %2475 = vmatpush1.bf16.msra.mxu0 0
        %2476 = vmatprep.subr.bf16.mxu0 0
        %2477 = vmatpush1.bf16.msra.mxu0 0
        %2478 = vmatprep.subr.bf16.mxu0 0
        %2479 = vmatpush1.bf16.msra.mxu0 0
        %2480 = vmatprep.subr.bf16.mxu0 0
        %2481 = vmatpush1.bf16.msra.mxu0 0
        %2482 = vmatprep.subr.bf16.mxu0 0
        %2483 = vmatpush1.bf16.msra.mxu0 0
        %2484 = vmatprep.subr.bf16.mxu0 0
        %2485 = vmatpush1.bf16.msra.mxu0 0
        %2486 = vmatprep.subr.bf16.mxu0 0
        %2487 = vmatpush1.bf16.msra.mxu0 0
        %2488 = vmatprep.subr.bf16.mxu0 0
        %2489 = vmatpush1.bf16.msra.mxu0 0
        %2490 = vmatprep.subr.bf16.mxu0 0
        %2491 = vmatpush1.bf16.msra.mxu0 0
        %2492 = vmatprep.subr.bf16.mxu0 0
        %2493 = vmatpush1.bf16.msra.mxu0 0
        %2494 = vmatprep.subr.bf16.mxu0 0
        %2495 = vmatpush1.bf16.msra.mxu0 0
        %2496 = vmatprep.subr.bf16.mxu0 0
        %2497 = vmatpush1.bf16.msra.mxu0 0
        %2498 = vmatprep.subr.bf16.mxu0 0
        %2499 = vmatpush1.bf16.msra.mxu0 0
        %2500 = vmatprep.subr.bf16.mxu0 0
        %2501 = vmatpush1.bf16.msra.mxu0 0
        %2502 = vmatprep.subr.bf16.mxu0 0
        %2503 = vmatpush1.bf16.msra.mxu0 0
        %2504 = vmatprep.mubr.bf16.mxu0 0
        %2505 = vmatmul.mubr.bf16.gmra.mrb[0].mxu0 %v2470
        %v2506 = vpop.f32.mrb[0].mxu0
        %v2507 = vadd.f32 0.0, %v2506
        %v2508 = vpop.f32.mrb[0].mxu0
        %v2509 = vpop.f32.mrb[0].mxu0
        %v2510 = vadd.f32 0.0, %v2509
        %v2511 = vpop.f32.mrb[0].mxu0
        %2512 = vdwg.mxu0
        %2513 = vrot.lane.b32.xlu0 %v1088, 64
        %v2514 = vpop.permute.xlu0 %2513
        %v2517 = vsel %vm1278, %v2371, 0
        %2519 = vmatprep.subr.bf16.mxu0 0
        %2520 = vmatpush1.bf16.msra.mxu0 %v2514
        %2521 = vmatprep.subr.bf16.mxu0 0
        %2522 = vmatpush1.bf16.msra.mxu0 0
        %2523 = vmatprep.subr.bf16.mxu0 0
        %2524 = vmatpush1.bf16.msra.mxu0 0
        %2525 = vmatprep.subr.bf16.mxu0 0
        %2526 = vmatpush1.bf16.msra.mxu0 0
        %2527 = vmatprep.subr.bf16.mxu0 0
        %2528 = vmatpush1.bf16.msra.mxu0 0
        %2529 = vmatprep.subr.bf16.mxu0 0
        %2530 = vmatpush1.bf16.msra.mxu0 0
        %2531 = vmatprep.subr.bf16.mxu0 0
        %2532 = vmatpush1.bf16.msra.mxu0 0
        %2533 = vmatprep.subr.bf16.mxu0 0
        %2534 = vmatpush1.bf16.msra.mxu0 0
        %2535 = vmatprep.subr.bf16.mxu0 0
        %2536 = vmatpush1.bf16.msra.mxu0 0
        %2537 = vmatprep.subr.bf16.mxu0 0
        %2538 = vmatpush1.bf16.msra.mxu0 0
        %2539 = vmatprep.subr.bf16.mxu0 0
        %2540 = vmatpush1.bf16.msra.mxu0 0
        %2541 = vmatprep.subr.bf16.mxu0 0
        %2542 = vmatpush1.bf16.msra.mxu0 0
        %2543 = vmatprep.subr.bf16.mxu0 0
        %2544 = vmatpush1.bf16.msra.mxu0 0
        %2545 = vmatprep.subr.bf16.mxu0 0
        %2546 = vmatpush1.bf16.msra.mxu0 0
        %2547 = vmatprep.subr.bf16.mxu0 0
        %2548 = vmatpush1.bf16.msra.mxu0 0
        %2549 = vmatprep.subr.bf16.mxu0 0
        %2550 = vmatpush1.bf16.msra.mxu0 0
        %2551 = vmatprep.mubr.bf16.mxu0 0
        %2552 = vmatmul.mubr.bf16.gmra.mrb[0].mxu0 %v2517
        %v2553 = vpop.f32.mrb[0].mxu0
        %v2554 = vadd.f32 0.0, %v2553
        %v2555 = vpop.f32.mrb[0].mxu0
        %v2556 = vpop.f32.mrb[0].mxu0
        %v2557 = vadd.f32 0.0, %v2556
        %v2558 = vpop.f32.mrb[0].mxu0
        %2559 = vdwg.mxu0
        %v2560 = vpack.c.bf16 %v2416, %v2413
        %v2561 = vpack.c.bf16 %v2463, %v2460
        %v2562 = vpack.c.bf16 %v2510, %v2507
        %v2563 = vpack.c.bf16 %v2557, %v2554
        %2568 = vrot.lane.b32.xlu0 %v2560, 64
        %v2569 = vpop.permute.xlu0 %2568
        %2570 = vrot.lane.b32.xlu0 %v2561, 64
        %v2571 = vpop.permute.xlu0 %2570
        %2572 = vrot.lane.b32.xlu0 %v2562, 64
        %v2573 = vpop.permute.xlu0 %2572
        %2574 = vrot.lane.b32.xlu0 %v2563, 64
        %v2575 = vpop.permute.xlu0 %2574
        %vm2580 = vcmask 785920
        %2581 = vst.msk [vmem:[#allocation3] sm:$0xff] %vm2580, %v2569
        %2582 = vst.msk [vmem:[#allocation3 + $0x8] sm:$0xff] %vm2580, %v2571
        %2583 = vst.msk [vmem:[#allocation3 + $0x10] sm:$0xff] %vm2580, %v2573
        %2584 = vst.msk [vmem:[#allocation3 + $0x18] sm:$0xff] %vm2580, %v2575
        %2585 = vrot.lane.b32.xlu0 %v1077, 32
        %v2586 = vpop.permute.xlu0 %2585
        %2587 = vrot.lane.b32.xlu0 %v1081, 32
        %v2588 = vpop.permute.xlu0 %2587
        %v2590 = vsel %vm1089, %v2586, 0
        %v2593 = vsel %vm1089, %v2588, 0
        %2595 = vmatprep.subr.bf16.mxu0 0
        %2596 = vmatpush1.bf16.xpose.msra.mxu0 %v2593
        %2597 = vmatprep.subr.bf16.mxu0 0
        %2598 = vmatpush1.bf16.xpose.msra.mxu0 0
        %2599 = vmatprep.subr.bf16.mxu0 0
        %2600 = vmatpush1.bf16.xpose.msra.mxu0 0
        %2601 = vmatprep.subr.bf16.mxu0 0
        %2602 = vmatpush1.bf16.xpose.msra.mxu0 0
        %2603 = vmatprep.subr.bf16.mxu0 0
        %2604 = vmatpush1.bf16.xpose.msra.mxu0 0
        %2605 = vmatprep.subr.bf16.mxu0 0
        %2606 = vmatpush1.bf16.xpose.msra.mxu0 0
        %2607 = vmatprep.subr.bf16.mxu0 0
        %2608 = vmatpush1.bf16.xpose.msra.mxu0 0
        %2609 = vmatprep.subr.bf16.mxu0 0
        %2610 = vmatpush1.bf16.xpose.msra.mxu0 0
        %2611 = vmatprep.subr.bf16.mxu0 0
        %2612 = vmatpush1.bf16.xpose.msra.mxu0 0
        %2613 = vmatprep.subr.bf16.mxu0 0
        %2614 = vmatpush1.bf16.xpose.msra.mxu0 0
        %2615 = vmatprep.subr.bf16.mxu0 0
        %2616 = vmatpush1.bf16.xpose.msra.mxu0 0
        %2617 = vmatprep.subr.bf16.mxu0 0
        %2618 = vmatpush1.bf16.xpose.msra.mxu0 0
        %2619 = vmatprep.subr.bf16.mxu0 0
        %2620 = vmatpush1.bf16.xpose.msra.mxu0 0
        %2621 = vmatprep.subr.bf16.mxu0 0
        %2622 = vmatpush1.bf16.xpose.msra.mxu0 0
        %2623 = vmatprep.subr.bf16.mxu0 0
        %2624 = vmatpush1.bf16.xpose.msra.mxu0 0
        %2625 = vmatprep.subr.bf16.mxu0 0
        %2626 = vmatpush1.bf16.xpose.msra.mxu0 0
        %2627 = vmatprep.mubr.bf16.mxu0 0
        %2628 = vmatmul.mubr.bf16.gmra.mrb[0].mxu0 %v2590
        %v2629 = vpop.f32.mrb[0].mxu0
        %v2630 = vadd.f32 0.0, %v2629
        %v2631 = vpop.f32.mrb[0].mxu0
        %v2632 = vpop.f32.mrb[0].mxu0
        %v2633 = vadd.f32 0.0, %v2632
        %v2634 = vpop.f32.mrb[0].mxu0
        %2635 = vdwg.mxu0
        %2636 = vrot.lane.b32.xlu0 %v1078, 32
        %v2637 = vpop.permute.xlu0 %2636
        %2638 = vrot.lane.b32.xlu0 %v1082, 32
        %v2639 = vpop.permute.xlu0 %2638
        %v2641 = vsel %vm1089, %v2637, 0
        %v2644 = vsel %vm1089, %v2639, 0
        %2646 = vmatprep.subr.bf16.mxu0 0
        %2647 = vmatpush1.bf16.xpose.msra.mxu0 %v2644
        %2648 = vmatprep.subr.bf16.mxu0 0
        %2649 = vmatpush1.bf16.xpose.msra.mxu0 0
        %2650 = vmatprep.subr.bf16.mxu0 0
        %2651 = vmatpush1.bf16.xpose.msra.mxu0 0
        %2652 = vmatprep.subr.bf16.mxu0 0
        %2653 = vmatpush1.bf16.xpose.msra.mxu0 0
        %2654 = vmatprep.subr.bf16.mxu0 0
        %2655 = vmatpush1.bf16.xpose.msra.mxu0 0
        %2656 = vmatprep.subr.bf16.mxu0 0
        %2657 = vmatpush1.bf16.xpose.msra.mxu0 0
        %2658 = vmatprep.subr.bf16.mxu0 0
        %2659 = vmatpush1.bf16.xpose.msra.mxu0 0
        %2660 = vmatprep.subr.bf16.mxu0 0
        %2661 = vmatpush1.bf16.xpose.msra.mxu0 0
        %2662 = vmatprep.subr.bf16.mxu0 0
        %2663 = vmatpush1.bf16.xpose.msra.mxu0 0
        %2664 = vmatprep.subr.bf16.mxu0 0
        %2665 = vmatpush1.bf16.xpose.msra.mxu0 0
        %2666 = vmatprep.subr.bf16.mxu0 0
        %2667 = vmatpush1.bf16.xpose.msra.mxu0 0
        %2668 = vmatprep.subr.bf16.mxu0 0
        %2669 = vmatpush1.bf16.xpose.msra.mxu0 0
        %2670 = vmatprep.subr.bf16.mxu0 0
        %2671 = vmatpush1.bf16.xpose.msra.mxu0 0
        %2672 = vmatprep.subr.bf16.mxu0 0
        %2673 = vmatpush1.bf16.xpose.msra.mxu0 0
        %2674 = vmatprep.subr.bf16.mxu0 0
        %2675 = vmatpush1.bf16.xpose.msra.mxu0 0
        %2676 = vmatprep.subr.bf16.mxu0 0
        %2677 = vmatpush1.bf16.xpose.msra.mxu0 0
        %2678 = vmatprep.mubr.bf16.mxu0 0
        %2679 = vmatmul.mubr.bf16.gmra.mrb[0].mxu0 %v2641
        %v2680 = vpop.f32.mrb[0].mxu0
        %v2681 = vadd.f32 0.0, %v2680
        %v2682 = vpop.f32.mrb[0].mxu0
        %v2683 = vpop.f32.mrb[0].mxu0
        %v2684 = vadd.f32 0.0, %v2683
        %v2685 = vpop.f32.mrb[0].mxu0
        %2686 = vdwg.mxu0
        %2687 = vrot.lane.b32.xlu0 %v1079, 32
        %v2688 = vpop.permute.xlu0 %2687
        %2689 = vrot.lane.b32.xlu0 %v1083, 32
        %v2690 = vpop.permute.xlu0 %2689
        %v2692 = vsel %vm1089, %v2688, 0
        %v2695 = vsel %vm1089, %v2690, 0
        %2697 = vmatprep.subr.bf16.mxu0 0
        %2698 = vmatpush1.bf16.xpose.msra.mxu0 %v2695
        %2699 = vmatprep.subr.bf16.mxu0 0
        %2700 = vmatpush1.bf16.xpose.msra.mxu0 0
        %2701 = vmatprep.subr.bf16.mxu0 0
        %2702 = vmatpush1.bf16.xpose.msra.mxu0 0
        %2703 = vmatprep.subr.bf16.mxu0 0
        %2704 = vmatpush1.bf16.xpose.msra.mxu0 0
        %2705 = vmatprep.subr.bf16.mxu0 0
        %2706 = vmatpush1.bf16.xpose.msra.mxu0 0
        %2707 = vmatprep.subr.bf16.mxu0 0
        %2708 = vmatpush1.bf16.xpose.msra.mxu0 0
        %2709 = vmatprep.subr.bf16.mxu0 0
        %2710 = vmatpush1.bf16.xpose.msra.mxu0 0
        %2711 = vmatprep.subr.bf16.mxu0 0
        %2712 = vmatpush1.bf16.xpose.msra.mxu0 0
        %2713 = vmatprep.subr.bf16.mxu0 0
        %2714 = vmatpush1.bf16.xpose.msra.mxu0 0
        %2715 = vmatprep.subr.bf16.mxu0 0
        %2716 = vmatpush1.bf16.xpose.msra.mxu0 0
        %2717 = vmatprep.subr.bf16.mxu0 0
        %2718 = vmatpush1.bf16.xpose.msra.mxu0 0
        %2719 = vmatprep.subr.bf16.mxu0 0
        %2720 = vmatpush1.bf16.xpose.msra.mxu0 0
        %2721 = vmatprep.subr.bf16.mxu0 0
        %2722 = vmatpush1.bf16.xpose.msra.mxu0 0
        %2723 = vmatprep.subr.bf16.mxu0 0
        %2724 = vmatpush1.bf16.xpose.msra.mxu0 0
        %2725 = vmatprep.subr.bf16.mxu0 0
        %2726 = vmatpush1.bf16.xpose.msra.mxu0 0
        %2727 = vmatprep.subr.bf16.mxu0 0
        %2728 = vmatpush1.bf16.xpose.msra.mxu0 0
        %2729 = vmatprep.mubr.bf16.mxu0 0
        %2730 = vmatmul.mubr.bf16.gmra.mrb[0].mxu0 %v2692
        %v2731 = vpop.f32.mrb[0].mxu0
        %v2732 = vadd.f32 0.0, %v2731
        %v2733 = vpop.f32.mrb[0].mxu0
        %v2734 = vpop.f32.mrb[0].mxu0
        %v2735 = vadd.f32 0.0, %v2734
        %v2736 = vpop.f32.mrb[0].mxu0
        %2737 = vdwg.mxu0
        %2738 = vrot.lane.b32.xlu0 %v1080, 32
        %v2739 = vpop.permute.xlu0 %2738
        %2740 = vrot.lane.b32.xlu0 %v1084, 32
        %v2741 = vpop.permute.xlu0 %2740
        %v2743 = vsel %vm1089, %v2739, 0
        %v2746 = vsel %vm1089, %v2741, 0
        %2748 = vmatprep.subr.bf16.mxu0 0
        %2749 = vmatpush1.bf16.xpose.msra.mxu0 %v2746
        %2750 = vmatprep.subr.bf16.mxu0 0
        %2751 = vmatpush1.bf16.xpose.msra.mxu0 0
        %2752 = vmatprep.subr.bf16.mxu0 0
        %2753 = vmatpush1.bf16.xpose.msra.mxu0 0
        %2754 = vmatprep.subr.bf16.mxu0 0
        %2755 = vmatpush1.bf16.xpose.msra.mxu0 0
        %2756 = vmatprep.subr.bf16.mxu0 0
        %2757 = vmatpush1.bf16.xpose.msra.mxu0 0
        %2758 = vmatprep.subr.bf16.mxu0 0
        %2759 = vmatpush1.bf16.xpose.msra.mxu0 0
        %2760 = vmatprep.subr.bf16.mxu0 0
        %2761 = vmatpush1.bf16.xpose.msra.mxu0 0
        %2762 = vmatprep.subr.bf16.mxu0 0
        %2763 = vmatpush1.bf16.xpose.msra.mxu0 0
        %2764 = vmatprep.subr.bf16.mxu0 0
        %2765 = vmatpush1.bf16.xpose.msra.mxu0 0
        %2766 = vmatprep.subr.bf16.mxu0 0
        %2767 = vmatpush1.bf16.xpose.msra.mxu0 0
        %2768 = vmatprep.subr.bf16.mxu0 0
        %2769 = vmatpush1.bf16.xpose.msra.mxu0 0
        %2770 = vmatprep.subr.bf16.mxu0 0
        %2771 = vmatpush1.bf16.xpose.msra.mxu0 0
        %2772 = vmatprep.subr.bf16.mxu0 0
        %2773 = vmatpush1.bf16.xpose.msra.mxu0 0
        %2774 = vmatprep.subr.bf16.mxu0 0
        %2775 = vmatpush1.bf16.xpose.msra.mxu0 0
        %2776 = vmatprep.subr.bf16.mxu0 0
        %2777 = vmatpush1.bf16.xpose.msra.mxu0 0
        %2778 = vmatprep.subr.bf16.mxu0 0
        %2779 = vmatpush1.bf16.xpose.msra.mxu0 0
        %2780 = vmatprep.mubr.bf16.mxu0 0
        %2781 = vmatmul.mubr.bf16.gmra.mrb[0].mxu0 %v2743
        %v2782 = vpop.f32.mrb[0].mxu0
        %v2783 = vadd.f32 0.0, %v2782
        %v2784 = vpop.f32.mrb[0].mxu0
        %v2785 = vpop.f32.mrb[0].mxu0
        %v2786 = vadd.f32 0.0, %v2785
        %v2787 = vpop.f32.mrb[0].mxu0
        %2788 = vdwg.mxu0
        %v2789 = vsel %vm1278, %v2630, -inf
        %2790 = vmax.xlane.f32.xlu0 %v2789
        %v2791 = vpop.xlane.xlu0 %2790
        %v2792 = vsel %vm1278, %v2633, -inf
        %2793 = vmax.xlane.f32.xlu0 %v2792
        %v2794 = vpop.xlane.xlu0 %2793
        %v2795 = vsel %vm1278, %v2681, -inf
        %2796 = vmax.xlane.f32.xlu0 %v2795
        %v2797 = vpop.xlane.xlu0 %2796
        %v2798 = vsel %vm1278, %v2684, -inf
        %2799 = vmax.xlane.f32.xlu0 %v2798
        %v2800 = vpop.xlane.xlu0 %2799
        %v2801 = vsel %vm1278, %v2732, -inf
        %2802 = vmax.xlane.f32.xlu0 %v2801
        %v2803 = vpop.xlane.xlu0 %2802
        %v2804 = vsel %vm1278, %v2735, -inf
        %2805 = vmax.xlane.f32.xlu0 %v2804
        %v2806 = vpop.xlane.xlu0 %2805
        %v2807 = vsel %vm1278, %v2783, -inf
        %2808 = vmax.xlane.f32.xlu0 %v2807
        %v2809 = vpop.xlane.xlu0 %2808
        %v2810 = vsel %vm1278, %v2786, -inf
        %2811 = vmax.xlane.f32.xlu0 %v2810
        %v2812 = vpop.xlane.xlu0 %2811
        %v2813 = vsub.f32 %v2630, %v2791
        %v2814 = vsub.f32 %v2633, %v2794
        %v2815 = vsub.f32 %v2681, %v2797
        %v2816 = vsub.f32 %v2684, %v2800
        %v2817 = vsub.f32 %v2732, %v2803
        %v2818 = vsub.f32 %v2735, %v2806
        %v2819 = vsub.f32 %v2783, %v2809
        %v2820 = vsub.f32 %v2786, %v2812
        %v2821 = vmul.f32 %v2813, 1.442695
        %v2822 = vpow.pop %v2821
        %v2823 = vmul.f32 %v2814, 1.442695
        %v2824 = vpow.pop %v2823
        %v2825 = vmul.f32 %v2815, 1.442695
        %v2826 = vpow.pop %v2825
        %v2827 = vmul.f32 %v2816, 1.442695
        %v2828 = vpow.pop %v2827
        %v2829 = vmul.f32 %v2817, 1.442695
        %v2830 = vpow.pop %v2829
        %v2831 = vmul.f32 %v2818, 1.442695
        %v2832 = vpow.pop %v2831
        %v2833 = vmul.f32 %v2819, 1.442695
        %v2834 = vpow.pop %v2833
        %v2835 = vmul.f32 %v2820, 1.442695
        %v2836 = vpow.pop %v2835
        %v2837 = vsel %vm1278, %v2822, 0.0
        %2838 = vadd.xlane.f32.xlu0 %v2837
        %v2839 = vpop.xlane.xlu0 %2838
        %v2840 = vsel %vm1278, %v2824, 0.0
        %2841 = vadd.xlane.f32.xlu0 %v2840
        %v2842 = vpop.xlane.xlu0 %2841
        %v2843 = vsel %vm1278, %v2826, 0.0
        %2844 = vadd.xlane.f32.xlu0 %v2843
        %v2845 = vpop.xlane.xlu0 %2844
        %v2846 = vsel %vm1278, %v2828, 0.0
        %2847 = vadd.xlane.f32.xlu0 %v2846
        %v2848 = vpop.xlane.xlu0 %2847
        %v2849 = vsel %vm1278, %v2830, 0.0
        %2850 = vadd.xlane.f32.xlu0 %v2849
        %v2851 = vpop.xlane.xlu0 %2850
        %v2852 = vsel %vm1278, %v2832, 0.0
        %2853 = vadd.xlane.f32.xlu0 %v2852
        %v2854 = vpop.xlane.xlu0 %2853
        %v2855 = vsel %vm1278, %v2834, 0.0
        %2856 = vadd.xlane.f32.xlu0 %v2855
        %v2857 = vpop.xlane.xlu0 %2856
        %v2858 = vsel %vm1278, %v2836, 0.0
        %2859 = vadd.xlane.f32.xlu0 %v2858
        %v2860 = vpop.xlane.xlu0 %2859
        %v2861 = vrcp.pop %v2839
        %v2862 = vrcp.pop %v2842
        %v2863 = vrcp.pop %v2845
        %v2864 = vrcp.pop %v2848
        %v2865 = vrcp.pop %v2851
        %v2866 = vrcp.pop %v2854
        %v2867 = vrcp.pop %v2857
        %v2868 = vrcp.pop %v2860
        %v2869 = vmul.f32 %v2822, %v2861
        %v2870 = vmul.f32 %v2824, %v2862
        %v2871 = vmul.f32 %v2826, %v2863
        %v2872 = vmul.f32 %v2828, %v2864
        %v2873 = vmul.f32 %v2830, %v2865
        %v2874 = vmul.f32 %v2832, %v2866
        %v2875 = vmul.f32 %v2834, %v2867
        %v2876 = vmul.f32 %v2836, %v2868
        %v2877 = vpack.c.bf16 %v2870, %v2869
        %v2878 = vpack.c.bf16 %v2872, %v2871
        %v2879 = vpack.c.bf16 %v2874, %v2873
        %v2880 = vpack.c.bf16 %v2876, %v2875
        %2881 = vrot.lane.b32.xlu0 %v1085, 32
        %v2882 = vpop.permute.xlu0 %2881
        %v2885 = vsel %vm1278, %v2877, 0
        %2887 = vmatprep.subr.bf16.mxu0 0
        %2888 = vmatpush1.bf16.msra.mxu0 %v2882
        %2889 = vmatprep.subr.bf16.mxu0 0
        %2890 = vmatpush1.bf16.msra.mxu0 0
        %2891 = vmatprep.subr.bf16.mxu0 0
        %2892 = vmatpush1.bf16.msra.mxu0 0
        %2893 = vmatprep.subr.bf16.mxu0 0
        %2894 = vmatpush1.bf16.msra.mxu0 0
        %2895 = vmatprep.subr.bf16.mxu0 0
        %2896 = vmatpush1.bf16.msra.mxu0 0
        %2897 = vmatprep.subr.bf16.mxu0 0
        %2898 = vmatpush1.bf16.msra.mxu0 0
        %2899 = vmatprep.subr.bf16.mxu0 0
        %2900 = vmatpush1.bf16.msra.mxu0 0
        %2901 = vmatprep.subr.bf16.mxu0 0
        %2902 = vmatpush1.bf16.msra.mxu0 0
        %2903 = vmatprep.subr.bf16.mxu0 0
        %2904 = vmatpush1.bf16.msra.mxu0 0
        %2905 = vmatprep.subr.bf16.mxu0 0
        %2906 = vmatpush1.bf16.msra.mxu0 0
        %2907 = vmatprep.subr.bf16.mxu0 0
        %2908 = vmatpush1.bf16.msra.mxu0 0
        %2909 = vmatprep.subr.bf16.mxu0 0
        %2910 = vmatpush1.bf16.msra.mxu0 0
        %2911 = vmatprep.subr.bf16.mxu0 0
        %2912 = vmatpush1.bf16.msra.mxu0 0
        %2913 = vmatprep.subr.bf16.mxu0 0
        %2914 = vmatpush1.bf16.msra.mxu0 0
        %2915 = vmatprep.subr.bf16.mxu0 0
        %2916 = vmatpush1.bf16.msra.mxu0 0
        %2917 = vmatprep.subr.bf16.mxu0 0
        %2918 = vmatpush1.bf16.msra.mxu0 0
        %2919 = vmatprep.mubr.bf16.mxu0 0
        %2920 = vmatmul.mubr.bf16.gmra.mrb[0].mxu0 %v2885
        %v2921 = vpop.f32.mrb[0].mxu0
        %v2922 = vadd.f32 0.0, %v2921
        %v2923 = vpop.f32.mrb[0].mxu0
        %v2924 = vpop.f32.mrb[0].mxu0
        %v2925 = vadd.f32 0.0, %v2924
        %v2926 = vpop.f32.mrb[0].mxu0
        %2927 = vdwg.mxu0
        %2928 = vrot.lane.b32.xlu0 %v1086, 32
        %v2929 = vpop.permute.xlu0 %2928
        %v2932 = vsel %vm1278, %v2878, 0
        %2934 = vmatprep.subr.bf16.mxu0 0
        %2935 = vmatpush1.bf16.msra.mxu0 %v2929
        %2936 = vmatprep.subr.bf16.mxu0 0
        %2937 = vmatpush1.bf16.msra.mxu0 0
        %2938 = vmatprep.subr.bf16.mxu0 0
        %2939 = vmatpush1.bf16.msra.mxu0 0
        %2940 = vmatprep.subr.bf16.mxu0 0
        %2941 = vmatpush1.bf16.msra.mxu0 0
        %2942 = vmatprep.subr.bf16.mxu0 0
        %2943 = vmatpush1.bf16.msra.mxu0 0
        %2944 = vmatprep.subr.bf16.mxu0 0
        %2945 = vmatpush1.bf16.msra.mxu0 0
        %2946 = vmatprep.subr.bf16.mxu0 0
        %2947 = vmatpush1.bf16.msra.mxu0 0
        %2948 = vmatprep.subr.bf16.mxu0 0
        %2949 = vmatpush1.bf16.msra.mxu0 0
        %2950 = vmatprep.subr.bf16.mxu0 0
        %2951 = vmatpush1.bf16.msra.mxu0 0
        %2952 = vmatprep.subr.bf16.mxu0 0
        %2953 = vmatpush1.bf16.msra.mxu0 0
        %2954 = vmatprep.subr.bf16.mxu0 0
        %2955 = vmatpush1.bf16.msra.mxu0 0
        %2956 = vmatprep.subr.bf16.mxu0 0
        %2957 = vmatpush1.bf16.msra.mxu0 0
        %2958 = vmatprep.subr.bf16.mxu0 0
        %2959 = vmatpush1.bf16.msra.mxu0 0
        %2960 = vmatprep.subr.bf16.mxu0 0
        %2961 = vmatpush1.bf16.msra.mxu0 0
        %2962 = vmatprep.subr.bf16.mxu0 0
        %2963 = vmatpush1.bf16.msra.mxu0 0
        %2964 = vmatprep.subr.bf16.mxu0 0
        %2965 = vmatpush1.bf16.msra.mxu0 0
        %2966 = vmatprep.mubr.bf16.mxu0 0
        %2967 = vmatmul.mubr.bf16.gmra.mrb[0].mxu0 %v2932
        %v2968 = vpop.f32.mrb[0].mxu0
        %v2969 = vadd.f32 0.0, %v2968
        %v2970 = vpop.f32.mrb[0].mxu0
        %v2971 = vpop.f32.mrb[0].mxu0
        %v2972 = vadd.f32 0.0, %v2971
        %v2973 = vpop.f32.mrb[0].mxu0
        %2974 = vdwg.mxu0
        %2975 = vrot.lane.b32.xlu0 %v1087, 32
        %v2976 = vpop.permute.xlu0 %2975
        %v2979 = vsel %vm1278, %v2879, 0
        %2981 = vmatprep.subr.bf16.mxu0 0
        %2982 = vmatpush1.bf16.msra.mxu0 %v2976
        %2983 = vmatprep.subr.bf16.mxu0 0
        %2984 = vmatpush1.bf16.msra.mxu0 0
        %2985 = vmatprep.subr.bf16.mxu0 0
        %2986 = vmatpush1.bf16.msra.mxu0 0
        %2987 = vmatprep.subr.bf16.mxu0 0
        %2988 = vmatpush1.bf16.msra.mxu0 0
        %2989 = vmatprep.subr.bf16.mxu0 0
        %2990 = vmatpush1.bf16.msra.mxu0 0
        %2991 = vmatprep.subr.bf16.mxu0 0
        %2992 = vmatpush1.bf16.msra.mxu0 0
        %2993 = vmatprep.subr.bf16.mxu0 0
        %2994 = vmatpush1.bf16.msra.mxu0 0
        %2995 = vmatprep.subr.bf16.mxu0 0
        %2996 = vmatpush1.bf16.msra.mxu0 0
        %2997 = vmatprep.subr.bf16.mxu0 0
        %2998 = vmatpush1.bf16.msra.mxu0 0
        %2999 = vmatprep.subr.bf16.mxu0 0
        %3000 = vmatpush1.bf16.msra.mxu0 0
        %3001 = vmatprep.subr.bf16.mxu0 0
        %3002 = vmatpush1.bf16.msra.mxu0 0
        %3003 = vmatprep.subr.bf16.mxu0 0
        %3004 = vmatpush1.bf16.msra.mxu0 0
        %3005 = vmatprep.subr.bf16.mxu0 0
        %3006 = vmatpush1.bf16.msra.mxu0 0
        %3007 = vmatprep.subr.bf16.mxu0 0
        %3008 = vmatpush1.bf16.msra.mxu0 0
        %3009 = vmatprep.subr.bf16.mxu0 0
        %3010 = vmatpush1.bf16.msra.mxu0 0
        %3011 = vmatprep.subr.bf16.mxu0 0
        %3012 = vmatpush1.bf16.msra.mxu0 0
        %3013 = vmatprep.mubr.bf16.mxu0 0
        %3014 = vmatmul.mubr.bf16.gmra.mrb[0].mxu0 %v2979
        %v3015 = vpop.f32.mrb[0].mxu0
        %v3016 = vadd.f32 0.0, %v3015
        %v3017 = vpop.f32.mrb[0].mxu0
        %v3018 = vpop.f32.mrb[0].mxu0
        %v3019 = vadd.f32 0.0, %v3018
        %v3020 = vpop.f32.mrb[0].mxu0
        %3021 = vdwg.mxu0
        %3022 = vrot.lane.b32.xlu0 %v1088, 32
        %v3023 = vpop.permute.xlu0 %3022
        %v3026 = vsel %vm1278, %v2880, 0
        %3028 = vmatprep.subr.bf16.mxu0 0
        %3029 = vmatpush1.bf16.msra.mxu0 %v3023
        %3030 = vmatprep.subr.bf16.mxu0 0
        %3031 = vmatpush1.bf16.msra.mxu0 0
        %3032 = vmatprep.subr.bf16.mxu0 0
        %3033 = vmatpush1.bf16.msra.mxu0 0
        %3034 = vmatprep.subr.bf16.mxu0 0
        %3035 = vmatpush1.bf16.msra.mxu0 0
        %3036 = vmatprep.subr.bf16.mxu0 0
        %3037 = vmatpush1.bf16.msra.mxu0 0
        %3038 = vmatprep.subr.bf16.mxu0 0
        %3039 = vmatpush1.bf16.msra.mxu0 0
        %3040 = vmatprep.subr.bf16.mxu0 0
        %3041 = vmatpush1.bf16.msra.mxu0 0
        %3042 = vmatprep.subr.bf16.mxu0 0
        %3043 = vmatpush1.bf16.msra.mxu0 0
        %3044 = vmatprep.subr.bf16.mxu0 0
        %3045 = vmatpush1.bf16.msra.mxu0 0
        %3046 = vmatprep.subr.bf16.mxu0 0
        %3047 = vmatpush1.bf16.msra.mxu0 0
        %3048 = vmatprep.subr.bf16.mxu0 0
        %3049 = vmatpush1.bf16.msra.mxu0 0
        %3050 = vmatprep.subr.bf16.mxu0 0
        %3051 = vmatpush1.bf16.msra.mxu0 0
        %3052 = vmatprep.subr.bf16.mxu0 0
        %3053 = vmatpush1.bf16.msra.mxu0 0
        %3054 = vmatprep.subr.bf16.mxu0 0
        %3055 = vmatpush1.bf16.msra.mxu0 0
        %3056 = vmatprep.subr.bf16.mxu0 0
        %3057 = vmatpush1.bf16.msra.mxu0 0
        %3058 = vmatprep.subr.bf16.mxu0 0
        %3059 = vmatpush1.bf16.msra.mxu0 0
        %3060 = vmatprep.mubr.bf16.mxu0 0
        %3061 = vmatmul.mubr.bf16.gmra.mrb[0].mxu0 %v3026
        %v3062 = vpop.f32.mrb[0].mxu0
        %v3063 = vadd.f32 0.0, %v3062
        %v3064 = vpop.f32.mrb[0].mxu0
        %v3065 = vpop.f32.mrb[0].mxu0
        %v3066 = vadd.f32 0.0, %v3065
        %v3067 = vpop.f32.mrb[0].mxu0
        %3068 = vdwg.mxu0
        %v3069 = vpack.c.bf16 %v2925, %v2922
        %v3070 = vpack.c.bf16 %v2972, %v2969
        %v3071 = vpack.c.bf16 %v3019, %v3016
        %v3072 = vpack.c.bf16 %v3066, %v3063
        %3077 = vrot.lane.b32.xlu0 %v3069, 96
        %v3078 = vpop.permute.xlu0 %3077
        %3079 = vrot.lane.b32.xlu0 %v3070, 96
        %v3080 = vpop.permute.xlu0 %3079
        %3081 = vrot.lane.b32.xlu0 %v3071, 96
        %v3082 = vpop.permute.xlu0 %3081
        %3083 = vrot.lane.b32.xlu0 %v3072, 96
        %v3084 = vpop.permute.xlu0 %3083
        %vm3089 = vcmask 1048320
        %3090 = vst.msk [vmem:[#allocation3] sm:$0xff] %vm3089, %v3078
        %3091 = vst.msk [vmem:[#allocation3 + $0x8] sm:$0xff] %vm3089, %v3080
        %3092 = vst.msk [vmem:[#allocation3 + $0x10] sm:$0xff] %vm3089, %v3082
        %3093 = vst.msk [vmem:[#allocation3 + $0x18] sm:$0xff] %vm3089, %v3084
        %v3094 = vld [vmem:[#allocation3] sm:$0xff]
        %v3095 = vld [vmem:[#allocation3 + $0x8] sm:$0xff]
        %v3096 = vld [vmem:[#allocation3 + $0x10] sm:$0xff]
        %v3097 = vld [vmem:[#allocation3 + $0x18] sm:$0xff]
        %v3098 = vld [vmem:[%s597] sm:$0xf]
        %v3099 = vld [vmem:[%s597 + $0x4] sm:$0xf]
        %v3100 = vld [vmem:[%s597 + $0x8] sm:$0xf]
        %v3101 = vld [vmem:[%s597 + $0xc] sm:$0xf]
        %v3102 = vld [vmem:[%s597 + $0x10] sm:$0xf]
        %v3103 = vld [vmem:[%s597 + $0x14] sm:$0xf]
        %v3104 = vld [vmem:[%s597 + $0x18] sm:$0xf]
        %v3105 = vld [vmem:[%s597 + $0x1c] sm:$0xf]
        %v3106 = vld [vmem:[%s597 + $0x20] sm:$0xf]
        %v3107 = vld [vmem:[%s597 + $0x24] sm:$0xf]
        %v3108 = vld [vmem:[%s597 + $0x28] sm:$0xf]
        %v3109 = vld [vmem:[%s597 + $0x2c] sm:$0xf]
        %v3110 = vld [vmem:[%s597 + $0x30] sm:$0xf]
        %v3111 = vld [vmem:[%s597 + $0x34] sm:$0xf]
        %v3112 = vld [vmem:[%s597 + $0x38] sm:$0xf]
        %v3113 = vld [vmem:[%s597 + $0x3c] sm:$0xf]
        %v3115 = vlaneseq
        %v3116 = vshrl.u32 %v3115, 7
        %v3117 = vsub.s32 0, %v3116
        %v3118 = vrot.slane %v752, %v3117
        %v3136 = vunpack.c.l.b16 %v3098
        %v3137 = vunpack.c.l.b16 %v3099
        %v3138 = vunpack.c.l.b16 %v3100
        %v3139 = vunpack.c.l.b16 %v3101
        %v3140 = vunpack.c.l.b16 %v3102
        %v3141 = vunpack.c.l.b16 %v3103
        %v3142 = vunpack.c.l.b16 %v3104
        %v3143 = vunpack.c.l.b16 %v3105
        %v3144 = vunpack.c.l.b16 %v3106
        %v3145 = vunpack.c.l.b16 %v3107
        %v3146 = vunpack.c.l.b16 %v3108
        %v3147 = vunpack.c.l.b16 %v3109
        %v3148 = vunpack.c.l.b16 %v3110
        %v3149 = vunpack.c.l.b16 %v3111
        %v3150 = vunpack.c.l.b16 %v3112
        %v3151 = vunpack.c.l.b16 %v3113
        %v3152 = vpack.c.b16 %v3137, %v3136
        %v3153 = vpack.c.b16 %v3139, %v3138
        %v3154 = vpack.c.b16 %v3141, %v3140
        %v3155 = vpack.c.b16 %v3143, %v3142
        %v3156 = vpack.c.b16 %v3145, %v3144
        %v3157 = vpack.c.b16 %v3147, %v3146
        %v3158 = vpack.c.b16 %v3149, %v3148
        %v3159 = vpack.c.b16 %v3151, %v3150
        %3168 = vmatprep.subr.bf16.mxu0 0
        %3169 = vmatpush1.bf16.msra.mxu0 %v3152
        %3170 = vmatprep.subr.bf16.mxu0 0
        %3171 = vmatpush1.bf16.msra.mxu0 %v3153
        %3172 = vmatprep.subr.bf16.mxu0 0
        %3173 = vmatpush1.bf16.msra.mxu0 %v3154
        %3174 = vmatprep.subr.bf16.mxu0 0
        %3175 = vmatpush1.bf16.msra.mxu0 %v3155
        %3176 = vmatprep.subr.bf16.mxu0 0
        %3177 = vmatpush1.bf16.msra.mxu0 %v3156
        %3178 = vmatprep.subr.bf16.mxu0 0
        %3179 = vmatpush1.bf16.msra.mxu0 %v3157
        %3180 = vmatprep.subr.bf16.mxu0 0
        %3181 = vmatpush1.bf16.msra.mxu0 %v3158
        %3182 = vmatprep.subr.bf16.mxu0 0
        %3183 = vmatpush1.bf16.msra.mxu0 %v3159
        %3184 = vmatprep.subr.bf16.mxu0 0
        %3185 = vmatpush1.bf16.msra.mxu0 0
        %3186 = vmatprep.subr.bf16.mxu0 0
        %3187 = vmatpush1.bf16.msra.mxu0 0
        %3188 = vmatprep.subr.bf16.mxu0 0
        %3189 = vmatpush1.bf16.msra.mxu0 0
        %3190 = vmatprep.subr.bf16.mxu0 0
        %3191 = vmatpush1.bf16.msra.mxu0 0
        %3192 = vmatprep.subr.bf16.mxu0 0
        %3193 = vmatpush1.bf16.msra.mxu0 0
        %3194 = vmatprep.subr.bf16.mxu0 0
        %3195 = vmatpush1.bf16.msra.mxu0 0
        %3196 = vmatprep.subr.bf16.mxu0 0
        %3197 = vmatpush1.bf16.msra.mxu0 0
        %3198 = vmatprep.subr.bf16.mxu0 0
        %3199 = vmatpush1.bf16.msra.mxu0 0
        %3200 = vmatprep.mubr.bf16.mxu0 0
        %3201 = vmatmul.mubr.bf16.gmra.mrb[0].mxu0 %v3094
        %v3202 = vpop.f32.mrb[0].mxu0
        %v3203 = vadd.f32 %v3118, %v3202
        %v3204 = vpop.f32.mrb[0].mxu0
        %v3205 = vpop.f32.mrb[0].mxu0
        %v3206 = vadd.f32 %v3118, %v3205
        %v3207 = vpop.f32.mrb[0].mxu0
        %3208 = vmatprep.mubr.bf16.mxu0 0
        %3209 = vmatmul.mubr.bf16.gmra.mrb[0].mxu0 %v3095
        %v3210 = vpop.f32.mrb[0].mxu0
        %v3211 = vadd.f32 %v3118, %v3210
        %v3212 = vpop.f32.mrb[0].mxu0
        %v3213 = vpop.f32.mrb[0].mxu0
        %v3214 = vadd.f32 %v3118, %v3213
        %v3215 = vpop.f32.mrb[0].mxu0
        %3216 = vmatprep.mubr.bf16.mxu0 0
        %3217 = vmatmul.mubr.bf16.gmra.mrb[0].mxu0 %v3096
        %v3218 = vpop.f32.mrb[0].mxu0
        %v3219 = vadd.f32 %v3118, %v3218
        %v3220 = vpop.f32.mrb[0].mxu0
        %v3221 = vpop.f32.mrb[0].mxu0
        %v3222 = vadd.f32 %v3118, %v3221
        %v3223 = vpop.f32.mrb[0].mxu0
        %3224 = vmatprep.mubr.bf16.mxu0 0
        %3225 = vmatmul.mubr.bf16.gmra.mrb[0].mxu0 %v3097
        %v3226 = vpop.f32.mrb[0].mxu0
        %v3227 = vadd.f32 %v3118, %v3226
        %v3228 = vpop.f32.mrb[0].mxu0
        %v3229 = vpop.f32.mrb[0].mxu0
        %v3230 = vadd.f32 %v3118, %v3229
        %v3231 = vpop.f32.mrb[0].mxu0
        %3232 = vdwg.mxu0
        %v3233 = vadd.f32 %v743, %v3203
        %v3234 = vadd.f32 %v744, %v3206
        %v3235 = vadd.f32 %v745, %v3211
        %v3236 = vadd.f32 %v746, %v3214
        %v3237 = vadd.f32 %v747, %v3219
        %v3238 = vadd.f32 %v748, %v3222
        %v3239 = vadd.f32 %v749, %v3227
        %v3240 = vadd.f32 %v750, %v3230
        %3241 = vadd.xlane.f32.xlu0 %v3233
        %v3242 = vpop.xlane.xlu0 %3241
        %3243 = vadd.xlane.f32.xlu0 %v3234
        %v3244 = vpop.xlane.xlu0 %3243
        %3245 = vadd.xlane.f32.xlu0 %v3235
        %v3246 = vpop.xlane.xlu0 %3245
        %3247 = vadd.xlane.f32.xlu0 %v3236
        %v3248 = vpop.xlane.xlu0 %3247
        %3249 = vadd.xlane.f32.xlu0 %v3237
        %v3250 = vpop.xlane.xlu0 %3249
        %3251 = vadd.xlane.f32.xlu0 %v3238
        %v3252 = vpop.xlane.xlu0 %3251
        %3253 = vadd.xlane.f32.xlu0 %v3239
        %v3254 = vpop.xlane.xlu0 %3253
        %3255 = vadd.xlane.f32.xlu0 %v3240
        %v3256 = vpop.xlane.xlu0 %3255
        %v3257 = vrcp.pop 128.0
        %v3258 = vmul.f32 %v3242, %v3257
        %v3259 = vmul.f32 %v3244, %v3257
        %v3260 = vmul.f32 %v3246, %v3257
        %v3261 = vmul.f32 %v3248, %v3257
        %v3262 = vmul.f32 %v3250, %v3257
        %v3263 = vmul.f32 %v3252, %v3257
        %v3264 = vmul.f32 %v3254, %v3257
        %v3265 = vmul.f32 %v3256, %v3257
        %v3266 = vsub.f32 %v3233, %v3258
        %v3267 = vsub.f32 %v3234, %v3259
        %v3268 = vsub.f32 %v3235, %v3260
        %v3269 = vsub.f32 %v3236, %v3261
        %v3270 = vsub.f32 %v3237, %v3262
        %v3271 = vsub.f32 %v3238, %v3263
        %v3272 = vsub.f32 %v3239, %v3264
        %v3273 = vsub.f32 %v3240, %v3265
        %v3274 = vmul.f32 %v3266, %v3266
        %v3275 = vmul.f32 %v3267, %v3267
        %v3276 = vmul.f32 %v3268, %v3268
        %v3277 = vmul.f32 %v3269, %v3269
        %v3278 = vmul.f32 %v3270, %v3270
        %v3279 = vmul.f32 %v3271, %v3271
        %v3280 = vmul.f32 %v3272, %v3272
        %v3281 = vmul.f32 %v3273, %v3273
        %3282 = vadd.xlane.f32.xlu0 %v3274
        %v3283 = vpop.xlane.xlu0 %3282
        %3284 = vadd.xlane.f32.xlu0 %v3275
        %v3285 = vpop.xlane.xlu0 %3284
        %3286 = vadd.xlane.f32.xlu0 %v3276
        %v3287 = vpop.xlane.xlu0 %3286
        %3288 = vadd.xlane.f32.xlu0 %v3277
        %v3289 = vpop.xlane.xlu0 %3288
        %3290 = vadd.xlane.f32.xlu0 %v3278
        %v3291 = vpop.xlane.xlu0 %3290
        %3292 = vadd.xlane.f32.xlu0 %v3279
        %v3293 = vpop.xlane.xlu0 %3292
        %3294 = vadd.xlane.f32.xlu0 %v3280
        %v3295 = vpop.xlane.xlu0 %3294
        %3296 = vadd.xlane.f32.xlu0 %v3281
        %v3297 = vpop.xlane.xlu0 %3296
        %v3298 = vmul.f32 %v3283, %v3257
        %v3299 = vmul.f32 %v3285, %v3257
        %v3300 = vmul.f32 %v3287, %v3257
        %v3301 = vmul.f32 %v3289, %v3257
        %v3302 = vmul.f32 %v3291, %v3257
        %v3303 = vmul.f32 %v3293, %v3257
        %v3304 = vmul.f32 %v3295, %v3257
        %v3305 = vmul.f32 %v3297, %v3257
        %v3306 = vadd.f32 %v3298, 1e-05
        %v3307 = vadd.f32 %v3299, 1e-05
        %v3308 = vadd.f32 %v3300, 1e-05
        %v3309 = vadd.f32 %v3301, 1e-05
        %v3310 = vadd.f32 %v3302, 1e-05
        %v3311 = vadd.f32 %v3303, 1e-05
        %v3312 = vadd.f32 %v3304, 1e-05
        %v3313 = vadd.f32 %v3305, 1e-05
        %v3314 = vrsqrt.pop %v3306
        %v3315 = vrsqrt.pop %v3307
        %v3316 = vrsqrt.pop %v3308
        %v3317 = vrsqrt.pop %v3309
        %v3318 = vrsqrt.pop %v3310
        %v3319 = vrsqrt.pop %v3311
        %v3320 = vrsqrt.pop %v3312
        %v3321 = vrsqrt.pop %v3313
        %v3322 = vmul.f32 %v3266, %v3314
        %v3323 = vmul.f32 %v3267, %v3315
        %v3324 = vmul.f32 %v3268, %v3316
        %v3325 = vmul.f32 %v3269, %v3317
        %v3326 = vmul.f32 %v3270, %v3318
        %v3327 = vmul.f32 %v3271, %v3319
        %v3328 = vmul.f32 %v3272, %v3320
        %v3329 = vmul.f32 %v3273, %v3321
        %v3331 = vlaneseq
        %v3332 = vshrl.u32 %v3331, 7
        %v3333 = vsub.s32 0, %v3332
        %v3334 = vrot.slane %v755, %v3333
        %v3336 = vmul.f32 %v3322, %v3334
        %v3337 = vmul.f32 %v3323, %v3334
        %v3338 = vmul.f32 %v3324, %v3334
        %v3339 = vmul.f32 %v3325, %v3334
        %v3340 = vmul.f32 %v3326, %v3334
        %v3341 = vmul.f32 %v3327, %v3334
        %v3342 = vmul.f32 %v3328, %v3334
        %v3343 = vmul.f32 %v3329, %v3334
        %v3345 = vlaneseq
        %v3346 = vshrl.u32 %v3345, 7
        %v3347 = vsub.s32 0, %v3346
        %v3348 = vrot.slane %v756, %v3347
        %v3350 = vadd.f32 %v3336, %v3348
        %v3351 = vadd.f32 %v3337, %v3348
        %v3352 = vadd.f32 %v3338, %v3348
        %v3353 = vadd.f32 %v3339, %v3348
        %v3354 = vadd.f32 %v3340, %v3348
        %v3355 = vadd.f32 %v3341, %v3348
        %v3356 = vadd.f32 %v3342, %v3348
        %v3357 = vadd.f32 %v3343, %v3348
        %v3358 = vpack.c.bf16 %v3351, %v3350
        %v3359 = vpack.c.bf16 %v3353, %v3352
        %v3360 = vpack.c.bf16 %v3355, %v3354
        %v3361 = vpack.c.bf16 %v3357, %v3356
        %v3362 = vld [vmem:[%s606] sm:$0xff]
        %v3363 = vld [vmem:[%s606 + $0x8] sm:$0xff]
        %v3364 = vld [vmem:[%s606 + $0x10] sm:$0xff]
        %v3365 = vld [vmem:[%s606 + $0x18] sm:$0xff]
        %v3366 = vld [vmem:[%s606 + $0x20] sm:$0xff]
        %v3367 = vld [vmem:[%s606 + $0x28] sm:$0xff]
        %v3368 = vld [vmem:[%s606 + $0x30] sm:$0xff]
        %v3369 = vld [vmem:[%s606 + $0x38] sm:$0xff]
        %v3370 = vld [vmem:[%s606 + $0x40] sm:$0xff]
        %v3371 = vld [vmem:[%s606 + $0x48] sm:$0xff]
        %v3372 = vld [vmem:[%s606 + $0x50] sm:$0xff]
        %v3373 = vld [vmem:[%s606 + $0x58] sm:$0xff]
        %v3374 = vld [vmem:[%s606 + $0x60] sm:$0xff]
        %v3375 = vld [vmem:[%s606 + $0x68] sm:$0xff]
        %v3376 = vld [vmem:[%s606 + $0x70] sm:$0xff]
        %v3377 = vld [vmem:[%s606 + $0x78] sm:$0xff]
        %v3379 = vlaneseq
        %v3380 = vshrl.u32 %v3379, 7
        %v3381 = vsub.s32 0, %v3380
        %v3382 = vrot.slane %v753, %v3381
        %v3383 = vlaneseq
        %v3384 = vshrl.u32 %v3383, 7
        %v3385 = vsub.s32 1, %v3384
        %v3386 = vrot.slane %v753, %v3385
        %v3405 = vunpack.c.l.b16 %v3362
        %v3406 = vunpack.c.h.b16 %v3362
        %v3407 = vunpack.c.l.b16 %v3363
        %v3408 = vunpack.c.h.b16 %v3363
        %v3409 = vunpack.c.l.b16 %v3364
        %v3410 = vunpack.c.h.b16 %v3364
        %v3411 = vunpack.c.l.b16 %v3365
        %v3412 = vunpack.c.h.b16 %v3365
        %v3413 = vunpack.c.l.b16 %v3366
        %v3414 = vunpack.c.h.b16 %v3366
        %v3415 = vunpack.c.l.b16 %v3367
        %v3416 = vunpack.c.h.b16 %v3367
        %v3417 = vunpack.c.l.b16 %v3368
        %v3418 = vunpack.c.h.b16 %v3368
        %v3419 = vunpack.c.l.b16 %v3369
        %v3420 = vunpack.c.h.b16 %v3369
        %v3421 = vunpack.c.l.b16 %v3370
        %v3422 = vunpack.c.h.b16 %v3370
        %v3423 = vunpack.c.l.b16 %v3371
        %v3424 = vunpack.c.h.b16 %v3371
        %v3425 = vunpack.c.l.b16 %v3372
        %v3426 = vunpack.c.h.b16 %v3372
        %v3427 = vunpack.c.l.b16 %v3373
        %v3428 = vunpack.c.h.b16 %v3373
        %v3429 = vunpack.c.l.b16 %v3374
        %v3430 = vunpack.c.h.b16 %v3374
        %v3431 = vunpack.c.l.b16 %v3375
        %v3432 = vunpack.c.h.b16 %v3375
        %v3433 = vunpack.c.l.b16 %v3376
        %v3434 = vunpack.c.h.b16 %v3376
        %v3435 = vunpack.c.l.b16 %v3377
        %v3436 = vunpack.c.h.b16 %v3377
        %v3437 = vpack.c.b16 %v3407, %v3405
        %v3438 = vpack.c.b16 %v3408, %v3406
        %v3439 = vpack.c.b16 %v3411, %v3409
        %v3440 = vpack.c.b16 %v3412, %v3410
        %v3441 = vpack.c.b16 %v3415, %v3413
        %v3442 = vpack.c.b16 %v3416, %v3414
        %v3443 = vpack.c.b16 %v3419, %v3417
        %v3444 = vpack.c.b16 %v3420, %v3418
        %v3445 = vpack.c.b16 %v3423, %v3421
        %v3446 = vpack.c.b16 %v3424, %v3422
        %v3447 = vpack.c.b16 %v3427, %v3425
        %v3448 = vpack.c.b16 %v3428, %v3426
        %v3449 = vpack.c.b16 %v3431, %v3429
        %v3450 = vpack.c.b16 %v3432, %v3430
        %v3451 = vpack.c.b16 %v3435, %v3433
        %v3452 = vpack.c.b16 %v3436, %v3434
        %3469 = vmatprep.subr.bf16.mxu0 %v3438
        %3470 = vmatpush1.bf16.msra.mxu0 %v3437
        %3471 = vmatprep.subr.bf16.mxu0 %v3440
        %3472 = vmatpush1.bf16.msra.mxu0 %v3439
        %3473 = vmatprep.subr.bf16.mxu0 %v3442
        %3474 = vmatpush1.bf16.msra.mxu0 %v3441
        %3475 = vmatprep.subr.bf16.mxu0 %v3444
        %3476 = vmatpush1.bf16.msra.mxu0 %v3443
        %3477 = vmatprep.subr.bf16.mxu0 %v3446
        %3478 = vmatpush1.bf16.msra.mxu0 %v3445
        %3479 = vmatprep.subr.bf16.mxu0 %v3448
        %3480 = vmatpush1.bf16.msra.mxu0 %v3447
        %3481 = vmatprep.subr.bf16.mxu0 %v3450
        %3482 = vmatpush1.bf16.msra.mxu0 %v3449
        %3483 = vmatprep.subr.bf16.mxu0 %v3452
        %3484 = vmatpush1.bf16.msra.mxu0 %v3451
        %3485 = vmatprep.subr.bf16.mxu0 0
        %3486 = vmatpush1.bf16.msra.mxu0 0
        %3487 = vmatprep.subr.bf16.mxu0 0
        %3488 = vmatpush1.bf16.msra.mxu0 0
        %3489 = vmatprep.subr.bf16.mxu0 0
        %3490 = vmatpush1.bf16.msra.mxu0 0
        %3491 = vmatprep.subr.bf16.mxu0 0
        %3492 = vmatpush1.bf16.msra.mxu0 0
        %3493 = vmatprep.subr.bf16.mxu0 0
        %3494 = vmatpush1.bf16.msra.mxu0 0
        %3495 = vmatprep.subr.bf16.mxu0 0
        %3496 = vmatpush1.bf16.msra.mxu0 0
        %3497 = vmatprep.subr.bf16.mxu0 0
        %3498 = vmatpush1.bf16.msra.mxu0 0
        %3499 = vmatprep.subr.bf16.mxu0 0
        %3500 = vmatpush1.bf16.msra.mxu0 0
        %3501 = vmatprep.mubr.bf16.mxu0 0
        %3502 = vmatmul.mubr.bf16.gmra.mrb[0].mxu0 %v3358
        %v3503 = vpop.f32.mrb[0].mxu0
        %v3504 = vadd.f32 %v3382, %v3503
        %v3505 = vpop.f32.mrb[0].mxu0
        %v3506 = vadd.f32 %v3386, %v3505
        %v3507 = vpop.f32.mrb[0].mxu0
        %v3508 = vadd.f32 %v3382, %v3507
        %v3509 = vpop.f32.mrb[0].mxu0
        %v3510 = vadd.f32 %v3386, %v3509
        %3511 = vmatprep.mubr.bf16.mxu0 0
        %3512 = vmatmul.mubr.bf16.gmra.mrb[0].mxu0 %v3359
        %v3513 = vpop.f32.mrb[0].mxu0
        %v3514 = vadd.f32 %v3382, %v3513
        %v3515 = vpop.f32.mrb[0].mxu0
        %v3516 = vadd.f32 %v3386, %v3515
        %v3517 = vpop.f32.mrb[0].mxu0
        %v3518 = vadd.f32 %v3382, %v3517
        %v3519 = vpop.f32.mrb[0].mxu0
        %v3520 = vadd.f32 %v3386, %v3519
        %3521 = vmatprep.mubr.bf16.mxu0 0
        %3522 = vmatmul.mubr.bf16.gmra.mrb[0].mxu0 %v3360
        %v3523 = vpop.f32.mrb[0].mxu0
        %v3524 = vadd.f32 %v3382, %v3523
        %v3525 = vpop.f32.mrb[0].mxu0
        %v3526 = vadd.f32 %v3386, %v3525
        %v3527 = vpop.f32.mrb[0].mxu0
        %v3528 = vadd.f32 %v3382, %v3527
        %v3529 = vpop.f32.mrb[0].mxu0
        %v3530 = vadd.f32 %v3386, %v3529
        %3531 = vmatprep.mubr.bf16.mxu0 0
        %3532 = vmatmul.mubr.bf16.gmra.mrb[0].mxu0 %v3361
        %v3533 = vpop.f32.mrb[0].mxu0
        %v3534 = vadd.f32 %v3382, %v3533
        %v3535 = vpop.f32.mrb[0].mxu0
        %v3536 = vadd.f32 %v3386, %v3535
        %v3537 = vpop.f32.mrb[0].mxu0
        %v3538 = vadd.f32 %v3382, %v3537
        %v3539 = vpop.f32.mrb[0].mxu0
        %v3540 = vadd.f32 %v3386, %v3539
        %3541 = vdwg.mxu0
        %v3542 = vmax.f32 %v3504, 0.0
        %v3543 = vmax.f32 %v3506, 0.0
        %v3544 = vmax.f32 %v3508, 0.0
        %v3545 = vmax.f32 %v3510, 0.0
        %v3546 = vmax.f32 %v3514, 0.0
        %v3547 = vmax.f32 %v3516, 0.0
        %v3548 = vmax.f32 %v3518, 0.0
        %v3549 = vmax.f32 %v3520, 0.0
        %v3550 = vmax.f32 %v3524, 0.0
        %v3551 = vmax.f32 %v3526, 0.0
        %v3552 = vmax.f32 %v3528, 0.0
        %v3553 = vmax.f32 %v3530, 0.0
        %v3554 = vmax.f32 %v3534, 0.0
        %v3555 = vmax.f32 %v3536, 0.0
        %v3556 = vmax.f32 %v3538, 0.0
        %v3557 = vmax.f32 %v3540, 0.0
        %v3558 = vpack.c.bf16 %v3544, %v3542
        %v3559 = vpack.c.bf16 %v3545, %v3543
        %v3560 = vpack.c.bf16 %v3548, %v3546
        %v3561 = vpack.c.bf16 %v3549, %v3547
        %v3562 = vpack.c.bf16 %v3552, %v3550
        %v3563 = vpack.c.bf16 %v3553, %v3551
        %v3564 = vpack.c.bf16 %v3556, %v3554
        %v3565 = vpack.c.bf16 %v3557, %v3555
        %v3566 = vld [vmem:[%s615] sm:$0xf]
        %v3567 = vld [vmem:[%s615 + $0x4] sm:$0xf]
        %v3568 = vld [vmem:[%s615 + $0x8] sm:$0xf]
        %v3569 = vld [vmem:[%s615 + $0xc] sm:$0xf]
        %v3570 = vld [vmem:[%s615 + $0x10] sm:$0xf]
        %v3571 = vld [vmem:[%s615 + $0x14] sm:$0xf]
        %v3572 = vld [vmem:[%s615 + $0x18] sm:$0xf]
        %v3573 = vld [vmem:[%s615 + $0x1c] sm:$0xf]
        %v3574 = vld [vmem:[%s615 + $0x20] sm:$0xf]
        %v3575 = vld [vmem:[%s615 + $0x24] sm:$0xf]
        %v3576 = vld [vmem:[%s615 + $0x28] sm:$0xf]
        %v3577 = vld [vmem:[%s615 + $0x2c] sm:$0xf]
        %v3578 = vld [vmem:[%s615 + $0x30] sm:$0xf]
        %v3579 = vld [vmem:[%s615 + $0x34] sm:$0xf]
        %v3580 = vld [vmem:[%s615 + $0x38] sm:$0xf]
        %v3581 = vld [vmem:[%s615 + $0x3c] sm:$0xf]
        %v3582 = vld [vmem:[%s615 + $0x40] sm:$0xf]
        %v3583 = vld [vmem:[%s615 + $0x44] sm:$0xf]
        %v3584 = vld [vmem:[%s615 + $0x48] sm:$0xf]
        %v3585 = vld [vmem:[%s615 + $0x4c] sm:$0xf]
        %v3586 = vld [vmem:[%s615 + $0x50] sm:$0xf]
        %v3587 = vld [vmem:[%s615 + $0x54] sm:$0xf]
        %v3588 = vld [vmem:[%s615 + $0x58] sm:$0xf]
        %v3589 = vld [vmem:[%s615 + $0x5c] sm:$0xf]
        %v3590 = vld [vmem:[%s615 + $0x60] sm:$0xf]
        %v3591 = vld [vmem:[%s615 + $0x64] sm:$0xf]
        %v3592 = vld [vmem:[%s615 + $0x68] sm:$0xf]
        %v3593 = vld [vmem:[%s615 + $0x6c] sm:$0xf]
        %v3594 = vld [vmem:[%s615 + $0x70] sm:$0xf]
        %v3595 = vld [vmem:[%s615 + $0x74] sm:$0xf]
        %v3596 = vld [vmem:[%s615 + $0x78] sm:$0xf]
        %v3597 = vld [vmem:[%s615 + $0x7c] sm:$0xf]
        %v3599 = vlaneseq
        %v3600 = vshrl.u32 %v3599, 7
        %v3601 = vsub.s32 0, %v3600
        %v3602 = vrot.slane %v754, %v3601
        %v3636 = vunpack.c.l.b16 %v3566
        %v3637 = vunpack.c.l.b16 %v3567
        %v3638 = vunpack.c.l.b16 %v3568
        %v3639 = vunpack.c.l.b16 %v3569
        %v3640 = vunpack.c.l.b16 %v3570
        %v3641 = vunpack.c.l.b16 %v3571
        %v3642 = vunpack.c.l.b16 %v3572
        %v3643 = vunpack.c.l.b16 %v3573
        %v3644 = vunpack.c.l.b16 %v3574
        %v3645 = vunpack.c.l.b16 %v3575
        %v3646 = vunpack.c.l.b16 %v3576
        %v3647 = vunpack.c.l.b16 %v3577
        %v3648 = vunpack.c.l.b16 %v3578
        %v3649 = vunpack.c.l.b16 %v3579
        %v3650 = vunpack.c.l.b16 %v3580
        %v3651 = vunpack.c.l.b16 %v3581
        %v3652 = vunpack.c.l.b16 %v3582
        %v3653 = vunpack.c.l.b16 %v3583
        %v3654 = vunpack.c.l.b16 %v3584
        %v3655 = vunpack.c.l.b16 %v3585
        %v3656 = vunpack.c.l.b16 %v3586
        %v3657 = vunpack.c.l.b16 %v3587
        %v3658 = vunpack.c.l.b16 %v3588
        %v3659 = vunpack.c.l.b16 %v3589
        %v3660 = vunpack.c.l.b16 %v3590
        %v3661 = vunpack.c.l.b16 %v3591
        %v3662 = vunpack.c.l.b16 %v3592
        %v3663 = vunpack.c.l.b16 %v3593
        %v3664 = vunpack.c.l.b16 %v3594
        %v3665 = vunpack.c.l.b16 %v3595
        %v3666 = vunpack.c.l.b16 %v3596
        %v3667 = vunpack.c.l.b16 %v3597
        %v3668 = vpack.c.b16 %v3637, %v3636
        %v3669 = vpack.c.b16 %v3639, %v3638
        %v3670 = vpack.c.b16 %v3641, %v3640
        %v3671 = vpack.c.b16 %v3643, %v3642
        %v3672 = vpack.c.b16 %v3645, %v3644
        %v3673 = vpack.c.b16 %v3647, %v3646
        %v3674 = vpack.c.b16 %v3649, %v3648
        %v3675 = vpack.c.b16 %v3651, %v3650
        %v3676 = vpack.c.b16 %v3653, %v3652
        %v3677 = vpack.c.b16 %v3655, %v3654
        %v3678 = vpack.c.b16 %v3657, %v3656
        %v3679 = vpack.c.b16 %v3659, %v3658
        %v3680 = vpack.c.b16 %v3661, %v3660
        %v3681 = vpack.c.b16 %v3663, %v3662
        %v3682 = vpack.c.b16 %v3665, %v3664
        %v3683 = vpack.c.b16 %v3667, %v3666
        %3700 = vmatprep.subr.bf16.mxu0 0
        %3701 = vmatpush1.bf16.msra.mxu0 %v3668
        %3702 = vmatprep.subr.bf16.mxu0 0
        %3703 = vmatpush1.bf16.msra.mxu0 %v3669
        %3704 = vmatprep.subr.bf16.mxu0 0
        %3705 = vmatpush1.bf16.msra.mxu0 %v3670
        %3706 = vmatprep.subr.bf16.mxu0 0
        %3707 = vmatpush1.bf16.msra.mxu0 %v3671
        %3708 = vmatprep.subr.bf16.mxu0 0
        %3709 = vmatpush1.bf16.msra.mxu0 %v3672
        %3710 = vmatprep.subr.bf16.mxu0 0
        %3711 = vmatpush1.bf16.msra.mxu0 %v3673
        %3712 = vmatprep.subr.bf16.mxu0 0
        %3713 = vmatpush1.bf16.msra.mxu0 %v3674
        %3714 = vmatprep.subr.bf16.mxu0 0
        %3715 = vmatpush1.bf16.msra.mxu0 %v3675
        %3716 = vmatprep.subr.bf16.mxu0 0
        %3717 = vmatpush1.bf16.msra.mxu0 %v3676
        %3718 = vmatprep.subr.bf16.mxu0 0
        %3719 = vmatpush1.bf16.msra.mxu0 %v3677
        %3720 = vmatprep.subr.bf16.mxu0 0
        %3721 = vmatpush1.bf16.msra.mxu0 %v3678
        %3722 = vmatprep.subr.bf16.mxu0 0
        %3723 = vmatpush1.bf16.msra.mxu0 %v3679
        %3724 = vmatprep.subr.bf16.mxu0 0
        %3725 = vmatpush1.bf16.msra.mxu0 %v3680
        %3726 = vmatprep.subr.bf16.mxu0 0
        %3727 = vmatpush1.bf16.msra.mxu0 %v3681
        %3728 = vmatprep.subr.bf16.mxu0 0
        %3729 = vmatpush1.bf16.msra.mxu0 %v3682
        %3730 = vmatprep.subr.bf16.mxu0 0
        %3731 = vmatpush1.bf16.msra.mxu0 %v3683
        %3732 = vmatprep.mubr.bf16.mxu0 %v3559
        %3733 = vmatmul.mubr.bf16.gmra.mrb[0].mxu0 %v3558
        %v3734 = vpop.f32.mrb[0].mxu0
        %v3735 = vadd.f32 %v3602, %v3734
        %v3736 = vpop.f32.mrb[0].mxu0
        %v3737 = vpop.f32.mrb[0].mxu0
        %v3738 = vadd.f32 %v3602, %v3737
        %v3739 = vpop.f32.mrb[0].mxu0
        %3740 = vmatprep.mubr.bf16.mxu0 %v3561
        %3741 = vmatmul.mubr.bf16.gmra.mrb[0].mxu0 %v3560
        %v3742 = vpop.f32.mrb[0].mxu0
        %v3743 = vadd.f32 %v3602, %v3742
        %v3744 = vpop.f32.mrb[0].mxu0
        %v3745 = vpop.f32.mrb[0].mxu0
        %v3746 = vadd.f32 %v3602, %v3745
        %v3747 = vpop.f32.mrb[0].mxu0
        %3748 = vmatprep.mubr.bf16.mxu0 %v3563
        %3749 = vmatmul.mubr.bf16.gmra.mrb[0].mxu0 %v3562
        %v3750 = vpop.f32.mrb[0].mxu0
        %v3751 = vadd.f32 %v3602, %v3750
        %v3752 = vpop.f32.mrb[0].mxu0
        %v3753 = vpop.f32.mrb[0].mxu0
        %v3754 = vadd.f32 %v3602, %v3753
        %v3755 = vpop.f32.mrb[0].mxu0
        %3756 = vmatprep.mubr.bf16.mxu0 %v3565
        %3757 = vmatmul.mubr.bf16.gmra.mrb[0].mxu0 %v3564
        %v3758 = vpop.f32.mrb[0].mxu0
        %v3759 = vadd.f32 %v3602, %v3758
        %v3760 = vpop.f32.mrb[0].mxu0
        %v3761 = vpop.f32.mrb[0].mxu0
        %v3762 = vadd.f32 %v3602, %v3761
        %v3763 = vpop.f32.mrb[0].mxu0
        %3764 = vdwg.mxu0
        %v3765 = vadd.f32 %v3350, %v3735
        %v3766 = vadd.f32 %v3351, %v3738
        %v3767 = vadd.f32 %v3352, %v3743
        %v3768 = vadd.f32 %v3353, %v3746
        %v3769 = vadd.f32 %v3354, %v3751
        %v3770 = vadd.f32 %v3355, %v3754
        %v3771 = vadd.f32 %v3356, %v3759
        %v3772 = vadd.f32 %v3357, %v3762
        %3773 = vadd.xlane.f32.xlu0 %v3765
        %v3774 = vpop.xlane.xlu0 %3773
        %3775 = vadd.xlane.f32.xlu0 %v3766
        %v3776 = vpop.xlane.xlu0 %3775
        %3777 = vadd.xlane.f32.xlu0 %v3767
        %v3778 = vpop.xlane.xlu0 %3777
        %3779 = vadd.xlane.f32.xlu0 %v3768
        %v3780 = vpop.xlane.xlu0 %3779
        %3781 = vadd.xlane.f32.xlu0 %v3769
        %v3782 = vpop.xlane.xlu0 %3781
        %3783 = vadd.xlane.f32.xlu0 %v3770
        %v3784 = vpop.xlane.xlu0 %3783
        %3785 = vadd.xlane.f32.xlu0 %v3771
        %v3786 = vpop.xlane.xlu0 %3785
        %3787 = vadd.xlane.f32.xlu0 %v3772
        %v3788 = vpop.xlane.xlu0 %3787
        %v3789 = vmul.f32 %v3774, %v3257
        %v3790 = vmul.f32 %v3776, %v3257
        %v3791 = vmul.f32 %v3778, %v3257
        %v3792 = vmul.f32 %v3780, %v3257
        %v3793 = vmul.f32 %v3782, %v3257
        %v3794 = vmul.f32 %v3784, %v3257
        %v3795 = vmul.f32 %v3786, %v3257
        %v3796 = vmul.f32 %v3788, %v3257
        %v3797 = vsub.f32 %v3765, %v3789
        %v3798 = vsub.f32 %v3766, %v3790
        %v3799 = vsub.f32 %v3767, %v3791
        %v3800 = vsub.f32 %v3768, %v3792
        %v3801 = vsub.f32 %v3769, %v3793
        %v3802 = vsub.f32 %v3770, %v3794
        %v3803 = vsub.f32 %v3771, %v3795
        %v3804 = vsub.f32 %v3772, %v3796
        %v3805 = vmul.f32 %v3797, %v3797
        %v3806 = vmul.f32 %v3798, %v3798
        %v3807 = vmul.f32 %v3799, %v3799
        %v3808 = vmul.f32 %v3800, %v3800
        %v3809 = vmul.f32 %v3801, %v3801
        %v3810 = vmul.f32 %v3802, %v3802
        %v3811 = vmul.f32 %v3803, %v3803
        %v3812 = vmul.f32 %v3804, %v3804
        %3813 = vadd.xlane.f32.xlu0 %v3805
        %v3814 = vpop.xlane.xlu0 %3813
        %3815 = vadd.xlane.f32.xlu0 %v3806
        %v3816 = vpop.xlane.xlu0 %3815
        %3817 = vadd.xlane.f32.xlu0 %v3807
        %v3818 = vpop.xlane.xlu0 %3817
        %3819 = vadd.xlane.f32.xlu0 %v3808
        %v3820 = vpop.xlane.xlu0 %3819
        %3821 = vadd.xlane.f32.xlu0 %v3809
        %v3822 = vpop.xlane.xlu0 %3821
        %3823 = vadd.xlane.f32.xlu0 %v3810
        %v3824 = vpop.xlane.xlu0 %3823
        %3825 = vadd.xlane.f32.xlu0 %v3811
        %v3826 = vpop.xlane.xlu0 %3825
        %3827 = vadd.xlane.f32.xlu0 %v3812
        %v3828 = vpop.xlane.xlu0 %3827
        %v3829 = vmul.f32 %v3814, %v3257
        %v3830 = vmul.f32 %v3816, %v3257
        %v3831 = vmul.f32 %v3818, %v3257
        %v3832 = vmul.f32 %v3820, %v3257
        %v3833 = vmul.f32 %v3822, %v3257
        %v3834 = vmul.f32 %v3824, %v3257
        %v3835 = vmul.f32 %v3826, %v3257
        %v3836 = vmul.f32 %v3828, %v3257
        %v3837 = vadd.f32 %v3829, 1e-05
        %v3838 = vadd.f32 %v3830, 1e-05
        %v3839 = vadd.f32 %v3831, 1e-05
        %v3840 = vadd.f32 %v3832, 1e-05
        %v3841 = vadd.f32 %v3833, 1e-05
        %v3842 = vadd.f32 %v3834, 1e-05
        %v3843 = vadd.f32 %v3835, 1e-05
        %v3844 = vadd.f32 %v3836, 1e-05
        %v3845 = vrsqrt.pop %v3837
        %v3846 = vrsqrt.pop %v3838
        %v3847 = vrsqrt.pop %v3839
        %v3848 = vrsqrt.pop %v3840
        %v3849 = vrsqrt.pop %v3841
        %v3850 = vrsqrt.pop %v3842
        %v3851 = vrsqrt.pop %v3843
        %v3852 = vrsqrt.pop %v3844
        %v3853 = vmul.f32 %v3797, %v3845
        %v3854 = vmul.f32 %v3798, %v3846
        %v3855 = vmul.f32 %v3799, %v3847
        %v3856 = vmul.f32 %v3800, %v3848
        %v3857 = vmul.f32 %v3801, %v3849
        %v3858 = vmul.f32 %v3802, %v3850
        %v3859 = vmul.f32 %v3803, %v3851
        %v3860 = vmul.f32 %v3804, %v3852
        %v3862 = vlaneseq
        %v3863 = vshrl.u32 %v3862, 7
        %v3864 = vsub.s32 0, %v3863
        %v3865 = vrot.slane %v757, %v3864
        %v3867 = vmul.f32 %v3853, %v3865
        %v3868 = vmul.f32 %v3854, %v3865
        %v3869 = vmul.f32 %v3855, %v3865
        %v3870 = vmul.f32 %v3856, %v3865
        %v3871 = vmul.f32 %v3857, %v3865
        %v3872 = vmul.f32 %v3858, %v3865
        %v3873 = vmul.f32 %v3859, %v3865
        %v3874 = vmul.f32 %v3860, %v3865
        %v3876 = vlaneseq
        %v3877 = vshrl.u32 %v3876, 7
        %v3878 = vsub.s32 0, %v3877
        %v3879 = vrot.slane %v758, %v3878
        %v3881 = vadd.f32 %v3867, %v3879
        %v3882 = vadd.f32 %v3868, %v3879
        %v3883 = vadd.f32 %v3869, %v3879
        %v3884 = vadd.f32 %v3870, %v3879
        %v3885 = vadd.f32 %v3871, %v3879
        %v3886 = vadd.f32 %v3872, %v3879
        %v3887 = vadd.f32 %v3873, %v3879
        %v3888 = vadd.f32 %v3874, %v3879
        %3889 = vst [vmem:[#allocation2] sm:$0xff] %v3881
        %3890 = vst [vmem:[#allocation2 + $0x8] sm:$0xff] %v3882
        %3891 = vst [vmem:[#allocation2 + $0x10] sm:$0xff] %v3883
        %3892 = vst [vmem:[#allocation2 + $0x18] sm:$0xff] %v3884
        %3893 = vst [vmem:[#allocation2 + $0x20] sm:$0xff] %v3885
        %3894 = vst [vmem:[#allocation2 + $0x28] sm:$0xff] %v3886
        %3895 = vst [vmem:[#allocation2 + $0x30] sm:$0xff] %v3887
        %3896 = vst [vmem:[#allocation2 + $0x38] sm:$0xff] %v3888
        %p3897 = scmp.eq.s32.totalorder %s37, 1
        // Predicated region
        $region97: #{tpu_custom_call.1} parent=71 // pred_check
          %p3898 = pneg %p3897
        $region98: #{tpu_custom_call.1} parent=71 // pred_check_branch
          %3900 = sbr.rel (%p3898) target = $region100
        $region99: #{tpu_custom_call.1} parent=71 // pred_region
          %3901 = vst [vmem:[#allocation13] sm:$0xff] %v3881
          %3902 = vst [vmem:[#allocation13 + $0x8] sm:$0xff] %v3882
          %3903 = vst [vmem:[#allocation13 + $0x10] sm:$0xff] %v3883
          %3904 = vst [vmem:[#allocation13 + $0x18] sm:$0xff] %v3884
          %3905 = vst [vmem:[#allocation13 + $0x20] sm:$0xff] %v3885
          %3906 = vst [vmem:[#allocation13 + $0x28] sm:$0xff] %v3886
          %3907 = vst [vmem:[#allocation13 + $0x30] sm:$0xff] %v3887
          %3908 = vst [vmem:[#allocation13 + $0x38] sm:$0xff] %v3888
        $region100: #{tpu_custom_call.1} parent=71 // pred_fallthru
          _
        // Predicated region
        $region101: #{tpu_custom_call.1} parent=71 // pred_check
          %p3909 = pneg %p400
        $region102: #{tpu_custom_call.1} parent=71 // pred_check_branch
          %3911 = sbr.rel (%p3909) target = $region104
        $region103: #{tpu_custom_call.1} parent=71 // pred_region
          %s3912 = smul.u32 4, %s36
          %s3914 = ssub.s32 1024, 1024
          %3915 = vsyncadd [#allocation6], %s3914
          %s3916 = smul.addr %s3912, 2
          %s3917 = smul.addr %s3916, 128
          %s3918 = scalar_lea.hbm %s13, %s3917
          %s3919 = sshll.u32 [#allocation13], 4
          %s3920 = int_to_ptr.vmem [resolvable:$true] %s3919
          %3925 = dma.vmem_to_hbm [thread:$0]  %s3920, 1024, %s3918, [#allocation6], 128, 128, 8
        $region104: #{tpu_custom_call.1} parent=71 // pred_fallthru
          _
        // Predicated region
        $region105: #{tpu_custom_call.1} parent=71 // pred_check
          %p3926 = pneg %p400
        $region106: #{tpu_custom_call.1} parent=71 // pred_check_branch
          %3928 = sbr.rel (%p3926) target = $region108
        $region107: #{tpu_custom_call.1} parent=71 // pred_region
          %3929 = dma.done [#allocation6], 1024
        $region108: #{tpu_custom_call.1} parent=71 // pred_fallthru
          _
      $region72: #{tpu_custom_call.1} parent=5 // pred_fallthru
        _
      %p3930 = scmp.le.s32.totalorder 2, %s27
      // Predicated region
      $region109: #{tpu_custom_call.1} parent=5 // pred_check
        %p3931 = pneg %p3930
      $region110: #{tpu_custom_call.1} parent=5 // pred_check_branch
        %3933 = sbr.rel (%p3931) target = $region112
      $region111: #{tpu_custom_call.1} parent=5 // pred_region
        %s3934 = ssub.s32 %s27, 2
      $region112: #{tpu_custom_call.1} parent=5 // pred_fallthru
        _
    $region6: #{tpu_custom_call.1} parent=1 // loop_footer
      %s31 = sadd.s32 1, %s27
    $region7: #{tpu_custom_call.1} parent=1 // loop_footer_branch
      %26 = sbr.rel target = $region3
    $region8: #{tpu_custom_call.1} parent=1 // loop_exit
      _
    %3935 = vsyncpa [#allocation5], 1
    %s3936 = scalar_lea.sflag [#allocation5], 1
    %3937 = vsyncpa %s3936, 1
    %3938 = vsyncpa [#allocation8], 1
    %s3939 = scalar_lea.sflag [#allocation8], 1
    %3940 = vsyncpa %s3939, 1
    %3941 = vsyncpa [#allocation11], 1
    %s3942 = scalar_lea.sflag [#allocation11], 1
    %3943 = vsyncpa %s3942, 1
    %3944 = vsyncpa [#allocation6], 1
    %s3945 = scalar_lea.sflag [#allocation6], 1
    %3946 = vsyncpa %s3945, 1

</llo_original>
